<compile_context>
chip_gen: v5e
topology: v5e:2x2
jax: 0.10.0
libtpu: 0.0.40
codegen_flags: <defaults>
</compile_context>

<pallas_src>
import jax
import jax.numpy as jnp
import numpy as np
from jax import lax
from jax.experimental import pallas as pl
from jax.experimental.pallas import tpu as pltpu

VMEM = pl.BlockSpec(memory_space=pltpu.MemorySpace.VMEM)
BN_EPS = 1e-5


# ----------------------------------------------------------------------------
# LSTM cell math (PyTorch gate order i, f, g, o) -- f32 gate math
# ----------------------------------------------------------------------------
def _lstm_cell(gates, c_prev, H):
    i = jax.nn.sigmoid(gates[:, 0 * H:1 * H])
    f = jax.nn.sigmoid(gates[:, 1 * H:2 * H])
    g = jnp.tanh(gates[:, 2 * H:3 * H])
    o = jax.nn.sigmoid(gates[:, 3 * H:4 * H])
    c = f * c_prev + i * g
    h = o * jnp.tanh(c)
    return h, c


# ----------------------------------------------------------------------------
# The fully fused encoder kernel.
#
# Ref layout (in order):
#   x_ref                                 : (T*B, F)   time-major rows (t*B + b)
#   per feat layer: w (Din,Dout), b (1,Dout), gamma (1,Dout), beta (1,Dout)
#   wih1 (D0, 8H)  [W_ih_fwd^T | W_ih_rev^T]       layer-1 input proj
#   whh1_f (H,4H), whh1_r (H,4H)                   layer-1 recurrent weights
#   b1 (1, 8H)                                     layer-1 combined biases
#   wih2 (2H, 8H), whh2_f (H,4H), b2 (1, 8H)       layer 2 (reverse whh unused)
#   whead_f (H, 2L), whead_r (H, 2L), bhead (1,2L) fc_mu | fc_logvar stacked
# Outputs: mu (B, L), logvar (B, L)
# Scratch: seq1 (T*B, 2H) VMEM — layer-1 bidirectional output, never hits HBM.
# ----------------------------------------------------------------------------
def _make_encoder_kernel(n_feat, T, B, H, L):
    H4 = 4 * H

    def kernel(*refs):
        x_ref = refs[0]
        feat_refs = [refs[1 + 4 * i: 5 + 4 * i] for i in range(n_feat)]
        base = 1 + 4 * n_feat
        (wih1_ref, whh1f_ref, whh1r_ref, b1_ref,
         wih2_ref, whh2f_ref, b2_ref,
         wheadf_ref, wheadr_ref, bhead_ref) = refs[base:base + 10]
        mu_ref = refs[base + 10]
        lv_ref = refs[base + 11]
        seq1_ref = refs[base + 12]

        # ---- feature extractor: (Linear -> BN(batch stats) -> ReLU) x n ----
        x = x_ref[...]
        for (w_ref, b_ref, g_ref, beta_ref) in feat_refs:
            y = jnp.dot(x, w_ref[...], preferred_element_type=jnp.float32) + b_ref[...]
            mean = jnp.mean(y, axis=0, keepdims=True)
            var = jnp.mean((y - mean) ** 2, axis=0, keepdims=True)  # biased (torch BN)
            y = g_ref[...] * (y - mean) * lax.rsqrt(var + BN_EPS) + beta_ref[...]
            x = jnp.maximum(y, 0.0)                                  # (T*B, D0)

        # ---- bidirectional LSTM layer 1 (full sequence, kept in VMEM) ----
        xp1 = (jnp.dot(x, wih1_ref[...], preferred_element_type=jnp.float32)
               + b1_ref[...])                                        # (T*B, 8H)
        whh1f = whh1f_ref[...]
        whh1r = whh1r_ref[...]

        hf = jnp.zeros((B, H), jnp.float32)
        cf = jnp.zeros((B, H), jnp.float32)
        hr = jnp.zeros((B, H), jnp.float32)
        cr = jnp.zeros((B, H), jnp.float32)
        for t in range(T):                                           # statically unrolled
            tr = T - 1 - t
            gf = (xp1[t * B:(t + 1) * B, :H4]
                  + jnp.dot(hf, whh1f, preferred_element_type=jnp.float32))
            gr = (xp1[tr * B:(tr + 1) * B, H4:]
                  + jnp.dot(hr, whh1r, preferred_element_type=jnp.float32))
            hf, cf = _lstm_cell(gf, cf, H)
            hr, cr = _lstm_cell(gr, cr, H)
            seq1_ref[t * B:(t + 1) * B, :H] = hf                     # fwd output @ t
            seq1_ref[tr * B:(tr + 1) * B, H:] = hr                   # rev output @ T-1-t

        # ---- bidirectional LSTM layer 2: only lstm_out[:, -1, :] needed ----
        xp2 = (jnp.dot(seq1_ref[...], wih2_ref[...],
                       preferred_element_type=jnp.float32) + b2_ref[...])  # (T*B, 8H)
        whh2f = whh2f_ref[...]

        hf2 = jnp.zeros((B, H), jnp.float32)
        cf2 = jnp.zeros((B, H), jnp.float32)
        for t in range(T):                                           # statically unrolled
            gf = (xp2[t * B:(t + 1) * B, :H4]
                  + jnp.dot(hf2, whh2f, preferred_element_type=jnp.float32))
            hf2, cf2 = _lstm_cell(gf, cf2, H)

        # reverse direction at time T-1: exactly one step from zero state
        gr2 = xp2[(T - 1) * B:T * B, H4:]
        hr2, _ = _lstm_cell(gr2, jnp.zeros((B, H), jnp.float32), H)

        # ---- heads: fc_mu / fc_logvar as one stacked projection ----
        hd = (jnp.dot(hf2, wheadf_ref[...], preferred_element_type=jnp.float32)
              + jnp.dot(hr2, wheadr_ref[...], preferred_element_type=jnp.float32)
              + bhead_ref[...])                                      # (B, 2L)
        mu_ref[...] = hd[:, :L]
        lv_ref[...] = hd[:, L:]

    return kernel


# ----------------------------------------------------------------------------
# Parameter init (deterministic, synthetic) in the module's natural layout
# ----------------------------------------------------------------------------
def init_params(key, input_dim, latent_dim, hidden_dims, lstm_hidden):
    keys = iter(jax.random.split(key, 64))
    nrm = lambda shape: 0.1 * jax.random.normal(next(keys), shape, jnp.float32)

    params = {"feat": [], "lstm": []}
    prev = input_dim
    for h in hidden_dims:
        w = nrm((prev, h))                       # Linear weight, pre-transposed
        b = nrm((1, h))                          # Linear bias
        gamma = 1.0 + nrm((1, h))                # BN weight
        beta = nrm((1, h))                       # BN bias
        params["feat"].append((w, b, gamma, beta))
        prev = h

    H = lstm_hidden
    din = hidden_dims[-1]
    for _layer in range(2):                      # num_layers = 2
        dirs = []
        for _d in range(2):                      # forward / reverse
            wih = nrm((din, 4 * H))              # W_ih^T
            whh = nrm((H, 4 * H))                # W_hh^T
            b = nrm((1, 4 * H))                  # b_ih + b_hh combined
            dirs.append((wih, whh, b))
        params["lstm"].append(dirs)
        din = 2 * H                              # bidirectional output feeds next layer

    params["mu"] = (nrm((2 * H, latent_dim)), nrm((1, latent_dim)))
    params["logvar"] = (nrm((2 * H, latent_dim)), nrm((1, latent_dim)))
    return params


# ----------------------------------------------------------------------------
# One-time weight layout fusion (runs outside the jitted forward)
# ----------------------------------------------------------------------------
def fuse_params(params):
    (pf1, pr1), (pf2, pr2) = params["lstm"]
    H = pf1[1].shape[0]

    wih1 = jnp.concatenate([pf1[0], pr1[0]], axis=1)        # (D0, 8H)
    b1 = jnp.concatenate([pf1[2], pr1[2]], axis=1)          # (1, 8H)
    wih2 = jnp.concatenate([pf2[0], pr2[0]], axis=1)        # (2H, 8H)
    b2 = jnp.concatenate([pf2[2], pr2[2]], axis=1)          # (1, 8H)

    wmu, bmu = params["mu"]
    wlv, blv = params["logvar"]
    whead = jnp.concatenate([wmu, wlv], axis=1)              # (2H, 2L)
    bhead = jnp.concatenate([bmu, blv], axis=1)              # (1, 2L)

    return {
        "feat": params["feat"],
        "wih1": wih1, "whh1_f": pf1[1], "whh1_r": pr1[1], "b1": b1,
        "wih2": wih2, "whh2_f": pf2[1], "b2": b2,            # whh2_r unused (h0 = 0)
        "whead_f": whead[:H], "whead_r": whead[H:], "bhead": bhead,
    }


# ----------------------------------------------------------------------------
# Forward pass: one pallas_call
# ----------------------------------------------------------------------------
def ts_encoder_forward(fused, X):
    B, T, F = X.shape
    H = fused["whh1_f"].shape[0]
    L = fused["whead_f"].shape[1] // 2
    n_feat = len(fused["feat"])

    # time-major flatten once (row = t*B + b); BN stats are permutation
    # invariant so the feature-extractor math is unchanged.
    x = jnp.transpose(X, (1, 0, 2)).reshape(T * B, F)

    args = [x]
    for (w, b, g, beta) in fused["feat"]:
        args += [w, b, g, beta]
    args += [fused["wih1"], fused["whh1_f"], fused["whh1_r"], fused["b1"],
             fused["wih2"], fused["whh2_f"], fused["b2"],
             fused["whead_f"], fused["whead_r"], fused["bhead"]]

    mu, lv = pl.pallas_call(
        _make_encoder_kernel(n_feat, T, B, H, L),
        out_shape=(jax.ShapeDtypeStruct((B, L), jnp.float32),
                   jax.ShapeDtypeStruct((B, L), jnp.float32)),
        in_specs=[VMEM] * len(args),
        out_specs=(VMEM, VMEM),
        scratch_shapes=[pltpu.VMEM((T * B, 2 * H), jnp.float32)],
    )(*args)
    return mu, lv


# ----------------------------------------------------------------------------
# Pure-JAX reference (same math) for a correctness sanity check
# ----------------------------------------------------------------------------
def ref_forward(params, X):
    B, T, F = X.shape
    x = X.reshape(B * T, F)
    for (w, b, g, beta) in params["feat"]:
        y = x @ w + b
        mean = jnp.mean(y, axis=0, keepdims=True)
        var = jnp.mean((y - mean) ** 2, axis=0, keepdims=True)
        x = jnp.maximum(g * (y - mean) / jnp.sqrt(var + BN_EPS) + beta, 0.0)
    seq = x.reshape(B, T, -1).transpose(1, 0, 2)

    def run_dir(xs, wih, whh, b):
        H = whh.shape[0]
        Bn = xs.shape[1]

        def step(carry, x_t):
            h, c = carry
            gates = x_t @ wih + h @ whh + b
            i = jax.nn.sigmoid(gates[:, :H])
            f = jax.nn.sigmoid(gates[:, H:2 * H])
            g_ = jnp.tanh(gates[:, 2 * H:3 * H])
            o = jax.nn.sigmoid(gates[:, 3 * H:])
            c = f * c + i * g_
            h = o * jnp.tanh(c)
            return (h, c), h

        _, ys = lax.scan(step, (jnp.zeros((Bn, H)), jnp.zeros((Bn, H))), xs)
        return ys

    for (pf, pr) in params["lstm"]:
        out_f = run_dir(seq, *pf)
        out_r = run_dir(seq[::-1], *pr)[::-1]
        seq = jnp.concatenate([out_f, out_r], axis=-1)
    last = seq[-1]
    wmu, bmu = params["mu"]
    wlv, blv = params["logvar"]
    return last @ wmu + bmu, last @ wlv + blv


if __name__ == "__main__":
    B, T = 2, 8
    input_dim, latent_dim = 8, 8
    hidden_dims = [32, 32]
    lstm_hidden = 16

    key = jax.random.PRNGKey(0)
    pkey, xkey = jax.random.split(key)
    params = init_params(pkey, input_dim, latent_dim, hidden_dims, lstm_hidden)
    fused = fuse_params(params)                      # one-time layout prep
    X = jax.random.normal(xkey, (B, T, input_dim), jnp.float32)

    fwd = jax.jit(ts_encoder_forward)
    mu, logvar = fwd(fused, X)
    jax.block_until_ready((mu, logvar))

    assert mu.shape == (B, latent_dim) and logvar.shape == (B, latent_dim)
    mu_ref, lv_ref = ref_forward(params, X)
    np.testing.assert_allclose(np.asarray(mu), np.asarray(mu_ref), atol=1e-2, rtol=1e-2)
    np.testing.assert_allclose(np.asarray(logvar), np.asarray(lv_ref), atol=1e-2, rtol=1e-2)

    print("KERNEL_OK")
</pallas_src>

<mosaic_0001>
module attributes {stable_mosaic.version = 11 : i64} {
  func.func @kernel(%arg0: memref<16x8xf32, #tpu.memory_space<vmem>>, %arg1: memref<8x32xf32, #tpu.memory_space<vmem>>, %arg2: memref<1x32xf32, #tpu.memory_space<vmem>>, %arg3: memref<1x32xf32, #tpu.memory_space<vmem>>, %arg4: memref<1x32xf32, #tpu.memory_space<vmem>>, %arg5: memref<32x32xf32, #tpu.memory_space<vmem>>, %arg6: memref<1x32xf32, #tpu.memory_space<vmem>>, %arg7: memref<1x32xf32, #tpu.memory_space<vmem>>, %arg8: memref<1x32xf32, #tpu.memory_space<vmem>>, %arg9: memref<32x128xf32, #tpu.memory_space<vmem>>, %arg10: memref<16x64xf32, #tpu.memory_space<vmem>>, %arg11: memref<16x64xf32, #tpu.memory_space<vmem>>, %arg12: memref<1x128xf32, #tpu.memory_space<vmem>>, %arg13: memref<32x128xf32, #tpu.memory_space<vmem>>, %arg14: memref<16x64xf32, #tpu.memory_space<vmem>>, %arg15: memref<1x128xf32, #tpu.memory_space<vmem>>, %arg16: memref<16x16xf32, #tpu.memory_space<vmem>>, %arg17: memref<16x16xf32, #tpu.memory_space<vmem>>, %arg18: memref<1x16xf32, #tpu.memory_space<vmem>>, %arg19: memref<2x8xf32, #tpu.memory_space<vmem>>, %arg20: memref<2x8xf32, #tpu.memory_space<vmem>>, %arg21: memref<16x32xf32, #tpu.memory_space<vmem>>) attributes {dimension_semantics = [], scalar_prefetch = 0 : i64, scratch_operands = 1 : i64, tpu.core_type = #tpu.core_type<tc>} {
    %c0 = arith.constant 0 : index
    %c0_0 = arith.constant 0 : index
    %0 = vector.load %arg0[%c0, %c0_0] : memref<16x8xf32, #tpu.memory_space<vmem>>, vector<16x8xf32>
    %c0_1 = arith.constant 0 : index
    %c0_2 = arith.constant 0 : index
    %1 = vector.load %arg1[%c0_1, %c0_2] : memref<8x32xf32, #tpu.memory_space<vmem>>, vector<8x32xf32>
    %cst = arith.constant dense<0.000000e+00> : vector<16x32xf32>
    %2 = tpu.matmul %0, %1, %cst {dimension_numbers = #tpu.dot_dimension_numbers<[1], [0], [0], [1], [0, 0, 1, 1], [], []>} : vector<16x8xf32>, vector<8x32xf32>, vector<16x32xf32> -> vector<16x32xf32>
    %c0_3 = arith.constant 0 : index
    %c0_4 = arith.constant 0 : index
    %3 = vector.load %arg2[%c0_3, %c0_4] : memref<1x32xf32, #tpu.memory_space<vmem>>, vector<1x32xf32>
    %4 = vector.broadcast %3 : vector<1x32xf32> to vector<16x32xf32>
    %5 = arith.addf %2, %4 : vector<16x32xf32>
    %cst_5 = arith.constant dense<0.000000e+00> : vector<32xf32>
    %6 = vector.multi_reduction <add>, %5, %cst_5 [0] : vector<16x32xf32> to vector<32xf32>
    %7 = vector.shape_cast %6 : vector<32xf32> to vector<1x32xf32>
    %cst_6 = arith.constant 1.600000e+01 : f32
    %8 = vector.broadcast %cst_6 : f32 to vector<1x32xf32>
    %9 = arith.divf %7, %8 : vector<1x32xf32>
    %10 = vector.broadcast %9 : vector<1x32xf32> to vector<16x32xf32>
    %11 = arith.subf %5, %10 : vector<16x32xf32>
    %12 = arith.mulf %11, %11 : vector<16x32xf32>
    %cst_7 = arith.constant dense<0.000000e+00> : vector<32xf32>
    %13 = vector.multi_reduction <add>, %12, %cst_7 [0] : vector<16x32xf32> to vector<32xf32>
    %14 = vector.shape_cast %13 : vector<32xf32> to vector<1x32xf32>
    %cst_8 = arith.constant 1.600000e+01 : f32
    %15 = vector.broadcast %cst_8 : f32 to vector<1x32xf32>
    %16 = arith.divf %14, %15 : vector<1x32xf32>
    %c0_9 = arith.constant 0 : index
    %c0_10 = arith.constant 0 : index
    %17 = vector.load %arg3[%c0_9, %c0_10] : memref<1x32xf32, #tpu.memory_space<vmem>>, vector<1x32xf32>
    %18 = vector.broadcast %9 : vector<1x32xf32> to vector<16x32xf32>
    %19 = arith.subf %5, %18 : vector<16x32xf32>
    %20 = vector.broadcast %17 : vector<1x32xf32> to vector<16x32xf32>
    %21 = arith.mulf %20, %19 : vector<16x32xf32>
    %cst_11 = arith.constant 9.99999974E-6 : f32
    %22 = vector.broadcast %cst_11 : f32 to vector<1x32xf32>
    %23 = arith.addf %16, %22 : vector<1x32xf32>
    %24 = math.rsqrt %23 : vector<1x32xf32>
    %25 = vector.broadcast %24 : vector<1x32xf32> to vector<16x32xf32>
    %26 = arith.mulf %21, %25 : vector<16x32xf32>
    %c0_12 = arith.constant 0 : index
    %c0_13 = arith.constant 0 : index
    %27 = vector.load %arg4[%c0_12, %c0_13] : memref<1x32xf32, #tpu.memory_space<vmem>>, vector<1x32xf32>
    %28 = vector.broadcast %27 : vector<1x32xf32> to vector<16x32xf32>
    %29 = arith.addf %26, %28 : vector<16x32xf32>
    %cst_14 = arith.constant 0.000000e+00 : f32
    %30 = vector.broadcast %cst_14 : f32 to vector<16x32xf32>
    %31 = arith.maximumf %29, %30 : vector<16x32xf32>
    %c0_15 = arith.constant 0 : index
    %c0_16 = arith.constant 0 : index
    %32 = vector.load %arg5[%c0_15, %c0_16] : memref<32x32xf32, #tpu.memory_space<vmem>>, vector<32x32xf32>
    %cst_17 = arith.constant dense<0.000000e+00> : vector<16x32xf32>
    %33 = tpu.matmul %31, %32, %cst_17 {dimension_numbers = #tpu.dot_dimension_numbers<[1], [0], [0], [1], [0, 0, 1, 1], [], []>} : vector<16x32xf32>, vector<32x32xf32>, vector<16x32xf32> -> vector<16x32xf32>
    %c0_18 = arith.constant 0 : index
    %c0_19 = arith.constant 0 : index
    %34 = vector.load %arg6[%c0_18, %c0_19] : memref<1x32xf32, #tpu.memory_space<vmem>>, vector<1x32xf32>
    %35 = vector.broadcast %34 : vector<1x32xf32> to vector<16x32xf32>
    %36 = arith.addf %33, %35 : vector<16x32xf32>
    %cst_20 = arith.constant dense<0.000000e+00> : vector<32xf32>
    %37 = vector.multi_reduction <add>, %36, %cst_20 [0] : vector<16x32xf32> to vector<32xf32>
    %38 = vector.shape_cast %37 : vector<32xf32> to vector<1x32xf32>
    %cst_21 = arith.constant 1.600000e+01 : f32
    %39 = vector.broadcast %cst_21 : f32 to vector<1x32xf32>
    %40 = arith.divf %38, %39 : vector<1x32xf32>
    %41 = vector.broadcast %40 : vector<1x32xf32> to vector<16x32xf32>
    %42 = arith.subf %36, %41 : vector<16x32xf32>
    %43 = arith.mulf %42, %42 : vector<16x32xf32>
    %cst_22 = arith.constant dense<0.000000e+00> : vector<32xf32>
    %44 = vector.multi_reduction <add>, %43, %cst_22 [0] : vector<16x32xf32> to vector<32xf32>
    %45 = vector.shape_cast %44 : vector<32xf32> to vector<1x32xf32>
    %cst_23 = arith.constant 1.600000e+01 : f32
    %46 = vector.broadcast %cst_23 : f32 to vector<1x32xf32>
    %47 = arith.divf %45, %46 : vector<1x32xf32>
    %c0_24 = arith.constant 0 : index
    %c0_25 = arith.constant 0 : index
    %48 = vector.load %arg7[%c0_24, %c0_25] : memref<1x32xf32, #tpu.memory_space<vmem>>, vector<1x32xf32>
    %49 = vector.broadcast %40 : vector<1x32xf32> to vector<16x32xf32>
    %50 = arith.subf %36, %49 : vector<16x32xf32>
    %51 = vector.broadcast %48 : vector<1x32xf32> to vector<16x32xf32>
    %52 = arith.mulf %51, %50 : vector<16x32xf32>
    %cst_26 = arith.constant 9.99999974E-6 : f32
    %53 = vector.broadcast %cst_26 : f32 to vector<1x32xf32>
    %54 = arith.addf %47, %53 : vector<1x32xf32>
    %55 = math.rsqrt %54 : vector<1x32xf32>
    %56 = vector.broadcast %55 : vector<1x32xf32> to vector<16x32xf32>
    %57 = arith.mulf %52, %56 : vector<16x32xf32>
    %c0_27 = arith.constant 0 : index
    %c0_28 = arith.constant 0 : index
    %58 = vector.load %arg8[%c0_27, %c0_28] : memref<1x32xf32, #tpu.memory_space<vmem>>, vector<1x32xf32>
    %59 = vector.broadcast %58 : vector<1x32xf32> to vector<16x32xf32>
    %60 = arith.addf %57, %59 : vector<16x32xf32>
    %cst_29 = arith.constant 0.000000e+00 : f32
    %61 = vector.broadcast %cst_29 : f32 to vector<16x32xf32>
    %62 = arith.maximumf %60, %61 : vector<16x32xf32>
    %c0_30 = arith.constant 0 : index
    %c0_31 = arith.constant 0 : index
    %63 = vector.load %arg9[%c0_30, %c0_31] : memref<32x128xf32, #tpu.memory_space<vmem>>, vector<32x128xf32>
    %cst_32 = arith.constant dense<0.000000e+00> : vector<16x128xf32>
    %64 = tpu.matmul %62, %63, %cst_32 {dimension_numbers = #tpu.dot_dimension_numbers<[1], [0], [0], [1], [0, 0, 1, 1], [], []>} : vector<16x32xf32>, vector<32x128xf32>, vector<16x128xf32> -> vector<16x128xf32>
    %c0_33 = arith.constant 0 : index
    %c0_34 = arith.constant 0 : index
    %65 = vector.load %arg12[%c0_33, %c0_34] : memref<1x128xf32, #tpu.memory_space<vmem>>, vector<1x128xf32>
    %66 = vector.broadcast %65 : vector<1x128xf32> to vector<16x128xf32>
    %67 = arith.addf %64, %66 : vector<16x128xf32>
    %c0_35 = arith.constant 0 : index
    %c0_36 = arith.constant 0 : index
    %68 = vector.load %arg10[%c0_35, %c0_36] : memref<16x64xf32, #tpu.memory_space<vmem>>, vector<16x64xf32>
    %c0_37 = arith.constant 0 : index
    %c0_38 = arith.constant 0 : index
    %69 = vector.load %arg11[%c0_37, %c0_38] : memref<16x64xf32, #tpu.memory_space<vmem>>, vector<16x64xf32>
    %cst_39 = arith.constant 0.000000e+00 : f32
    %70 = vector.broadcast %cst_39 : f32 to vector<2x16xf32>
    %cst_40 = arith.constant 0.000000e+00 : f32
    %71 = vector.broadcast %cst_40 : f32 to vector<2x16xf32>
    %cst_41 = arith.constant 0.000000e+00 : f32
    %72 = vector.broadcast %cst_41 : f32 to vector<2x16xf32>
    %cst_42 = arith.constant 0.000000e+00 : f32
    %73 = vector.broadcast %cst_42 : f32 to vector<2x16xf32>
    %74 = vector.extract_strided_slice %67 {offsets = [0, 0], sizes = [2, 64], strides = [1, 1]} : vector<16x128xf32> to vector<2x64xf32>
    %cst_43 = arith.constant dense<0.000000e+00> : vector<2x64xf32>
    %75 = tpu.matmul %70, %68, %cst_43 {dimension_numbers = #tpu.dot_dimension_numbers<[1], [0], [0], [1], [0, 0, 1, 1], [], []>} : vector<2x16xf32>, vector<16x64xf32>, vector<2x64xf32> -> vector<2x64xf32>
    %76 = arith.addf %74, %75 : vector<2x64xf32>
    %77 = vector.extract_strided_slice %67 {offsets = [14, 64], sizes = [2, 64], strides = [1, 1]} : vector<16x128xf32> to vector<2x64xf32>
    %cst_44 = arith.constant dense<0.000000e+00> : vector<2x64xf32>
    %78 = tpu.matmul %72, %69, %cst_44 {dimension_numbers = #tpu.dot_dimension_numbers<[1], [0], [0], [1], [0, 0, 1, 1], [], []>} : vector<2x16xf32>, vector<16x64xf32>, vector<2x64xf32> -> vector<2x64xf32>
    %79 = arith.addf %77, %78 : vector<2x64xf32>
    %80 = vector.extract_strided_slice %76 {offsets = [0, 0], sizes = [2, 16], strides = [1, 1]} : vector<2x64xf32> to vector<2x16xf32>
    %81 = arith.negf %80 : vector<2x16xf32>
    %82 = math.exp %81 : vector<2x16xf32>
    %cst_45 = arith.constant 1.000000e+00 : f32
    %83 = vector.broadcast %cst_45 : f32 to vector<2x16xf32>
    %84 = arith.addf %83, %82 : vector<2x16xf32>
    %85 = arith.divf %83, %84 : vector<2x16xf32>
    %86 = vector.extract_strided_slice %76 {offsets = [0, 16], sizes = [2, 16], strides = [1, 1]} : vector<2x64xf32> to vector<2x16xf32>
    %87 = arith.negf %86 : vector<2x16xf32>
    %88 = math.exp %87 : vector<2x16xf32>
    %cst_46 = arith.constant 1.000000e+00 : f32
    %89 = vector.broadcast %cst_46 : f32 to vector<2x16xf32>
    %90 = arith.addf %89, %88 : vector<2x16xf32>
    %91 = arith.divf %89, %90 : vector<2x16xf32>
    %92 = vector.extract_strided_slice %76 {offsets = [0, 32], sizes = [2, 16], strides = [1, 1]} : vector<2x64xf32> to vector<2x16xf32>
    %93 = math.tanh %92 : vector<2x16xf32>
    %94 = vector.extract_strided_slice %76 {offsets = [0, 48], sizes = [2, 16], strides = [1, 1]} : vector<2x64xf32> to vector<2x16xf32>
    %95 = arith.negf %94 : vector<2x16xf32>
    %96 = math.exp %95 : vector<2x16xf32>
    %cst_47 = arith.constant 1.000000e+00 : f32
    %97 = vector.broadcast %cst_47 : f32 to vector<2x16xf32>
    %98 = arith.addf %97, %96 : vector<2x16xf32>
    %99 = arith.divf %97, %98 : vector<2x16xf32>
    %100 = arith.mulf %91, %71 : vector<2x16xf32>
    %101 = arith.mulf %85, %93 : vector<2x16xf32>
    %102 = arith.addf %100, %101 : vector<2x16xf32>
    %103 = math.tanh %102 : vector<2x16xf32>
    %104 = arith.mulf %99, %103 : vector<2x16xf32>
    %105 = vector.extract_strided_slice %79 {offsets = [0, 0], sizes = [2, 16], strides = [1, 1]} : vector<2x64xf32> to vector<2x16xf32>
    %106 = arith.negf %105 : vector<2x16xf32>
    %107 = math.exp %106 : vector<2x16xf32>
    %cst_48 = arith.constant 1.000000e+00 : f32
    %108 = vector.broadcast %cst_48 : f32 to vector<2x16xf32>
    %109 = arith.addf %108, %107 : vector<2x16xf32>
    %110 = arith.divf %108, %109 : vector<2x16xf32>
    %111 = vector.extract_strided_slice %79 {offsets = [0, 16], sizes = [2, 16], strides = [1, 1]} : vector<2x64xf32> to vector<2x16xf32>
    %112 = arith.negf %111 : vector<2x16xf32>
    %113 = math.exp %112 : vector<2x16xf32>
    %cst_49 = arith.constant 1.000000e+00 : f32
    %114 = vector.broadcast %cst_49 : f32 to vector<2x16xf32>
    %115 = arith.addf %114, %113 : vector<2x16xf32>
    %116 = arith.divf %114, %115 : vector<2x16xf32>
    %117 = vector.extract_strided_slice %79 {offsets = [0, 32], sizes = [2, 16], strides = [1, 1]} : vector<2x64xf32> to vector<2x16xf32>
    %118 = math.tanh %117 : vector<2x16xf32>
    %119 = vector.extract_strided_slice %79 {offsets = [0, 48], sizes = [2, 16], strides = [1, 1]} : vector<2x64xf32> to vector<2x16xf32>
    %120 = arith.negf %119 : vector<2x16xf32>
    %121 = math.exp %120 : vector<2x16xf32>
    %cst_50 = arith.constant 1.000000e+00 : f32
    %122 = vector.broadcast %cst_50 : f32 to vector<2x16xf32>
    %123 = arith.addf %122, %121 : vector<2x16xf32>
    %124 = arith.divf %122, %123 : vector<2x16xf32>
    %125 = arith.mulf %116, %73 : vector<2x16xf32>
    %126 = arith.mulf %110, %118 : vector<2x16xf32>
    %127 = arith.addf %125, %126 : vector<2x16xf32>
    %128 = math.tanh %127 : vector<2x16xf32>
    %129 = arith.mulf %124, %128 : vector<2x16xf32>
    %c0_51 = arith.constant 0 : index
    %c0_52 = arith.constant 0 : index
    %130 = vector.load %arg21[%c0_51, %c0_52] : memref<16x32xf32, #tpu.memory_space<vmem>>, vector<2x16xf32>
    tpu.vector_store %arg21[%c0_51, %c0_52], %104 {strides = array<i32>} : memref<16x32xf32, #tpu.memory_space<vmem>>, vector<2x16xf32>,
    %c14 = arith.constant 14 : index
    %c16 = arith.constant 16 : index
    %131 = vector.load %arg21[%c14, %c16] : memref<16x32xf32, #tpu.memory_space<vmem>>, vector<2x16xf32>
    tpu.vector_store %arg21[%c14, %c16], %129 {strides = array<i32>} : memref<16x32xf32, #tpu.memory_space<vmem>>, vector<2x16xf32>,
    %132 = vector.extract_strided_slice %67 {offsets = [2, 0], sizes = [2, 64], strides = [1, 1]} : vector<16x128xf32> to vector<2x64xf32>
    %cst_53 = arith.constant dense<0.000000e+00> : vector<2x64xf32>
    %133 = tpu.matmul %104, %68, %cst_53 {dimension_numbers = #tpu.dot_dimension_numbers<[1], [0], [0], [1], [0, 0, 1, 1], [], []>} : vector<2x16xf32>, vector<16x64xf32>, vector<2x64xf32> -> vector<2x64xf32>
    %134 = arith.addf %132, %133 : vector<2x64xf32>
    %135 = vector.extract_strided_slice %67 {offsets = [12, 64], sizes = [2, 64], strides = [1, 1]} : vector<16x128xf32> to vector<2x64xf32>
    %cst_54 = arith.constant dense<0.000000e+00> : vector<2x64xf32>
    %136 = tpu.matmul %129, %69, %cst_54 {dimension_numbers = #tpu.dot_dimension_numbers<[1], [0], [0], [1], [0, 0, 1, 1], [], []>} : vector<2x16xf32>, vector<16x64xf32>, vector<2x64xf32> -> vector<2x64xf32>
    %137 = arith.addf %135, %136 : vector<2x64xf32>
    %138 = vector.extract_strided_slice %134 {offsets = [0, 0], sizes = [2, 16], strides = [1, 1]} : vector<2x64xf32> to vector<2x16xf32>
    %139 = arith.negf %138 : vector<2x16xf32>
    %140 = math.exp %139 : vector<2x16xf32>
    %cst_55 = arith.constant 1.000000e+00 : f32
    %141 = vector.broadcast %cst_55 : f32 to vector<2x16xf32>
    %142 = arith.addf %141, %140 : vector<2x16xf32>
    %143 = arith.divf %141, %142 : vector<2x16xf32>
    %144 = vector.extract_strided_slice %134 {offsets = [0, 16], sizes = [2, 16], strides = [1, 1]} : vector<2x64xf32> to vector<2x16xf32>
    %145 = arith.negf %144 : vector<2x16xf32>
    %146 = math.exp %145 : vector<2x16xf32>
    %cst_56 = arith.constant 1.000000e+00 : f32
    %147 = vector.broadcast %cst_56 : f32 to vector<2x16xf32>
    %148 = arith.addf %147, %146 : vector<2x16xf32>
    %149 = arith.divf %147, %148 : vector<2x16xf32>
    %150 = vector.extract_strided_slice %134 {offsets = [0, 32], sizes = [2, 16], strides = [1, 1]} : vector<2x64xf32> to vector<2x16xf32>
    %151 = math.tanh %150 : vector<2x16xf32>
    %152 = vector.extract_strided_slice %134 {offsets = [0, 48], sizes = [2, 16], strides = [1, 1]} : vector<2x64xf32> to vector<2x16xf32>
    %153 = arith.negf %152 : vector<2x16xf32>
    %154 = math.exp %153 : vector<2x16xf32>
    %cst_57 = arith.constant 1.000000e+00 : f32
    %155 = vector.broadcast %cst_57 : f32 to vector<2x16xf32>
    %156 = arith.addf %155, %154 : vector<2x16xf32>
    %157 = arith.divf %155, %156 : vector<2x16xf32>
    %158 = arith.mulf %149, %102 : vector<2x16xf32>
    %159 = arith.mulf %143, %151 : vector<2x16xf32>
    %160 = arith.addf %158, %159 : vector<2x16xf32>
    %161 = math.tanh %160 : vector<2x16xf32>
    %162 = arith.mulf %157, %161 : vector<2x16xf32>
    %163 = vector.extract_strided_slice %137 {offsets = [0, 0], sizes = [2, 16], strides = [1, 1]} : vector<2x64xf32> to vector<2x16xf32>
    %164 = arith.negf %163 : vector<2x16xf32>
    %165 = math.exp %164 : vector<2x16xf32>
    %cst_58 = arith.constant 1.000000e+00 : f32
    %166 = vector.broadcast %cst_58 : f32 to vector<2x16xf32>
    %167 = arith.addf %166, %165 : vector<2x16xf32>
    %168 = arith.divf %166, %167 : vector<2x16xf32>
    %169 = vector.extract_strided_slice %137 {offsets = [0, 16], sizes = [2, 16], strides = [1, 1]} : vector<2x64xf32> to vector<2x16xf32>
    %170 = arith.negf %169 : vector<2x16xf32>
    %171 = math.exp %170 : vector<2x16xf32>
    %cst_59 = arith.constant 1.000000e+00 : f32
    %172 = vector.broadcast %cst_59 : f32 to vector<2x16xf32>
    %173 = arith.addf %172, %171 : vector<2x16xf32>
    %174 = arith.divf %172, %173 : vector<2x16xf32>
    %175 = vector.extract_strided_slice %137 {offsets = [0, 32], sizes = [2, 16], strides = [1, 1]} : vector<2x64xf32> to vector<2x16xf32>
    %176 = math.tanh %175 : vector<2x16xf32>
    %177 = vector.extract_strided_slice %137 {offsets = [0, 48], sizes = [2, 16], strides = [1, 1]} : vector<2x64xf32> to vector<2x16xf32>
    %178 = arith.negf %177 : vector<2x16xf32>
    %179 = math.exp %178 : vector<2x16xf32>
    %cst_60 = arith.constant 1.000000e+00 : f32
    %180 = vector.broadcast %cst_60 : f32 to vector<2x16xf32>
    %181 = arith.addf %180, %179 : vector<2x16xf32>
    %182 = arith.divf %180, %181 : vector<2x16xf32>
    %183 = arith.mulf %174, %127 : vector<2x16xf32>
    %184 = arith.mulf %168, %176 : vector<2x16xf32>
    %185 = arith.addf %183, %184 : vector<2x16xf32>
    %186 = math.tanh %185 : vector<2x16xf32>
    %187 = arith.mulf %182, %186 : vector<2x16xf32>
    %c2 = arith.constant 2 : index
    %c0_61 = arith.constant 0 : index
    %188 = vector.load %arg21[%c2, %c0_61] : memref<16x32xf32, #tpu.memory_space<vmem>>, vector<2x16xf32>
    tpu.vector_store %arg21[%c2, %c0_61], %162 {strides = array<i32>} : memref<16x32xf32, #tpu.memory_space<vmem>>, vector<2x16xf32>,
    %c12 = arith.constant 12 : index
    %c16_62 = arith.constant 16 : index
    %189 = vector.load %arg21[%c12, %c16_62] : memref<16x32xf32, #tpu.memory_space<vmem>>, vector<2x16xf32>
    tpu.vector_store %arg21[%c12, %c16_62], %187 {strides = array<i32>} : memref<16x32xf32, #tpu.memory_space<vmem>>, vector<2x16xf32>,
    %190 = vector.extract_strided_slice %67 {offsets = [4, 0], sizes = [2, 64], strides = [1, 1]} : vector<16x128xf32> to vector<2x64xf32>
    %cst_63 = arith.constant dense<0.000000e+00> : vector<2x64xf32>
    %191 = tpu.matmul %162, %68, %cst_63 {dimension_numbers = #tpu.dot_dimension_numbers<[1], [0], [0], [1], [0, 0, 1, 1], [], []>} : vector<2x16xf32>, vector<16x64xf32>, vector<2x64xf32> -> vector<2x64xf32>
    %192 = arith.addf %190, %191 : vector<2x64xf32>
    %193 = vector.extract_strided_slice %67 {offsets = [10, 64], sizes = [2, 64], strides = [1, 1]} : vector<16x128xf32> to vector<2x64xf32>
    %cst_64 = arith.constant dense<0.000000e+00> : vector<2x64xf32>
    %194 = tpu.matmul %187, %69, %cst_64 {dimension_numbers = #tpu.dot_dimension_numbers<[1], [0], [0], [1], [0, 0, 1, 1], [], []>} : vector<2x16xf32>, vector<16x64xf32>, vector<2x64xf32> -> vector<2x64xf32>
    %195 = arith.addf %193, %194 : vector<2x64xf32>
    %196 = vector.extract_strided_slice %192 {offsets = [0, 0], sizes = [2, 16], strides = [1, 1]} : vector<2x64xf32> to vector<2x16xf32>
    %197 = arith.negf %196 : vector<2x16xf32>
    %198 = math.exp %197 : vector<2x16xf32>
    %cst_65 = arith.constant 1.000000e+00 : f32
    %199 = vector.broadcast %cst_65 : f32 to vector<2x16xf32>
    %200 = arith.addf %199, %198 : vector<2x16xf32>
    %201 = arith.divf %199, %200 : vector<2x16xf32>
    %202 = vector.extract_strided_slice %192 {offsets = [0, 16], sizes = [2, 16], strides = [1, 1]} : vector<2x64xf32> to vector<2x16xf32>
    %203 = arith.negf %202 : vector<2x16xf32>
    %204 = math.exp %203 : vector<2x16xf32>
    %cst_66 = arith.constant 1.000000e+00 : f32
    %205 = vector.broadcast %cst_66 : f32 to vector<2x16xf32>
    %206 = arith.addf %205, %204 : vector<2x16xf32>
    %207 = arith.divf %205, %206 : vector<2x16xf32>
    %208 = vector.extract_strided_slice %192 {offsets = [0, 32], sizes = [2, 16], strides = [1, 1]} : vector<2x64xf32> to vector<2x16xf32>
    %209 = math.tanh %208 : vector<2x16xf32>
    %210 = vector.extract_strided_slice %192 {offsets = [0, 48], sizes = [2, 16], strides = [1, 1]} : vector<2x64xf32> to vector<2x16xf32>
    %211 = arith.negf %210 : vector<2x16xf32>
    %212 = math.exp %211 : vector<2x16xf32>
    %cst_67 = arith.constant 1.000000e+00 : f32
    %213 = vector.broadcast %cst_67 : f32 to vector<2x16xf32>
    %214 = arith.addf %213, %212 : vector<2x16xf32>
    %215 = arith.divf %213, %214 : vector<2x16xf32>
    %216 = arith.mulf %207, %160 : vector<2x16xf32>
    %217 = arith.mulf %201, %209 : vector<2x16xf32>
    %218 = arith.addf %216, %217 : vector<2x16xf32>
    %219 = math.tanh %218 : vector<2x16xf32>
    %220 = arith.mulf %215, %219 : vector<2x16xf32>
    %221 = vector.extract_strided_slice %195 {offsets = [0, 0], sizes = [2, 16], strides = [1, 1]} : vector<2x64xf32> to vector<2x16xf32>
    %222 = arith.negf %221 : vector<2x16xf32>
    %223 = math.exp %222 : vector<2x16xf32>
    %cst_68 = arith.constant 1.000000e+00 : f32
    %224 = vector.broadcast %cst_68 : f32 to vector<2x16xf32>
    %225 = arith.addf %224, %223 : vector<2x16xf32>
    %226 = arith.divf %224, %225 : vector<2x16xf32>
    %227 = vector.extract_strided_slice %195 {offsets = [0, 16], sizes = [2, 16], strides = [1, 1]} : vector<2x64xf32> to vector<2x16xf32>
    %228 = arith.negf %227 : vector<2x16xf32>
    %229 = math.exp %228 : vector<2x16xf32>
    %cst_69 = arith.constant 1.000000e+00 : f32
    %230 = vector.broadcast %cst_69 : f32 to vector<2x16xf32>
    %231 = arith.addf %230, %229 : vector<2x16xf32>
    %232 = arith.divf %230, %231 : vector<2x16xf32>
    %233 = vector.extract_strided_slice %195 {offsets = [0, 32], sizes = [2, 16], strides = [1, 1]} : vector<2x64xf32> to vector<2x16xf32>
    %234 = math.tanh %233 : vector<2x16xf32>
    %235 = vector.extract_strided_slice %195 {offsets = [0, 48], sizes = [2, 16], strides = [1, 1]} : vector<2x64xf32> to vector<2x16xf32>
    %236 = arith.negf %235 : vector<2x16xf32>
    %237 = math.exp %236 : vector<2x16xf32>
    %cst_70 = arith.constant 1.000000e+00 : f32
    %238 = vector.broadcast %cst_70 : f32 to vector<2x16xf32>
    %239 = arith.addf %238, %237 : vector<2x16xf32>
    %240 = arith.divf %238, %239 : vector<2x16xf32>
    %241 = arith.mulf %232, %185 : vector<2x16xf32>
    %242 = arith.mulf %226, %234 : vector<2x16xf32>
    %243 = arith.addf %241, %242 : vector<2x16xf32>
    %244 = math.tanh %243 : vector<2x16xf32>
    %245 = arith.mulf %240, %244 : vector<2x16xf32>
    %c4 = arith.constant 4 : index
    %c0_71 = arith.constant 0 : index
    %246 = vector.load %arg21[%c4, %c0_71] : memref<16x32xf32, #tpu.memory_space<vmem>>, vector<2x16xf32>
    tpu.vector_store %arg21[%c4, %c0_71], %220 {strides = array<i32>} : memref<16x32xf32, #tpu.memory_space<vmem>>, vector<2x16xf32>,
    %c10 = arith.constant 10 : index
    %c16_72 = arith.constant 16 : index
    %247 = vector.load %arg21[%c10, %c16_72] : memref<16x32xf32, #tpu.memory_space<vmem>>, vector<2x16xf32>
    tpu.vector_store %arg21[%c10, %c16_72], %245 {strides = array<i32>} : memref<16x32xf32, #tpu.memory_space<vmem>>, vector<2x16xf32>,
    %248 = vector.extract_strided_slice %67 {offsets = [6, 0], sizes = [2, 64], strides = [1, 1]} : vector<16x128xf32> to vector<2x64xf32>
    %cst_73 = arith.constant dense<0.000000e+00> : vector<2x64xf32>
    %249 = tpu.matmul %220, %68, %cst_73 {dimension_numbers = #tpu.dot_dimension_numbers<[1], [0], [0], [1], [0, 0, 1, 1], [], []>} : vector<2x16xf32>, vector<16x64xf32>, vector<2x64xf32> -> vector<2x64xf32>
    %250 = arith.addf %248, %249 : vector<2x64xf32>
    %251 = vector.extract_strided_slice %67 {offsets = [8, 64], sizes = [2, 64], strides = [1, 1]} : vector<16x128xf32> to vector<2x64xf32>
    %cst_74 = arith.constant dense<0.000000e+00> : vector<2x64xf32>
    %252 = tpu.matmul %245, %69, %cst_74 {dimension_numbers = #tpu.dot_dimension_numbers<[1], [0], [0], [1], [0, 0, 1, 1], [], []>} : vector<2x16xf32>, vector<16x64xf32>, vector<2x64xf32> -> vector<2x64xf32>
    %253 = arith.addf %251, %252 : vector<2x64xf32>
    %254 = vector.extract_strided_slice %250 {offsets = [0, 0], sizes = [2, 16], strides = [1, 1]} : vector<2x64xf32> to vector<2x16xf32>
    %255 = arith.negf %254 : vector<2x16xf32>
    %256 = math.exp %255 : vector<2x16xf32>
    %cst_75 = arith.constant 1.000000e+00 : f32
    %257 = vector.broadcast %cst_75 : f32 to vector<2x16xf32>
    %258 = arith.addf %257, %256 : vector<2x16xf32>
    %259 = arith.divf %257, %258 : vector<2x16xf32>
    %260 = vector.extract_strided_slice %250 {offsets = [0, 16], sizes = [2, 16], strides = [1, 1]} : vector<2x64xf32> to vector<2x16xf32>
    %261 = arith.negf %260 : vector<2x16xf32>
    %262 = math.exp %261 : vector<2x16xf32>
    %cst_76 = arith.constant 1.000000e+00 : f32
    %263 = vector.broadcast %cst_76 : f32 to vector<2x16xf32>
    %264 = arith.addf %263, %262 : vector<2x16xf32>
    %265 = arith.divf %263, %264 : vector<2x16xf32>
    %266 = vector.extract_strided_slice %250 {offsets = [0, 32], sizes = [2, 16], strides = [1, 1]} : vector<2x64xf32> to vector<2x16xf32>
    %267 = math.tanh %266 : vector<2x16xf32>
    %268 = vector.extract_strided_slice %250 {offsets = [0, 48], sizes = [2, 16], strides = [1, 1]} : vector<2x64xf32> to vector<2x16xf32>
    %269 = arith.negf %268 : vector<2x16xf32>
    %270 = math.exp %269 : vector<2x16xf32>
    %cst_77 = arith.constant 1.000000e+00 : f32
    %271 = vector.broadcast %cst_77 : f32 to vector<2x16xf32>
    %272 = arith.addf %271, %270 : vector<2x16xf32>
    %273 = arith.divf %271, %272 : vector<2x16xf32>
    %274 = arith.mulf %265, %218 : vector<2x16xf32>
    %275 = arith.mulf %259, %267 : vector<2x16xf32>
    %276 = arith.addf %274, %275 : vector<2x16xf32>
    %277 = math.tanh %276 : vector<2x16xf32>
    %278 = arith.mulf %273, %277 : vector<2x16xf32>
    %279 = vector.extract_strided_slice %253 {offsets = [0, 0], sizes = [2, 16], strides = [1, 1]} : vector<2x64xf32> to vector<2x16xf32>
    %280 = arith.negf %279 : vector<2x16xf32>
    %281 = math.exp %280 : vector<2x16xf32>
    %cst_78 = arith.constant 1.000000e+00 : f32
    %282 = vector.broadcast %cst_78 : f32 to vector<2x16xf32>
    %283 = arith.addf %282, %281 : vector<2x16xf32>
    %284 = arith.divf %282, %283 : vector<2x16xf32>
    %285 = vector.extract_strided_slice %253 {offsets = [0, 16], sizes = [2, 16], strides = [1, 1]} : vector<2x64xf32> to vector<2x16xf32>
    %286 = arith.negf %285 : vector<2x16xf32>
    %287 = math.exp %286 : vector<2x16xf32>
    %cst_79 = arith.constant 1.000000e+00 : f32
    %288 = vector.broadcast %cst_79 : f32 to vector<2x16xf32>
    %289 = arith.addf %288, %287 : vector<2x16xf32>
    %290 = arith.divf %288, %289 : vector<2x16xf32>
    %291 = vector.extract_strided_slice %253 {offsets = [0, 32], sizes = [2, 16], strides = [1, 1]} : vector<2x64xf32> to vector<2x16xf32>
    %292 = math.tanh %291 : vector<2x16xf32>
    %293 = vector.extract_strided_slice %253 {offsets = [0, 48], sizes = [2, 16], strides = [1, 1]} : vector<2x64xf32> to vector<2x16xf32>
    %294 = arith.negf %293 : vector<2x16xf32>
    %295 = math.exp %294 : vector<2x16xf32>
    %cst_80 = arith.constant 1.000000e+00 : f32
    %296 = vector.broadcast %cst_80 : f32 to vector<2x16xf32>
    %297 = arith.addf %296, %295 : vector<2x16xf32>
    %298 = arith.divf %296, %297 : vector<2x16xf32>
    %299 = arith.mulf %290, %243 : vector<2x16xf32>
    %300 = arith.mulf %284, %292 : vector<2x16xf32>
    %301 = arith.addf %299, %300 : vector<2x16xf32>
    %302 = math.tanh %301 : vector<2x16xf32>
    %303 = arith.mulf %298, %302 : vector<2x16xf32>
    %c6 = arith.constant 6 : index
    %c0_81 = arith.constant 0 : index
    %304 = vector.load %arg21[%c6, %c0_81] : memref<16x32xf32, #tpu.memory_space<vmem>>, vector<2x16xf32>
    tpu.vector_store %arg21[%c6, %c0_81], %278 {strides = array<i32>} : memref<16x32xf32, #tpu.memory_space<vmem>>, vector<2x16xf32>,
    %c8 = arith.constant 8 : index
    %c16_82 = arith.constant 16 : index
    %305 = vector.load %arg21[%c8, %c16_82] : memref<16x32xf32, #tpu.memory_space<vmem>>, vector<2x16xf32>
    tpu.vector_store %arg21[%c8, %c16_82], %303 {strides = array<i32>} : memref<16x32xf32, #tpu.memory_space<vmem>>, vector<2x16xf32>,
    %306 = vector.extract_strided_slice %67 {offsets = [8, 0], sizes = [2, 64], strides = [1, 1]} : vector<16x128xf32> to vector<2x64xf32>
    %cst_83 = arith.constant dense<0.000000e+00> : vector<2x64xf32>
    %307 = tpu.matmul %278, %68, %cst_83 {dimension_numbers = #tpu.dot_dimension_numbers<[1], [0], [0], [1], [0, 0, 1, 1], [], []>} : vector<2x16xf32>, vector<16x64xf32>, vector<2x64xf32> -> vector<2x64xf32>
    %308 = arith.addf %306, %307 : vector<2x64xf32>
    %309 = vector.extract_strided_slice %67 {offsets = [6, 64], sizes = [2, 64], strides = [1, 1]} : vector<16x128xf32> to vector<2x64xf32>
    %cst_84 = arith.constant dense<0.000000e+00> : vector<2x64xf32>
    %310 = tpu.matmul %303, %69, %cst_84 {dimension_numbers = #tpu.dot_dimension_numbers<[1], [0], [0], [1], [0, 0, 1, 1], [], []>} : vector<2x16xf32>, vector<16x64xf32>, vector<2x64xf32> -> vector<2x64xf32>
    %311 = arith.addf %309, %310 : vector<2x64xf32>
    %312 = vector.extract_strided_slice %308 {offsets = [0, 0], sizes = [2, 16], strides = [1, 1]} : vector<2x64xf32> to vector<2x16xf32>
    %313 = arith.negf %312 : vector<2x16xf32>
    %314 = math.exp %313 : vector<2x16xf32>
    %cst_85 = arith.constant 1.000000e+00 : f32
    %315 = vector.broadcast %cst_85 : f32 to vector<2x16xf32>
    %316 = arith.addf %315, %314 : vector<2x16xf32>
    %317 = arith.divf %315, %316 : vector<2x16xf32>
    %318 = vector.extract_strided_slice %308 {offsets = [0, 16], sizes = [2, 16], strides = [1, 1]} : vector<2x64xf32> to vector<2x16xf32>
    %319 = arith.negf %318 : vector<2x16xf32>
    %320 = math.exp %319 : vector<2x16xf32>
    %cst_86 = arith.constant 1.000000e+00 : f32
    %321 = vector.broadcast %cst_86 : f32 to vector<2x16xf32>
    %322 = arith.addf %321, %320 : vector<2x16xf32>
    %323 = arith.divf %321, %322 : vector<2x16xf32>
    %324 = vector.extract_strided_slice %308 {offsets = [0, 32], sizes = [2, 16], strides = [1, 1]} : vector<2x64xf32> to vector<2x16xf32>
    %325 = math.tanh %324 : vector<2x16xf32>
    %326 = vector.extract_strided_slice %308 {offsets = [0, 48], sizes = [2, 16], strides = [1, 1]} : vector<2x64xf32> to vector<2x16xf32>
    %327 = arith.negf %326 : vector<2x16xf32>
    %328 = math.exp %327 : vector<2x16xf32>
    %cst_87 = arith.constant 1.000000e+00 : f32
    %329 = vector.broadcast %cst_87 : f32 to vector<2x16xf32>
    %330 = arith.addf %329, %328 : vector<2x16xf32>
    %331 = arith.divf %329, %330 : vector<2x16xf32>
    %332 = arith.mulf %323, %276 : vector<2x16xf32>
    %333 = arith.mulf %317, %325 : vector<2x16xf32>
    %334 = arith.addf %332, %333 : vector<2x16xf32>
    %335 = math.tanh %334 : vector<2x16xf32>
    %336 = arith.mulf %331, %335 : vector<2x16xf32>
    %337 = vector.extract_strided_slice %311 {offsets = [0, 0], sizes = [2, 16], strides = [1, 1]} : vector<2x64xf32> to vector<2x16xf32>
    %338 = arith.negf %337 : vector<2x16xf32>
    %339 = math.exp %338 : vector<2x16xf32>
    %cst_88 = arith.constant 1.000000e+00 : f32
    %340 = vector.broadcast %cst_88 : f32 to vector<2x16xf32>
    %341 = arith.addf %340, %339 : vector<2x16xf32>
    %342 = arith.divf %340, %341 : vector<2x16xf32>
    %343 = vector.extract_strided_slice %311 {offsets = [0, 16], sizes = [2, 16], strides = [1, 1]} : vector<2x64xf32> to vector<2x16xf32>
    %344 = arith.negf %343 : vector<2x16xf32>
    %345 = math.exp %344 : vector<2x16xf32>
    %cst_89 = arith.constant 1.000000e+00 : f32
    %346 = vector.broadcast %cst_89 : f32 to vector<2x16xf32>
    %347 = arith.addf %346, %345 : vector<2x16xf32>
    %348 = arith.divf %346, %347 : vector<2x16xf32>
    %349 = vector.extract_strided_slice %311 {offsets = [0, 32], sizes = [2, 16], strides = [1, 1]} : vector<2x64xf32> to vector<2x16xf32>
    %350 = math.tanh %349 : vector<2x16xf32>
    %351 = vector.extract_strided_slice %311 {offsets = [0, 48], sizes = [2, 16], strides = [1, 1]} : vector<2x64xf32> to vector<2x16xf32>
    %352 = arith.negf %351 : vector<2x16xf32>
    %353 = math.exp %352 : vector<2x16xf32>
    %cst_90 = arith.constant 1.000000e+00 : f32
    %354 = vector.broadcast %cst_90 : f32 to vector<2x16xf32>
    %355 = arith.addf %354, %353 : vector<2x16xf32>
    %356 = arith.divf %354, %355 : vector<2x16xf32>
    %357 = arith.mulf %348, %301 : vector<2x16xf32>
    %358 = arith.mulf %342, %350 : vector<2x16xf32>
    %359 = arith.addf %357, %358 : vector<2x16xf32>
    %360 = math.tanh %359 : vector<2x16xf32>
    %361 = arith.mulf %356, %360 : vector<2x16xf32>
    %c8_91 = arith.constant 8 : index
    %c0_92 = arith.constant 0 : index
    %362 = vector.load %arg21[%c8_91, %c0_92] : memref<16x32xf32, #tpu.memory_space<vmem>>, vector<2x16xf32>
    tpu.vector_store %arg21[%c8_91, %c0_92], %336 {strides = array<i32>} : memref<16x32xf32, #tpu.memory_space<vmem>>, vector<2x16xf32>,
    %c6_93 = arith.constant 6 : index
    %c16_94 = arith.constant 16 : index
    %363 = vector.load %arg21[%c6_93, %c16_94] : memref<16x32xf32, #tpu.memory_space<vmem>>, vector<2x16xf32>
    tpu.vector_store %arg21[%c6_93, %c16_94], %361 {strides = array<i32>} : memref<16x32xf32, #tpu.memory_space<vmem>>, vector<2x16xf32>,
    %364 = vector.extract_strided_slice %67 {offsets = [10, 0], sizes = [2, 64], strides = [1, 1]} : vector<16x128xf32> to vector<2x64xf32>
    %cst_95 = arith.constant dense<0.000000e+00> : vector<2x64xf32>
    %365 = tpu.matmul %336, %68, %cst_95 {dimension_numbers = #tpu.dot_dimension_numbers<[1], [0], [0], [1], [0, 0, 1, 1], [], []>} : vector<2x16xf32>, vector<16x64xf32>, vector<2x64xf32> -> vector<2x64xf32>
    %366 = arith.addf %364, %365 : vector<2x64xf32>
    %367 = vector.extract_strided_slice %67 {offsets = [4, 64], sizes = [2, 64], strides = [1, 1]} : vector<16x128xf32> to vector<2x64xf32>
    %cst_96 = arith.constant dense<0.000000e+00> : vector<2x64xf32>
    %368 = tpu.matmul %361, %69, %cst_96 {dimension_numbers = #tpu.dot_dimension_numbers<[1], [0], [0], [1], [0, 0, 1, 1], [], []>} : vector<2x16xf32>, vector<16x64xf32>, vector<2x64xf32> -> vector<2x64xf32>
    %369 = arith.addf %367, %368 : vector<2x64xf32>
    %370 = vector.extract_strided_slice %366 {offsets = [0, 0], sizes = [2, 16], strides = [1, 1]} : vector<2x64xf32> to vector<2x16xf32>
    %371 = arith.negf %370 : vector<2x16xf32>
    %372 = math.exp %371 : vector<2x16xf32>
    %cst_97 = arith.constant 1.000000e+00 : f32
    %373 = vector.broadcast %cst_97 : f32 to vector<2x16xf32>
    %374 = arith.addf %373, %372 : vector<2x16xf32>
    %375 = arith.divf %373, %374 : vector<2x16xf32>
    %376 = vector.extract_strided_slice %366 {offsets = [0, 16], sizes = [2, 16], strides = [1, 1]} : vector<2x64xf32> to vector<2x16xf32>
    %377 = arith.negf %376 : vector<2x16xf32>
    %378 = math.exp %377 : vector<2x16xf32>
    %cst_98 = arith.constant 1.000000e+00 : f32
    %379 = vector.broadcast %cst_98 : f32 to vector<2x16xf32>
    %380 = arith.addf %379, %378 : vector<2x16xf32>
    %381 = arith.divf %379, %380 : vector<2x16xf32>
    %382 = vector.extract_strided_slice %366 {offsets = [0, 32], sizes = [2, 16], strides = [1, 1]} : vector<2x64xf32> to vector<2x16xf32>
    %383 = math.tanh %382 : vector<2x16xf32>
    %384 = vector.extract_strided_slice %366 {offsets = [0, 48], sizes = [2, 16], strides = [1, 1]} : vector<2x64xf32> to vector<2x16xf32>
    %385 = arith.negf %384 : vector<2x16xf32>
    %386 = math.exp %385 : vector<2x16xf32>
    %cst_99 = arith.constant 1.000000e+00 : f32
    %387 = vector.broadcast %cst_99 : f32 to vector<2x16xf32>
    %388 = arith.addf %387, %386 : vector<2x16xf32>
    %389 = arith.divf %387, %388 : vector<2x16xf32>
    %390 = arith.mulf %381, %334 : vector<2x16xf32>
    %391 = arith.mulf %375, %383 : vector<2x16xf32>
    %392 = arith.addf %390, %391 : vector<2x16xf32>
    %393 = math.tanh %392 : vector<2x16xf32>
    %394 = arith.mulf %389, %393 : vector<2x16xf32>
    %395 = vector.extract_strided_slice %369 {offsets = [0, 0], sizes = [2, 16], strides = [1, 1]} : vector<2x64xf32> to vector<2x16xf32>
    %396 = arith.negf %395 : vector<2x16xf32>
    %397 = math.exp %396 : vector<2x16xf32>
    %cst_100 = arith.constant 1.000000e+00 : f32
    %398 = vector.broadcast %cst_100 : f32 to vector<2x16xf32>
    %399 = arith.addf %398, %397 : vector<2x16xf32>
    %400 = arith.divf %398, %399 : vector<2x16xf32>
    %401 = vector.extract_strided_slice %369 {offsets = [0, 16], sizes = [2, 16], strides = [1, 1]} : vector<2x64xf32> to vector<2x16xf32>
    %402 = arith.negf %401 : vector<2x16xf32>
    %403 = math.exp %402 : vector<2x16xf32>
    %cst_101 = arith.constant 1.000000e+00 : f32
    %404 = vector.broadcast %cst_101 : f32 to vector<2x16xf32>
    %405 = arith.addf %404, %403 : vector<2x16xf32>
    %406 = arith.divf %404, %405 : vector<2x16xf32>
    %407 = vector.extract_strided_slice %369 {offsets = [0, 32], sizes = [2, 16], strides = [1, 1]} : vector<2x64xf32> to vector<2x16xf32>
    %408 = math.tanh %407 : vector<2x16xf32>
    %409 = vector.extract_strided_slice %369 {offsets = [0, 48], sizes = [2, 16], strides = [1, 1]} : vector<2x64xf32> to vector<2x16xf32>
    %410 = arith.negf %409 : vector<2x16xf32>
    %411 = math.exp %410 : vector<2x16xf32>
    %cst_102 = arith.constant 1.000000e+00 : f32
    %412 = vector.broadcast %cst_102 : f32 to vector<2x16xf32>
    %413 = arith.addf %412, %411 : vector<2x16xf32>
    %414 = arith.divf %412, %413 : vector<2x16xf32>
    %415 = arith.mulf %406, %359 : vector<2x16xf32>
    %416 = arith.mulf %400, %408 : vector<2x16xf32>
    %417 = arith.addf %415, %416 : vector<2x16xf32>
    %418 = math.tanh %417 : vector<2x16xf32>
    %419 = arith.mulf %414, %418 : vector<2x16xf32>
    %c10_103 = arith.constant 10 : index
    %c0_104 = arith.constant 0 : index
    %420 = vector.load %arg21[%c10_103, %c0_104] : memref<16x32xf32, #tpu.memory_space<vmem>>, vector<2x16xf32>
    tpu.vector_store %arg21[%c10_103, %c0_104], %394 {strides = array<i32>} : memref<16x32xf32, #tpu.memory_space<vmem>>, vector<2x16xf32>,
    %c4_105 = arith.constant 4 : index
    %c16_106 = arith.constant 16 : index
    %421 = vector.load %arg21[%c4_105, %c16_106] : memref<16x32xf32, #tpu.memory_space<vmem>>, vector<2x16xf32>
    tpu.vector_store %arg21[%c4_105, %c16_106], %419 {strides = array<i32>} : memref<16x32xf32, #tpu.memory_space<vmem>>, vector<2x16xf32>,
    %422 = vector.extract_strided_slice %67 {offsets = [12, 0], sizes = [2, 64], strides = [1, 1]} : vector<16x128xf32> to vector<2x64xf32>
    %cst_107 = arith.constant dense<0.000000e+00> : vector<2x64xf32>
    %423 = tpu.matmul %394, %68, %cst_107 {dimension_numbers = #tpu.dot_dimension_numbers<[1], [0], [0], [1], [0, 0, 1, 1], [], []>} : vector<2x16xf32>, vector<16x64xf32>, vector<2x64xf32> -> vector<2x64xf32>
    %424 = arith.addf %422, %423 : vector<2x64xf32>
    %425 = vector.extract_strided_slice %67 {offsets = [2, 64], sizes = [2, 64], strides = [1, 1]} : vector<16x128xf32> to vector<2x64xf32>
    %cst_108 = arith.constant dense<0.000000e+00> : vector<2x64xf32>
    %426 = tpu.matmul %419, %69, %cst_108 {dimension_numbers = #tpu.dot_dimension_numbers<[1], [0], [0], [1], [0, 0, 1, 1], [], []>} : vector<2x16xf32>, vector<16x64xf32>, vector<2x64xf32> -> vector<2x64xf32>
    %427 = arith.addf %425, %426 : vector<2x64xf32>
    %428 = vector.extract_strided_slice %424 {offsets = [0, 0], sizes = [2, 16], strides = [1, 1]} : vector<2x64xf32> to vector<2x16xf32>
    %429 = arith.negf %428 : vector<2x16xf32>
    %430 = math.exp %429 : vector<2x16xf32>
    %cst_109 = arith.constant 1.000000e+00 : f32
    %431 = vector.broadcast %cst_109 : f32 to vector<2x16xf32>
    %432 = arith.addf %431, %430 : vector<2x16xf32>
    %433 = arith.divf %431, %432 : vector<2x16xf32>
    %434 = vector.extract_strided_slice %424 {offsets = [0, 16], sizes = [2, 16], strides = [1, 1]} : vector<2x64xf32> to vector<2x16xf32>
    %435 = arith.negf %434 : vector<2x16xf32>
    %436 = math.exp %435 : vector<2x16xf32>
    %cst_110 = arith.constant 1.000000e+00 : f32
    %437 = vector.broadcast %cst_110 : f32 to vector<2x16xf32>
    %438 = arith.addf %437, %436 : vector<2x16xf32>
    %439 = arith.divf %437, %438 : vector<2x16xf32>
    %440 = vector.extract_strided_slice %424 {offsets = [0, 32], sizes = [2, 16], strides = [1, 1]} : vector<2x64xf32> to vector<2x16xf32>
    %441 = math.tanh %440 : vector<2x16xf32>
    %442 = vector.extract_strided_slice %424 {offsets = [0, 48], sizes = [2, 16], strides = [1, 1]} : vector<2x64xf32> to vector<2x16xf32>
    %443 = arith.negf %442 : vector<2x16xf32>
    %444 = math.exp %443 : vector<2x16xf32>
    %cst_111 = arith.constant 1.000000e+00 : f32
    %445 = vector.broadcast %cst_111 : f32 to vector<2x16xf32>
    %446 = arith.addf %445, %444 : vector<2x16xf32>
    %447 = arith.divf %445, %446 : vector<2x16xf32>
    %448 = arith.mulf %439, %392 : vector<2x16xf32>
    %449 = arith.mulf %433, %441 : vector<2x16xf32>
    %450 = arith.addf %448, %449 : vector<2x16xf32>
    %451 = math.tanh %450 : vector<2x16xf32>
    %452 = arith.mulf %447, %451 : vector<2x16xf32>
    %453 = vector.extract_strided_slice %427 {offsets = [0, 0], sizes = [2, 16], strides = [1, 1]} : vector<2x64xf32> to vector<2x16xf32>
    %454 = arith.negf %453 : vector<2x16xf32>
    %455 = math.exp %454 : vector<2x16xf32>
    %cst_112 = arith.constant 1.000000e+00 : f32
    %456 = vector.broadcast %cst_112 : f32 to vector<2x16xf32>
    %457 = arith.addf %456, %455 : vector<2x16xf32>
    %458 = arith.divf %456, %457 : vector<2x16xf32>
    %459 = vector.extract_strided_slice %427 {offsets = [0, 16], sizes = [2, 16], strides = [1, 1]} : vector<2x64xf32> to vector<2x16xf32>
    %460 = arith.negf %459 : vector<2x16xf32>
    %461 = math.exp %460 : vector<2x16xf32>
    %cst_113 = arith.constant 1.000000e+00 : f32
    %462 = vector.broadcast %cst_113 : f32 to vector<2x16xf32>
    %463 = arith.addf %462, %461 : vector<2x16xf32>
    %464 = arith.divf %462, %463 : vector<2x16xf32>
    %465 = vector.extract_strided_slice %427 {offsets = [0, 32], sizes = [2, 16], strides = [1, 1]} : vector<2x64xf32> to vector<2x16xf32>
    %466 = math.tanh %465 : vector<2x16xf32>
    %467 = vector.extract_strided_slice %427 {offsets = [0, 48], sizes = [2, 16], strides = [1, 1]} : vector<2x64xf32> to vector<2x16xf32>
    %468 = arith.negf %467 : vector<2x16xf32>
    %469 = math.exp %468 : vector<2x16xf32>
    %cst_114 = arith.constant 1.000000e+00 : f32
    %470 = vector.broadcast %cst_114 : f32 to vector<2x16xf32>
    %471 = arith.addf %470, %469 : vector<2x16xf32>
    %472 = arith.divf %470, %471 : vector<2x16xf32>
    %473 = arith.mulf %464, %417 : vector<2x16xf32>
    %474 = arith.mulf %458, %466 : vector<2x16xf32>
    %475 = arith.addf %473, %474 : vector<2x16xf32>
    %476 = math.tanh %475 : vector<2x16xf32>
    %477 = arith.mulf %472, %476 : vector<2x16xf32>
    %c12_115 = arith.constant 12 : index
    %c0_116 = arith.constant 0 : index
    %478 = vector.load %arg21[%c12_115, %c0_116] : memref<16x32xf32, #tpu.memory_space<vmem>>, vector<2x16xf32>
    tpu.vector_store %arg21[%c12_115, %c0_116], %452 {strides = array<i32>} : memref<16x32xf32, #tpu.memory_space<vmem>>, vector<2x16xf32>,
    %c2_117 = arith.constant 2 : index
    %c16_118 = arith.constant 16 : index
    %479 = vector.load %arg21[%c2_117, %c16_118] : memref<16x32xf32, #tpu.memory_space<vmem>>, vector<2x16xf32>
    tpu.vector_store %arg21[%c2_117, %c16_118], %477 {strides = array<i32>} : memref<16x32xf32, #tpu.memory_space<vmem>>, vector<2x16xf32>,
    %480 = vector.extract_strided_slice %67 {offsets = [14, 0], sizes = [2, 64], strides = [1, 1]} : vector<16x128xf32> to vector<2x64xf32>
    %cst_119 = arith.constant dense<0.000000e+00> : vector<2x64xf32>
    %481 = tpu.matmul %452, %68, %cst_119 {dimension_numbers = #tpu.dot_dimension_numbers<[1], [0], [0], [1], [0, 0, 1, 1], [], []>} : vector<2x16xf32>, vector<16x64xf32>, vector<2x64xf32> -> vector<2x64xf32>
    %482 = arith.addf %480, %481 : vector<2x64xf32>
    %483 = vector.extract_strided_slice %67 {offsets = [0, 64], sizes = [2, 64], strides = [1, 1]} : vector<16x128xf32> to vector<2x64xf32>
    %cst_120 = arith.constant dense<0.000000e+00> : vector<2x64xf32>
    %484 = tpu.matmul %477, %69, %cst_120 {dimension_numbers = #tpu.dot_dimension_numbers<[1], [0], [0], [1], [0, 0, 1, 1], [], []>} : vector<2x16xf32>, vector<16x64xf32>, vector<2x64xf32> -> vector<2x64xf32>
    %485 = arith.addf %483, %484 : vector<2x64xf32>
    %486 = vector.extract_strided_slice %482 {offsets = [0, 0], sizes = [2, 16], strides = [1, 1]} : vector<2x64xf32> to vector<2x16xf32>
    %487 = arith.negf %486 : vector<2x16xf32>
    %488 = math.exp %487 : vector<2x16xf32>
    %cst_121 = arith.constant 1.000000e+00 : f32
    %489 = vector.broadcast %cst_121 : f32 to vector<2x16xf32>
    %490 = arith.addf %489, %488 : vector<2x16xf32>
    %491 = arith.divf %489, %490 : vector<2x16xf32>
    %492 = vector.extract_strided_slice %482 {offsets = [0, 16], sizes = [2, 16], strides = [1, 1]} : vector<2x64xf32> to vector<2x16xf32>
    %493 = arith.negf %492 : vector<2x16xf32>
    %494 = math.exp %493 : vector<2x16xf32>
    %cst_122 = arith.constant 1.000000e+00 : f32
    %495 = vector.broadcast %cst_122 : f32 to vector<2x16xf32>
    %496 = arith.addf %495, %494 : vector<2x16xf32>
    %497 = arith.divf %495, %496 : vector<2x16xf32>
    %498 = vector.extract_strided_slice %482 {offsets = [0, 32], sizes = [2, 16], strides = [1, 1]} : vector<2x64xf32> to vector<2x16xf32>
    %499 = math.tanh %498 : vector<2x16xf32>
    %500 = vector.extract_strided_slice %482 {offsets = [0, 48], sizes = [2, 16], strides = [1, 1]} : vector<2x64xf32> to vector<2x16xf32>
    %501 = arith.negf %500 : vector<2x16xf32>
    %502 = math.exp %501 : vector<2x16xf32>
    %cst_123 = arith.constant 1.000000e+00 : f32
    %503 = vector.broadcast %cst_123 : f32 to vector<2x16xf32>
    %504 = arith.addf %503, %502 : vector<2x16xf32>
    %505 = arith.divf %503, %504 : vector<2x16xf32>
    %506 = arith.mulf %497, %450 : vector<2x16xf32>
    %507 = arith.mulf %491, %499 : vector<2x16xf32>
    %508 = arith.addf %506, %507 : vector<2x16xf32>
    %509 = math.tanh %508 : vector<2x16xf32>
    %510 = arith.mulf %505, %509 : vector<2x16xf32>
    %511 = vector.extract_strided_slice %485 {offsets = [0, 0], sizes = [2, 16], strides = [1, 1]} : vector<2x64xf32> to vector<2x16xf32>
    %512 = arith.negf %511 : vector<2x16xf32>
    %513 = math.exp %512 : vector<2x16xf32>
    %cst_124 = arith.constant 1.000000e+00 : f32
    %514 = vector.broadcast %cst_124 : f32 to vector<2x16xf32>
    %515 = arith.addf %514, %513 : vector<2x16xf32>
    %516 = arith.divf %514, %515 : vector<2x16xf32>
    %517 = vector.extract_strided_slice %485 {offsets = [0, 16], sizes = [2, 16], strides = [1, 1]} : vector<2x64xf32> to vector<2x16xf32>
    %518 = arith.negf %517 : vector<2x16xf32>
    %519 = math.exp %518 : vector<2x16xf32>
    %cst_125 = arith.constant 1.000000e+00 : f32
    %520 = vector.broadcast %cst_125 : f32 to vector<2x16xf32>
    %521 = arith.addf %520, %519 : vector<2x16xf32>
    %522 = arith.divf %520, %521 : vector<2x16xf32>
    %523 = vector.extract_strided_slice %485 {offsets = [0, 32], sizes = [2, 16], strides = [1, 1]} : vector<2x64xf32> to vector<2x16xf32>
    %524 = math.tanh %523 : vector<2x16xf32>
    %525 = vector.extract_strided_slice %485 {offsets = [0, 48], sizes = [2, 16], strides = [1, 1]} : vector<2x64xf32> to vector<2x16xf32>
    %526 = arith.negf %525 : vector<2x16xf32>
    %527 = math.exp %526 : vector<2x16xf32>
    %cst_126 = arith.constant 1.000000e+00 : f32
    %528 = vector.broadcast %cst_126 : f32 to vector<2x16xf32>
    %529 = arith.addf %528, %527 : vector<2x16xf32>
    %530 = arith.divf %528, %529 : vector<2x16xf32>
    %531 = arith.mulf %522, %475 : vector<2x16xf32>
    %532 = arith.mulf %516, %524 : vector<2x16xf32>
    %533 = arith.addf %531, %532 : vector<2x16xf32>
    %534 = math.tanh %533 : vector<2x16xf32>
    %535 = arith.mulf %530, %534 : vector<2x16xf32>
    %c14_127 = arith.constant 14 : index
    %c0_128 = arith.constant 0 : index
    %536 = vector.load %arg21[%c14_127, %c0_128] : memref<16x32xf32, #tpu.memory_space<vmem>>, vector<2x16xf32>
    tpu.vector_store %arg21[%c14_127, %c0_128], %510 {strides = array<i32>} : memref<16x32xf32, #tpu.memory_space<vmem>>, vector<2x16xf32>,
    %c0_129 = arith.constant 0 : index
    %c16_130 = arith.constant 16 : index
    %537 = vector.load %arg21[%c0_129, %c16_130] : memref<16x32xf32, #tpu.memory_space<vmem>>, vector<2x16xf32>
    tpu.vector_store %arg21[%c0_129, %c16_130], %535 {strides = array<i32>} : memref<16x32xf32, #tpu.memory_space<vmem>>, vector<2x16xf32>,
    %c0_131 = arith.constant 0 : index
    %c0_132 = arith.constant 0 : index
    %538 = vector.load %arg21[%c0_131, %c0_132] : memref<16x32xf32, #tpu.memory_space<vmem>>, vector<16x32xf32>
    %c0_133 = arith.constant 0 : index
    %c0_134 = arith.constant 0 : index
    %539 = vector.load %arg13[%c0_133, %c0_134] : memref<32x128xf32, #tpu.memory_space<vmem>>, vector<32x128xf32>
    %cst_135 = arith.constant dense<0.000000e+00> : vector<16x128xf32>
    %540 = tpu.matmul %538, %539, %cst_135 {dimension_numbers = #tpu.dot_dimension_numbers<[1], [0], [0], [1], [0, 0, 1, 1], [], []>} : vector<16x32xf32>, vector<32x128xf32>, vector<16x128xf32> -> vector<16x128xf32>
    %c0_136 = arith.constant 0 : index
    %c0_137 = arith.constant 0 : index
    %541 = vector.load %arg15[%c0_136, %c0_137] : memref<1x128xf32, #tpu.memory_space<vmem>>, vector<1x128xf32>
    %542 = vector.broadcast %541 : vector<1x128xf32> to vector<16x128xf32>
    %543 = arith.addf %540, %542 : vector<16x128xf32>
    %c0_138 = arith.constant 0 : index
    %c0_139 = arith.constant 0 : index
    %544 = vector.load %arg14[%c0_138, %c0_139] : memref<16x64xf32, #tpu.memory_space<vmem>>, vector<16x64xf32>
    %cst_140 = arith.constant 0.000000e+00 : f32
    %545 = vector.broadcast %cst_140 : f32 to vector<2x16xf32>
    %cst_141 = arith.constant 0.000000e+00 : f32
    %546 = vector.broadcast %cst_141 : f32 to vector<2x16xf32>
    %547 = vector.extract_strided_slice %543 {offsets = [0, 0], sizes = [2, 64], strides = [1, 1]} : vector<16x128xf32> to vector<2x64xf32>
    %cst_142 = arith.constant dense<0.000000e+00> : vector<2x64xf32>
    %548 = tpu.matmul %545, %544, %cst_142 {dimension_numbers = #tpu.dot_dimension_numbers<[1], [0], [0], [1], [0, 0, 1, 1], [], []>} : vector<2x16xf32>, vector<16x64xf32>, vector<2x64xf32> -> vector<2x64xf32>
    %549 = arith.addf %547, %548 : vector<2x64xf32>
    %550 = vector.extract_strided_slice %549 {offsets = [0, 0], sizes = [2, 16], strides = [1, 1]} : vector<2x64xf32> to vector<2x16xf32>
    %551 = arith.negf %550 : vector<2x16xf32>
    %552 = math.exp %551 : vector<2x16xf32>
    %cst_143 = arith.constant 1.000000e+00 : f32
    %553 = vector.broadcast %cst_143 : f32 to vector<2x16xf32>
    %554 = arith.addf %553, %552 : vector<2x16xf32>
    %555 = arith.divf %553, %554 : vector<2x16xf32>
    %556 = vector.extract_strided_slice %549 {offsets = [0, 16], sizes = [2, 16], strides = [1, 1]} : vector<2x64xf32> to vector<2x16xf32>
    %557 = arith.negf %556 : vector<2x16xf32>
    %558 = math.exp %557 : vector<2x16xf32>
    %cst_144 = arith.constant 1.000000e+00 : f32
    %559 = vector.broadcast %cst_144 : f32 to vector<2x16xf32>
    %560 = arith.addf %559, %558 : vector<2x16xf32>
    %561 = arith.divf %559, %560 : vector<2x16xf32>
    %562 = vector.extract_strided_slice %549 {offsets = [0, 32], sizes = [2, 16], strides = [1, 1]} : vector<2x64xf32> to vector<2x16xf32>
    %563 = math.tanh %562 : vector<2x16xf32>
    %564 = vector.extract_strided_slice %549 {offsets = [0, 48], sizes = [2, 16], strides = [1, 1]} : vector<2x64xf32> to vector<2x16xf32>
    %565 = arith.negf %564 : vector<2x16xf32>
    %566 = math.exp %565 : vector<2x16xf32>
    %cst_145 = arith.constant 1.000000e+00 : f32
    %567 = vector.broadcast %cst_145 : f32 to vector<2x16xf32>
    %568 = arith.addf %567, %566 : vector<2x16xf32>
    %569 = arith.divf %567, %568 : vector<2x16xf32>
    %570 = arith.mulf %561, %546 : vector<2x16xf32>
    %571 = arith.mulf %555, %563 : vector<2x16xf32>
    %572 = arith.addf %570, %571 : vector<2x16xf32>
    %573 = math.tanh %572 : vector<2x16xf32>
    %574 = arith.mulf %569, %573 : vector<2x16xf32>
    %575 = vector.extract_strided_slice %543 {offsets = [2, 0], sizes = [2, 64], strides = [1, 1]} : vector<16x128xf32> to vector<2x64xf32>
    %cst_146 = arith.constant dense<0.000000e+00> : vector<2x64xf32>
    %576 = tpu.matmul %574, %544, %cst_146 {dimension_numbers = #tpu.dot_dimension_numbers<[1], [0], [0], [1], [0, 0, 1, 1], [], []>} : vector<2x16xf32>, vector<16x64xf32>, vector<2x64xf32> -> vector<2x64xf32>
    %577 = arith.addf %575, %576 : vector<2x64xf32>
    %578 = vector.extract_strided_slice %577 {offsets = [0, 0], sizes = [2, 16], strides = [1, 1]} : vector<2x64xf32> to vector<2x16xf32>
    %579 = arith.negf %578 : vector<2x16xf32>
    %580 = math.exp %579 : vector<2x16xf32>
    %cst_147 = arith.constant 1.000000e+00 : f32
    %581 = vector.broadcast %cst_147 : f32 to vector<2x16xf32>
    %582 = arith.addf %581, %580 : vector<2x16xf32>
    %583 = arith.divf %581, %582 : vector<2x16xf32>
    %584 = vector.extract_strided_slice %577 {offsets = [0, 16], sizes = [2, 16], strides = [1, 1]} : vector<2x64xf32> to vector<2x16xf32>
    %585 = arith.negf %584 : vector<2x16xf32>
    %586 = math.exp %585 : vector<2x16xf32>
    %cst_148 = arith.constant 1.000000e+00 : f32
    %587 = vector.broadcast %cst_148 : f32 to vector<2x16xf32>
    %588 = arith.addf %587, %586 : vector<2x16xf32>
    %589 = arith.divf %587, %588 : vector<2x16xf32>
    %590 = vector.extract_strided_slice %577 {offsets = [0, 32], sizes = [2, 16], strides = [1, 1]} : vector<2x64xf32> to vector<2x16xf32>
    %591 = math.tanh %590 : vector<2x16xf32>
    %592 = vector.extract_strided_slice %577 {offsets = [0, 48], sizes = [2, 16], strides = [1, 1]} : vector<2x64xf32> to vector<2x16xf32>
    %593 = arith.negf %592 : vector<2x16xf32>
    %594 = math.exp %593 : vector<2x16xf32>
    %cst_149 = arith.constant 1.000000e+00 : f32
    %595 = vector.broadcast %cst_149 : f32 to vector<2x16xf32>
    %596 = arith.addf %595, %594 : vector<2x16xf32>
    %597 = arith.divf %595, %596 : vector<2x16xf32>
    %598 = arith.mulf %589, %572 : vector<2x16xf32>
    %599 = arith.mulf %583, %591 : vector<2x16xf32>
    %600 = arith.addf %598, %599 : vector<2x16xf32>
    %601 = math.tanh %600 : vector<2x16xf32>
    %602 = arith.mulf %597, %601 : vector<2x16xf32>
    %603 = vector.extract_strided_slice %543 {offsets = [4, 0], sizes = [2, 64], strides = [1, 1]} : vector<16x128xf32> to vector<2x64xf32>
    %cst_150 = arith.constant dense<0.000000e+00> : vector<2x64xf32>
    %604 = tpu.matmul %602, %544, %cst_150 {dimension_numbers = #tpu.dot_dimension_numbers<[1], [0], [0], [1], [0, 0, 1, 1], [], []>} : vector<2x16xf32>, vector<16x64xf32>, vector<2x64xf32> -> vector<2x64xf32>
    %605 = arith.addf %603, %604 : vector<2x64xf32>
    %606 = vector.extract_strided_slice %605 {offsets = [0, 0], sizes = [2, 16], strides = [1, 1]} : vector<2x64xf32> to vector<2x16xf32>
    %607 = arith.negf %606 : vector<2x16xf32>
    %608 = math.exp %607 : vector<2x16xf32>
    %cst_151 = arith.constant 1.000000e+00 : f32
    %609 = vector.broadcast %cst_151 : f32 to vector<2x16xf32>
    %610 = arith.addf %609, %608 : vector<2x16xf32>
    %611 = arith.divf %609, %610 : vector<2x16xf32>
    %612 = vector.extract_strided_slice %605 {offsets = [0, 16], sizes = [2, 16], strides = [1, 1]} : vector<2x64xf32> to vector<2x16xf32>
    %613 = arith.negf %612 : vector<2x16xf32>
    %614 = math.exp %613 : vector<2x16xf32>
    %cst_152 = arith.constant 1.000000e+00 : f32
    %615 = vector.broadcast %cst_152 : f32 to vector<2x16xf32>
    %616 = arith.addf %615, %614 : vector<2x16xf32>
    %617 = arith.divf %615, %616 : vector<2x16xf32>
    %618 = vector.extract_strided_slice %605 {offsets = [0, 32], sizes = [2, 16], strides = [1, 1]} : vector<2x64xf32> to vector<2x16xf32>
    %619 = math.tanh %618 : vector<2x16xf32>
    %620 = vector.extract_strided_slice %605 {offsets = [0, 48], sizes = [2, 16], strides = [1, 1]} : vector<2x64xf32> to vector<2x16xf32>
    %621 = arith.negf %620 : vector<2x16xf32>
    %622 = math.exp %621 : vector<2x16xf32>
    %cst_153 = arith.constant 1.000000e+00 : f32
    %623 = vector.broadcast %cst_153 : f32 to vector<2x16xf32>
    %624 = arith.addf %623, %622 : vector<2x16xf32>
    %625 = arith.divf %623, %624 : vector<2x16xf32>
    %626 = arith.mulf %617, %600 : vector<2x16xf32>
    %627 = arith.mulf %611, %619 : vector<2x16xf32>
    %628 = arith.addf %626, %627 : vector<2x16xf32>
    %629 = math.tanh %628 : vector<2x16xf32>
    %630 = arith.mulf %625, %629 : vector<2x16xf32>
    %631 = vector.extract_strided_slice %543 {offsets = [6, 0], sizes = [2, 64], strides = [1, 1]} : vector<16x128xf32> to vector<2x64xf32>
    %cst_154 = arith.constant dense<0.000000e+00> : vector<2x64xf32>
    %632 = tpu.matmul %630, %544, %cst_154 {dimension_numbers = #tpu.dot_dimension_numbers<[1], [0], [0], [1], [0, 0, 1, 1], [], []>} : vector<2x16xf32>, vector<16x64xf32>, vector<2x64xf32> -> vector<2x64xf32>
    %633 = arith.addf %631, %632 : vector<2x64xf32>
    %634 = vector.extract_strided_slice %633 {offsets = [0, 0], sizes = [2, 16], strides = [1, 1]} : vector<2x64xf32> to vector<2x16xf32>
    %635 = arith.negf %634 : vector<2x16xf32>
    %636 = math.exp %635 : vector<2x16xf32>
    %cst_155 = arith.constant 1.000000e+00 : f32
    %637 = vector.broadcast %cst_155 : f32 to vector<2x16xf32>
    %638 = arith.addf %637, %636 : vector<2x16xf32>
    %639 = arith.divf %637, %638 : vector<2x16xf32>
    %640 = vector.extract_strided_slice %633 {offsets = [0, 16], sizes = [2, 16], strides = [1, 1]} : vector<2x64xf32> to vector<2x16xf32>
    %641 = arith.negf %640 : vector<2x16xf32>
    %642 = math.exp %641 : vector<2x16xf32>
    %cst_156 = arith.constant 1.000000e+00 : f32
    %643 = vector.broadcast %cst_156 : f32 to vector<2x16xf32>
    %644 = arith.addf %643, %642 : vector<2x16xf32>
    %645 = arith.divf %643, %644 : vector<2x16xf32>
    %646 = vector.extract_strided_slice %633 {offsets = [0, 32], sizes = [2, 16], strides = [1, 1]} : vector<2x64xf32> to vector<2x16xf32>
    %647 = math.tanh %646 : vector<2x16xf32>
    %648 = vector.extract_strided_slice %633 {offsets = [0, 48], sizes = [2, 16], strides = [1, 1]} : vector<2x64xf32> to vector<2x16xf32>
    %649 = arith.negf %648 : vector<2x16xf32>
    %650 = math.exp %649 : vector<2x16xf32>
    %cst_157 = arith.constant 1.000000e+00 : f32
    %651 = vector.broadcast %cst_157 : f32 to vector<2x16xf32>
    %652 = arith.addf %651, %650 : vector<2x16xf32>
    %653 = arith.divf %651, %652 : vector<2x16xf32>
    %654 = arith.mulf %645, %628 : vector<2x16xf32>
    %655 = arith.mulf %639, %647 : vector<2x16xf32>
    %656 = arith.addf %654, %655 : vector<2x16xf32>
    %657 = math.tanh %656 : vector<2x16xf32>
    %658 = arith.mulf %653, %657 : vector<2x16xf32>
    %659 = vector.extract_strided_slice %543 {offsets = [8, 0], sizes = [2, 64], strides = [1, 1]} : vector<16x128xf32> to vector<2x64xf32>
    %cst_158 = arith.constant dense<0.000000e+00> : vector<2x64xf32>
    %660 = tpu.matmul %658, %544, %cst_158 {dimension_numbers = #tpu.dot_dimension_numbers<[1], [0], [0], [1], [0, 0, 1, 1], [], []>} : vector<2x16xf32>, vector<16x64xf32>, vector<2x64xf32> -> vector<2x64xf32>
    %661 = arith.addf %659, %660 : vector<2x64xf32>
    %662 = vector.extract_strided_slice %661 {offsets = [0, 0], sizes = [2, 16], strides = [1, 1]} : vector<2x64xf32> to vector<2x16xf32>
    %663 = arith.negf %662 : vector<2x16xf32>
    %664 = math.exp %663 : vector<2x16xf32>
    %cst_159 = arith.constant 1.000000e+00 : f32
    %665 = vector.broadcast %cst_159 : f32 to vector<2x16xf32>
    %666 = arith.addf %665, %664 : vector<2x16xf32>
    %667 = arith.divf %665, %666 : vector<2x16xf32>
    %668 = vector.extract_strided_slice %661 {offsets = [0, 16], sizes = [2, 16], strides = [1, 1]} : vector<2x64xf32> to vector<2x16xf32>
    %669 = arith.negf %668 : vector<2x16xf32>
    %670 = math.exp %669 : vector<2x16xf32>
    %cst_160 = arith.constant 1.000000e+00 : f32
    %671 = vector.broadcast %cst_160 : f32 to vector<2x16xf32>
    %672 = arith.addf %671, %670 : vector<2x16xf32>
    %673 = arith.divf %671, %672 : vector<2x16xf32>
    %674 = vector.extract_strided_slice %661 {offsets = [0, 32], sizes = [2, 16], strides = [1, 1]} : vector<2x64xf32> to vector<2x16xf32>
    %675 = math.tanh %674 : vector<2x16xf32>
    %676 = vector.extract_strided_slice %661 {offsets = [0, 48], sizes = [2, 16], strides = [1, 1]} : vector<2x64xf32> to vector<2x16xf32>
    %677 = arith.negf %676 : vector<2x16xf32>
    %678 = math.exp %677 : vector<2x16xf32>
    %cst_161 = arith.constant 1.000000e+00 : f32
    %679 = vector.broadcast %cst_161 : f32 to vector<2x16xf32>
    %680 = arith.addf %679, %678 : vector<2x16xf32>
    %681 = arith.divf %679, %680 : vector<2x16xf32>
    %682 = arith.mulf %673, %656 : vector<2x16xf32>
    %683 = arith.mulf %667, %675 : vector<2x16xf32>
    %684 = arith.addf %682, %683 : vector<2x16xf32>
    %685 = math.tanh %684 : vector<2x16xf32>
    %686 = arith.mulf %681, %685 : vector<2x16xf32>
    %687 = vector.extract_strided_slice %543 {offsets = [10, 0], sizes = [2, 64], strides = [1, 1]} : vector<16x128xf32> to vector<2x64xf32>
    %cst_162 = arith.constant dense<0.000000e+00> : vector<2x64xf32>
    %688 = tpu.matmul %686, %544, %cst_162 {dimension_numbers = #tpu.dot_dimension_numbers<[1], [0], [0], [1], [0, 0, 1, 1], [], []>} : vector<2x16xf32>, vector<16x64xf32>, vector<2x64xf32> -> vector<2x64xf32>
    %689 = arith.addf %687, %688 : vector<2x64xf32>
    %690 = vector.extract_strided_slice %689 {offsets = [0, 0], sizes = [2, 16], strides = [1, 1]} : vector<2x64xf32> to vector<2x16xf32>
    %691 = arith.negf %690 : vector<2x16xf32>
    %692 = math.exp %691 : vector<2x16xf32>
    %cst_163 = arith.constant 1.000000e+00 : f32
    %693 = vector.broadcast %cst_163 : f32 to vector<2x16xf32>
    %694 = arith.addf %693, %692 : vector<2x16xf32>
    %695 = arith.divf %693, %694 : vector<2x16xf32>
    %696 = vector.extract_strided_slice %689 {offsets = [0, 16], sizes = [2, 16], strides = [1, 1]} : vector<2x64xf32> to vector<2x16xf32>
    %697 = arith.negf %696 : vector<2x16xf32>
    %698 = math.exp %697 : vector<2x16xf32>
    %cst_164 = arith.constant 1.000000e+00 : f32
    %699 = vector.broadcast %cst_164 : f32 to vector<2x16xf32>
    %700 = arith.addf %699, %698 : vector<2x16xf32>
    %701 = arith.divf %699, %700 : vector<2x16xf32>
    %702 = vector.extract_strided_slice %689 {offsets = [0, 32], sizes = [2, 16], strides = [1, 1]} : vector<2x64xf32> to vector<2x16xf32>
    %703 = math.tanh %702 : vector<2x16xf32>
    %704 = vector.extract_strided_slice %689 {offsets = [0, 48], sizes = [2, 16], strides = [1, 1]} : vector<2x64xf32> to vector<2x16xf32>
    %705 = arith.negf %704 : vector<2x16xf32>
    %706 = math.exp %705 : vector<2x16xf32>
    %cst_165 = arith.constant 1.000000e+00 : f32
    %707 = vector.broadcast %cst_165 : f32 to vector<2x16xf32>
    %708 = arith.addf %707, %706 : vector<2x16xf32>
    %709 = arith.divf %707, %708 : vector<2x16xf32>
    %710 = arith.mulf %701, %684 : vector<2x16xf32>
    %711 = arith.mulf %695, %703 : vector<2x16xf32>
    %712 = arith.addf %710, %711 : vector<2x16xf32>
    %713 = math.tanh %712 : vector<2x16xf32>
    %714 = arith.mulf %709, %713 : vector<2x16xf32>
    %715 = vector.extract_strided_slice %543 {offsets = [12, 0], sizes = [2, 64], strides = [1, 1]} : vector<16x128xf32> to vector<2x64xf32>
    %cst_166 = arith.constant dense<0.000000e+00> : vector<2x64xf32>
    %716 = tpu.matmul %714, %544, %cst_166 {dimension_numbers = #tpu.dot_dimension_numbers<[1], [0], [0], [1], [0, 0, 1, 1], [], []>} : vector<2x16xf32>, vector<16x64xf32>, vector<2x64xf32> -> vector<2x64xf32>
    %717 = arith.addf %715, %716 : vector<2x64xf32>
    %718 = vector.extract_strided_slice %717 {offsets = [0, 0], sizes = [2, 16], strides = [1, 1]} : vector<2x64xf32> to vector<2x16xf32>
    %719 = arith.negf %718 : vector<2x16xf32>
    %720 = math.exp %719 : vector<2x16xf32>
    %cst_167 = arith.constant 1.000000e+00 : f32
    %721 = vector.broadcast %cst_167 : f32 to vector<2x16xf32>
    %722 = arith.addf %721, %720 : vector<2x16xf32>
    %723 = arith.divf %721, %722 : vector<2x16xf32>
    %724 = vector.extract_strided_slice %717 {offsets = [0, 16], sizes = [2, 16], strides = [1, 1]} : vector<2x64xf32> to vector<2x16xf32>
    %725 = arith.negf %724 : vector<2x16xf32>
    %726 = math.exp %725 : vector<2x16xf32>
    %cst_168 = arith.constant 1.000000e+00 : f32
    %727 = vector.broadcast %cst_168 : f32 to vector<2x16xf32>
    %728 = arith.addf %727, %726 : vector<2x16xf32>
    %729 = arith.divf %727, %728 : vector<2x16xf32>
    %730 = vector.extract_strided_slice %717 {offsets = [0, 32], sizes = [2, 16], strides = [1, 1]} : vector<2x64xf32> to vector<2x16xf32>
    %731 = math.tanh %730 : vector<2x16xf32>
    %732 = vector.extract_strided_slice %717 {offsets = [0, 48], sizes = [2, 16], strides = [1, 1]} : vector<2x64xf32> to vector<2x16xf32>
    %733 = arith.negf %732 : vector<2x16xf32>
    %734 = math.exp %733 : vector<2x16xf32>
    %cst_169 = arith.constant 1.000000e+00 : f32
    %735 = vector.broadcast %cst_169 : f32 to vector<2x16xf32>
    %736 = arith.addf %735, %734 : vector<2x16xf32>
    %737 = arith.divf %735, %736 : vector<2x16xf32>
    %738 = arith.mulf %729, %712 : vector<2x16xf32>
    %739 = arith.mulf %723, %731 : vector<2x16xf32>
    %740 = arith.addf %738, %739 : vector<2x16xf32>
    %741 = math.tanh %740 : vector<2x16xf32>
    %742 = arith.mulf %737, %741 : vector<2x16xf32>
    %743 = vector.extract_strided_slice %543 {offsets = [14, 0], sizes = [2, 64], strides = [1, 1]} : vector<16x128xf32> to vector<2x64xf32>
    %cst_170 = arith.constant dense<0.000000e+00> : vector<2x64xf32>
    %744 = tpu.matmul %742, %544, %cst_170 {dimension_numbers = #tpu.dot_dimension_numbers<[1], [0], [0], [1], [0, 0, 1, 1], [], []>} : vector<2x16xf32>, vector<16x64xf32>, vector<2x64xf32> -> vector<2x64xf32>
    %745 = arith.addf %743, %744 : vector<2x64xf32>
    %746 = vector.extract_strided_slice %745 {offsets = [0, 0], sizes = [2, 16], strides = [1, 1]} : vector<2x64xf32> to vector<2x16xf32>
    %747 = arith.negf %746 : vector<2x16xf32>
    %748 = math.exp %747 : vector<2x16xf32>
    %cst_171 = arith.constant 1.000000e+00 : f32
    %749 = vector.broadcast %cst_171 : f32 to vector<2x16xf32>
    %750 = arith.addf %749, %748 : vector<2x16xf32>
    %751 = arith.divf %749, %750 : vector<2x16xf32>
    %752 = vector.extract_strided_slice %745 {offsets = [0, 16], sizes = [2, 16], strides = [1, 1]} : vector<2x64xf32> to vector<2x16xf32>
    %753 = arith.negf %752 : vector<2x16xf32>
    %754 = math.exp %753 : vector<2x16xf32>
    %cst_172 = arith.constant 1.000000e+00 : f32
    %755 = vector.broadcast %cst_172 : f32 to vector<2x16xf32>
    %756 = arith.addf %755, %754 : vector<2x16xf32>
    %757 = arith.divf %755, %756 : vector<2x16xf32>
    %758 = vector.extract_strided_slice %745 {offsets = [0, 32], sizes = [2, 16], strides = [1, 1]} : vector<2x64xf32> to vector<2x16xf32>
    %759 = math.tanh %758 : vector<2x16xf32>
    %760 = vector.extract_strided_slice %745 {offsets = [0, 48], sizes = [2, 16], strides = [1, 1]} : vector<2x64xf32> to vector<2x16xf32>
    %761 = arith.negf %760 : vector<2x16xf32>
    %762 = math.exp %761 : vector<2x16xf32>
    %cst_173 = arith.constant 1.000000e+00 : f32
    %763 = vector.broadcast %cst_173 : f32 to vector<2x16xf32>
    %764 = arith.addf %763, %762 : vector<2x16xf32>
    %765 = arith.divf %763, %764 : vector<2x16xf32>
    %766 = arith.mulf %757, %740 : vector<2x16xf32>
    %767 = arith.mulf %751, %759 : vector<2x16xf32>
    %768 = arith.addf %766, %767 : vector<2x16xf32>
    %769 = math.tanh %768 : vector<2x16xf32>
    %770 = arith.mulf %765, %769 : vector<2x16xf32>
    %771 = vector.extract_strided_slice %543 {offsets = [14, 64], sizes = [2, 64], strides = [1, 1]} : vector<16x128xf32> to vector<2x64xf32>
    %cst_174 = arith.constant 0.000000e+00 : f32
    %772 = vector.broadcast %cst_174 : f32 to vector<2x16xf32>
    %773 = vector.extract_strided_slice %771 {offsets = [0, 0], sizes = [2, 16], strides = [1, 1]} : vector<2x64xf32> to vector<2x16xf32>
    %774 = arith.negf %773 : vector<2x16xf32>
    %775 = math.exp %774 : vector<2x16xf32>
    %cst_175 = arith.constant 1.000000e+00 : f32
    %776 = vector.broadcast %cst_175 : f32 to vector<2x16xf32>
    %777 = arith.addf %776, %775 : vector<2x16xf32>
    %778 = arith.divf %776, %777 : vector<2x16xf32>
    %779 = vector.extract_strided_slice %771 {offsets = [0, 16], sizes = [2, 16], strides = [1, 1]} : vector<2x64xf32> to vector<2x16xf32>
    %780 = arith.negf %779 : vector<2x16xf32>
    %781 = math.exp %780 : vector<2x16xf32>
    %cst_176 = arith.constant 1.000000e+00 : f32
    %782 = vector.broadcast %cst_176 : f32 to vector<2x16xf32>
    %783 = arith.addf %782, %781 : vector<2x16xf32>
    %784 = arith.divf %782, %783 : vector<2x16xf32>
    %785 = vector.extract_strided_slice %771 {offsets = [0, 32], sizes = [2, 16], strides = [1, 1]} : vector<2x64xf32> to vector<2x16xf32>
    %786 = math.tanh %785 : vector<2x16xf32>
    %787 = vector.extract_strided_slice %771 {offsets = [0, 48], sizes = [2, 16], strides = [1, 1]} : vector<2x64xf32> to vector<2x16xf32>
    %788 = arith.negf %787 : vector<2x16xf32>
    %789 = math.exp %788 : vector<2x16xf32>
    %cst_177 = arith.constant 1.000000e+00 : f32
    %790 = vector.broadcast %cst_177 : f32 to vector<2x16xf32>
    %791 = arith.addf %790, %789 : vector<2x16xf32>
    %792 = arith.divf %790, %791 : vector<2x16xf32>
    %793 = arith.mulf %784, %772 : vector<2x16xf32>
    %794 = arith.mulf %778, %786 : vector<2x16xf32>
    %795 = arith.addf %793, %794 : vector<2x16xf32>
    %796 = math.tanh %795 : vector<2x16xf32>
    %797 = arith.mulf %792, %796 : vector<2x16xf32>
    %c0_178 = arith.constant 0 : index
    %c0_179 = arith.constant 0 : index
    %798 = vector.load %arg16[%c0_178, %c0_179] : memref<16x16xf32, #tpu.memory_space<vmem>>, vector<16x16xf32>
    %cst_180 = arith.constant dense<0.000000e+00> : vector<2x16xf32>
    %799 = tpu.matmul %770, %798, %cst_180 {dimension_numbers = #tpu.dot_dimension_numbers<[1], [0], [0], [1], [0, 0, 1, 1], [], []>} : vector<2x16xf32>, vector<16x16xf32>, vector<2x16xf32> -> vector<2x16xf32>
    %c0_181 = arith.constant 0 : index
    %c0_182 = arith.constant 0 : index
    %800 = vector.load %arg17[%c0_181, %c0_182] : memref<16x16xf32, #tpu.memory_space<vmem>>, vector<16x16xf32>
    %cst_183 = arith.constant dense<0.000000e+00> : vector<2x16xf32>
    %801 = tpu.matmul %797, %800, %cst_183 {dimension_numbers = #tpu.dot_dimension_numbers<[1], [0], [0], [1], [0, 0, 1, 1], [], []>} : vector<2x16xf32>, vector<16x16xf32>, vector<2x16xf32> -> vector<2x16xf32>
    %802 = arith.addf %799, %801 : vector<2x16xf32>
    %c0_184 = arith.constant 0 : index
    %c0_185 = arith.constant 0 : index
    %803 = vector.load %arg18[%c0_184, %c0_185] : memref<1x16xf32, #tpu.memory_space<vmem>>, vector<1x16xf32>
    %804 = vector.broadcast %803 : vector<1x16xf32> to vector<2x16xf32>
    %805 = arith.addf %802, %804 : vector<2x16xf32>
    %806 = vector.extract_strided_slice %805 {offsets = [0, 0], sizes = [2, 8], strides = [1, 1]} : vector<2x16xf32> to vector<2x8xf32>
    %c0_186 = arith.constant 0 : index
    %c0_187 = arith.constant 0 : index
    %807 = vector.load %arg19[%c0_186, %c0_187] : memref<2x8xf32, #tpu.memory_space<vmem>>, vector<2x8xf32>
    tpu.vector_store %arg19[%c0_186, %c0_187], %806 {strides = array<i32>} : memref<2x8xf32, #tpu.memory_space<vmem>>, vector<2x8xf32>,
    %808 = vector.extract_strided_slice %805 {offsets = [0, 8], sizes = [2, 8], strides = [1, 1]} : vector<2x16xf32> to vector<2x8xf32>
    %c0_188 = arith.constant 0 : index
    %c0_189 = arith.constant 0 : index
    %809 = vector.load %arg20[%c0_188, %c0_189] : memref<2x8xf32, #tpu.memory_space<vmem>>, vector<2x8xf32>
    tpu.vector_store %arg20[%c0_188, %c0_189], %808 {strides = array<i32>} : memref<2x8xf32, #tpu.memory_space<vmem>>, vector<2x8xf32>,
    return
  }
}

</mosaic_0001>

<llo_original>
// kernel: ts_encoder_forward.1
$region0: #{ts_encoder_forward.1}
  #allocation0 [shape = 'u32[]', space=smem, size = 0x4, offset = 0x4, fixed_abs, tag = 'smem constant byte address 0x4 - core index']
  #allocation1 [shape = 'u32[72,128]{1,0:T(1,128)}', space=vmem, size = 0x9000, scoped, tag = 'internal scratch']
  #allocation2 [shape = 'f32[16,32]{1,0:T(8,128)}', space=vmem, size = 0x2000, scoped, tag = 'scratch operand']
  %s0 = inlined_call_operand.vmem [shape: f32[16,8], index: 0, kind: input, shape index: {}]
  %s1 = inlined_call_operand.hbm [shape: f32[8,32], index: 1, kind: input, shape index: {}]
  %s2 = inlined_call_operand.vmem [shape: f32[1,32], index: 2, kind: input, shape index: {}]
  %s3 = inlined_call_operand.vmem [shape: f32[1,32], index: 3, kind: input, shape index: {}]
  %s4 = inlined_call_operand.vmem [shape: f32[1,32], index: 4, kind: input, shape index: {}]
  %s5 = inlined_call_operand.vmem [shape: f32[32,32], index: 5, kind: input, shape index: {}]
  %s6 = inlined_call_operand.hbm [shape: f32[1,32], index: 6, kind: input, shape index: {}]
  %s7 = inlined_call_operand.hbm [shape: f32[1,32], index: 7, kind: input, shape index: {}]
  %s8 = inlined_call_operand.hbm [shape: f32[1,32], index: 8, kind: input, shape index: {}]
  %s9 = inlined_call_operand.hbm [shape: f32[32,128], index: 9, kind: input, shape index: {}]
  %s10 = inlined_call_operand.hbm [shape: f32[16,64], index: 10, kind: input, shape index: {}]
  %s11 = inlined_call_operand.hbm [shape: f32[16,64], index: 11, kind: input, shape index: {}]
  %s12 = inlined_call_operand.hbm [shape: f32[1,128], index: 12, kind: input, shape index: {}]
  %s13 = inlined_call_operand.hbm [shape: f32[32,128], index: 13, kind: input, shape index: {}]
  %s14 = inlined_call_operand.hbm [shape: f32[16,64], index: 14, kind: input, shape index: {}]
  %s15 = inlined_call_operand.hbm [shape: f32[1,128], index: 15, kind: input, shape index: {}]
  %s16 = inlined_call_operand.hbm [shape: f32[16,16], index: 16, kind: input, shape index: {}]
  %s17 = inlined_call_operand.hbm [shape: f32[16,16], index: 17, kind: input, shape index: {}]
  %s18 = inlined_call_operand.hbm [shape: f32[1,16], index: 18, kind: input, shape index: {}]
  %s19 = inlined_call_operand.hbm [shape: f32[2,8], index: 19, kind: output, shape index: {0}]
  %s20 = inlined_call_operand.hbm [shape: f32[2,8], index: 20, kind: output, shape index: {1}]
  %21 = xla_tuple %s19, %s20
  %s22 = sld [smem:[#allocation0]]
  $region150: #{ts_encoder_forward.1} parent=0
    _
  %s24 = ssub.s32 1, %s22
  %s25 = scalar_select 0, %s24, %s22
  $region1: #{ts_encoder_forward.1} parent=0
    #allocation3 [shape = 'u8[4096]{0}', space=vmem, size = 0x1000, scoped, tag = 'input window, operand 1, single buffered']
    #allocation4 [shape = 's32[1]{0}', space=sflag, size = 0x4, scoped, tag = 'scoped memory for ts_encoder_forward.1']
    #allocation5 [shape = 's32[1]{0}', space=sflag, size = 0x4, scoped, tag = 'scoped memory for ts_encoder_forward.1']
    #allocation6 [shape = 'u8[512]{0}', space=vmem, size = 0x400, scoped, tag = 'input window, operand 6, single buffered']
    #allocation7 [shape = 's32[1]{0}', space=sflag, size = 0x4, scoped, tag = 'scoped memory for ts_encoder_forward.1']
    #allocation8 [shape = 'u8[512]{0}', space=vmem, size = 0x400, scoped, tag = 'input window, operand 7, single buffered']
    #allocation9 [shape = 'u8[512]{0}', space=vmem, size = 0x400, scoped, tag = 'input window, operand 8, single buffered']
    #allocation10 [shape = 's32[1]{0}', space=sflag, size = 0x4, scoped, tag = 'scoped memory for ts_encoder_forward.1']
    #allocation11 [shape = 'u8[16384]{0}', space=vmem, size = 0x4000, scoped, tag = 'input window, operand 9, single buffered']
    #allocation12 [shape = 'u8[8192]{0}', space=vmem, size = 0x2000, scoped, tag = 'input window, operand 10, single buffered']
    #allocation13 [shape = 's32[1]{0}', space=sflag, size = 0x4, scoped, tag = 'scoped memory for ts_encoder_forward.1']
    #allocation14 [shape = 'u8[8192]{0}', space=vmem, size = 0x2000, scoped, tag = 'input window, operand 11, single buffered']
    #allocation15 [shape = 'u8[512]{0}', space=vmem, size = 0x400, scoped, tag = 'input window, operand 12, single buffered']
    #allocation16 [shape = 's32[1]{0}', space=sflag, size = 0x4, scoped, tag = 'scoped memory for ts_encoder_forward.1']
    #allocation17 [shape = 'u8[16384]{0}', space=vmem, size = 0x4000, scoped, tag = 'input window, operand 13, single buffered']
    #allocation18 [shape = 'u8[8192]{0}', space=vmem, size = 0x2000, scoped, tag = 'input window, operand 14, single buffered']
    #allocation19 [shape = 's32[1]{0}', space=sflag, size = 0x4, scoped, tag = 'scoped memory for ts_encoder_forward.1']
    #allocation20 [shape = 'u8[512]{0}', space=vmem, size = 0x400, scoped, tag = 'input window, operand 15, single buffered']
    #allocation21 [shape = 'u8[8192]{0}', space=vmem, size = 0x2000, scoped, tag = 'input window, operand 16, single buffered']
    #allocation22 [shape = 's32[1]{0}', space=sflag, size = 0x4, scoped, tag = 'scoped memory for ts_encoder_forward.1']
    #allocation23 [shape = 'u8[8192]{0}', space=vmem, size = 0x2000, scoped, tag = 'input window, operand 17, single buffered']
    #allocation24 [shape = 'u8[512]{0}', space=vmem, size = 0x400, scoped, tag = 'input window, operand 18, single buffered']
    #allocation25 [shape = 's32[1]{0}', space=sflag, size = 0x4, scoped, tag = 'scoped memory for ts_encoder_forward.1']
    #allocation26 [shape = 'u8[1024]{0}', space=vmem, size = 0x400, scoped, tag = 'output window, operand 0, single buffered']
    #allocation27 [shape = 'u8[1024]{0}', space=vmem, size = 0x400, scoped, tag = 'output window, operand 1, single buffered']
    #allocation28 [shape = 's32[1]{0}', space=sflag, size = 0x4, scoped, tag = 'scoped memory for ts_encoder_forward.1']
    %26 = vsyncpa [#allocation4], 0
    %27 = vsyncpa [#allocation7], 0
    %28 = vsyncpa [#allocation10], 0
    %29 = vsyncpa [#allocation13], 0
    %30 = vsyncpa [#allocation16], 0
    %31 = vsyncpa [#allocation19], 0
    %32 = vsyncpa [#allocation22], 0
    %33 = vsyncpa [#allocation25], 0
    %34 = vsyncpa [#allocation5], 0
    %35 = vsyncpa [#allocation28], 0
    // Predicated region
    $region2: #{ts_encoder_forward.1} parent=1 // pred_check
      _
    $region3: #{ts_encoder_forward.1} parent=1 // pred_check_branch
      %37 = sbr.rel (0) target = $region5
    $region4: #{ts_encoder_forward.1} parent=1 // pred_region
      _
    $region5: #{ts_encoder_forward.1} parent=1 // pred_fallthru
      _
    // Predicated region
    $region6: #{ts_encoder_forward.1} parent=1 // pred_check
      _
    $region7: #{ts_encoder_forward.1} parent=1 // pred_check_branch
      %39 = sbr.rel (0) target = $region9
    $region8: #{ts_encoder_forward.1} parent=1 // pred_region
      %41 = vsyncadd [#allocation4], 0
      %s43 = sshll.u32 %s1, 4
      %s44 = int_to_ptr.hbm [resolvable:$true] %s43
      %s45 = sshll.u32 [#allocation3], 4
      %s46 = int_to_ptr.vmem [resolvable:$true] %s45
      %48 = dma.hbm_to_vmem [thread:$0]  %s44, 128, %s46, [#allocation4]
    $region9: #{ts_encoder_forward.1} parent=1 // pred_fallthru
      _
    // Predicated region
    $region10: #{ts_encoder_forward.1} parent=1 // pred_check
      _
    $region11: #{ts_encoder_forward.1} parent=1 // pred_check_branch
      %50 = sbr.rel (0) target = $region13
    $region12: #{ts_encoder_forward.1} parent=1 // pred_region
      _
    $region13: #{ts_encoder_forward.1} parent=1 // pred_fallthru
      _
    // Predicated region
    $region14: #{ts_encoder_forward.1} parent=1 // pred_check
      _
    $region15: #{ts_encoder_forward.1} parent=1 // pred_check_branch
      %52 = sbr.rel (0) target = $region17
    $region16: #{ts_encoder_forward.1} parent=1 // pred_region
      _
    $region17: #{ts_encoder_forward.1} parent=1 // pred_fallthru
      _
    // Predicated region
    $region18: #{ts_encoder_forward.1} parent=1 // pred_check
      _
    $region19: #{ts_encoder_forward.1} parent=1 // pred_check_branch
      %54 = sbr.rel (0) target = $region21
    $region20: #{ts_encoder_forward.1} parent=1 // pred_region
      _
    $region21: #{ts_encoder_forward.1} parent=1 // pred_fallthru
      _
    // Predicated region
    $region22: #{ts_encoder_forward.1} parent=1 // pred_check
      _
    $region23: #{ts_encoder_forward.1} parent=1 // pred_check_branch
      %56 = sbr.rel (0) target = $region25
    $region24: #{ts_encoder_forward.1} parent=1 // pred_region
      _
    $region25: #{ts_encoder_forward.1} parent=1 // pred_fallthru
      _
    // Predicated region
    $region26: #{ts_encoder_forward.1} parent=1 // pred_check
      _
    $region27: #{ts_encoder_forward.1} parent=1 // pred_check_branch
      %58 = sbr.rel (0) target = $region29
    $region28: #{ts_encoder_forward.1} parent=1 // pred_region
      %60 = vsyncadd [#allocation7], 0
      %s62 = sshll.u32 %s6, 4
      %s63 = int_to_ptr.hbm [resolvable:$true] %s62
      %s64 = sshll.u32 [#allocation6], 4
      %s65 = int_to_ptr.vmem [resolvable:$true] %s64
      %67 = dma.hbm_to_vmem [thread:$0]  %s63, 16, %s65, [#allocation7]
    $region29: #{ts_encoder_forward.1} parent=1 // pred_fallthru
      _
    // Predicated region
    $region30: #{ts_encoder_forward.1} parent=1 // pred_check
      _
    $region31: #{ts_encoder_forward.1} parent=1 // pred_check_branch
      %69 = sbr.rel (0) target = $region33
    $region32: #{ts_encoder_forward.1} parent=1 // pred_region
      %71 = vsyncadd [#allocation7], 0
      %s73 = sshll.u32 %s7, 4
      %s74 = int_to_ptr.hbm [resolvable:$true] %s73
      %s75 = sshll.u32 [#allocation8], 4
      %s76 = int_to_ptr.vmem [resolvable:$true] %s75
      %78 = dma.hbm_to_vmem [thread:$0]  %s74, 16, %s76, [#allocation7]
    $region33: #{ts_encoder_forward.1} parent=1 // pred_fallthru
      _
    // Predicated region
    $region34: #{ts_encoder_forward.1} parent=1 // pred_check
      _
    $region35: #{ts_encoder_forward.1} parent=1 // pred_check_branch
      %80 = sbr.rel (0) target = $region37
    $region36: #{ts_encoder_forward.1} parent=1 // pred_region
      %82 = vsyncadd [#allocation10], 0
      %s84 = sshll.u32 %s8, 4
      %s85 = int_to_ptr.hbm [resolvable:$true] %s84
      %s86 = sshll.u32 [#allocation9], 4
      %s87 = int_to_ptr.vmem [resolvable:$true] %s86
      %89 = dma.hbm_to_vmem [thread:$0]  %s85, 16, %s87, [#allocation10]
    $region37: #{ts_encoder_forward.1} parent=1 // pred_fallthru
      _
    // Predicated region
    $region38: #{ts_encoder_forward.1} parent=1 // pred_check
      _
    $region39: #{ts_encoder_forward.1} parent=1 // pred_check_branch
      %91 = sbr.rel (0) target = $region41
    $region40: #{ts_encoder_forward.1} parent=1 // pred_region
      %93 = vsyncadd [#allocation10], 0
      %s94 = sshll.u32 %s9, 4
      %s95 = int_to_ptr.hbm [resolvable:$true] %s94
      %s96 = sshll.u32 [#allocation11], 4
      %s97 = int_to_ptr.vmem [resolvable:$true] %s96
      %102 = dma.hbm_to_vmem [thread:$0]  %s95, 512, %s97, [#allocation10], 128, 128, 8
    $region41: #{ts_encoder_forward.1} parent=1 // pred_fallthru
      _
    // Predicated region
    $region42: #{ts_encoder_forward.1} parent=1 // pred_check
      _
    $region43: #{ts_encoder_forward.1} parent=1 // pred_check_branch
      %104 = sbr.rel (0) target = $region45
    $region44: #{ts_encoder_forward.1} parent=1 // pred_region
      %106 = vsyncadd [#allocation13], 0
      %s107 = sshll.u32 %s10, 4
      %s108 = int_to_ptr.hbm [resolvable:$true] %s107
      %s109 = sshll.u32 [#allocation12], 4
      %s110 = int_to_ptr.vmem [resolvable:$true] %s109
      %115 = dma.hbm_to_vmem [thread:$0]  %s108, 256, %s110, [#allocation13], 128, 128, 8
    $region45: #{ts_encoder_forward.1} parent=1 // pred_fallthru
      _
    // Predicated region
    $region46: #{ts_encoder_forward.1} parent=1 // pred_check
      _
    $region47: #{ts_encoder_forward.1} parent=1 // pred_check_branch
      %117 = sbr.rel (0) target = $region49
    $region48: #{ts_encoder_forward.1} parent=1 // pred_region
      %119 = vsyncadd [#allocation13], 0
      %s120 = sshll.u32 %s11, 4
      %s121 = int_to_ptr.hbm [resolvable:$true] %s120
      %s122 = sshll.u32 [#allocation14], 4
      %s123 = int_to_ptr.vmem [resolvable:$true] %s122
      %128 = dma.hbm_to_vmem [thread:$0]  %s121, 256, %s123, [#allocation13], 128, 128, 8
    $region49: #{ts_encoder_forward.1} parent=1 // pred_fallthru
      _
    // Predicated region
    $region50: #{ts_encoder_forward.1} parent=1 // pred_check
      _
    $region51: #{ts_encoder_forward.1} parent=1 // pred_check_branch
      %130 = sbr.rel (0) target = $region53
    $region52: #{ts_encoder_forward.1} parent=1 // pred_region
      %132 = vsyncadd [#allocation16], 0
      %s134 = sshll.u32 %s12, 4
      %s135 = int_to_ptr.hbm [resolvable:$true] %s134
      %s136 = sshll.u32 [#allocation15], 4
      %s137 = int_to_ptr.vmem [resolvable:$true] %s136
      %139 = dma.hbm_to_vmem [thread:$0]  %s135, 16, %s137, [#allocation16]
    $region53: #{ts_encoder_forward.1} parent=1 // pred_fallthru
      _
    // Predicated region
    $region54: #{ts_encoder_forward.1} parent=1 // pred_check
      _
    $region55: #{ts_encoder_forward.1} parent=1 // pred_check_branch
      %141 = sbr.rel (0) target = $region57
    $region56: #{ts_encoder_forward.1} parent=1 // pred_region
      %143 = vsyncadd [#allocation16], 0
      %s144 = sshll.u32 %s13, 4
      %s145 = int_to_ptr.hbm [resolvable:$true] %s144
      %s146 = sshll.u32 [#allocation17], 4
      %s147 = int_to_ptr.vmem [resolvable:$true] %s146
      %152 = dma.hbm_to_vmem [thread:$0]  %s145, 512, %s147, [#allocation16], 128, 128, 8
    $region57: #{ts_encoder_forward.1} parent=1 // pred_fallthru
      _
    // Predicated region
    $region58: #{ts_encoder_forward.1} parent=1 // pred_check
      _
    $region59: #{ts_encoder_forward.1} parent=1 // pred_check_branch
      %154 = sbr.rel (0) target = $region61
    $region60: #{ts_encoder_forward.1} parent=1 // pred_region
      %156 = vsyncadd [#allocation19], 0
      %s157 = sshll.u32 %s14, 4
      %s158 = int_to_ptr.hbm [resolvable:$true] %s157
      %s159 = sshll.u32 [#allocation18], 4
      %s160 = int_to_ptr.vmem [resolvable:$true] %s159
      %165 = dma.hbm_to_vmem [thread:$0]  %s158, 256, %s160, [#allocation19], 128, 128, 8
    $region61: #{ts_encoder_forward.1} parent=1 // pred_fallthru
      _
    // Predicated region
    $region62: #{ts_encoder_forward.1} parent=1 // pred_check
      _
    $region63: #{ts_encoder_forward.1} parent=1 // pred_check_branch
      %167 = sbr.rel (0) target = $region65
    $region64: #{ts_encoder_forward.1} parent=1 // pred_region
      %169 = vsyncadd [#allocation19], 0
      %s171 = sshll.u32 %s15, 4
      %s172 = int_to_ptr.hbm [resolvable:$true] %s171
      %s173 = sshll.u32 [#allocation20], 4
      %s174 = int_to_ptr.vmem [resolvable:$true] %s173
      %176 = dma.hbm_to_vmem [thread:$0]  %s172, 16, %s174, [#allocation19]
    $region65: #{ts_encoder_forward.1} parent=1 // pred_fallthru
      _
    // Predicated region
    $region66: #{ts_encoder_forward.1} parent=1 // pred_check
      _
    $region67: #{ts_encoder_forward.1} parent=1 // pred_check_branch
      %178 = sbr.rel (0) target = $region69
    $region68: #{ts_encoder_forward.1} parent=1 // pred_region
      %180 = vsyncadd [#allocation22], 0
      %s181 = sshll.u32 %s16, 4
      %s182 = int_to_ptr.hbm [resolvable:$true] %s181
      %s183 = sshll.u32 [#allocation21], 4
      %s184 = int_to_ptr.vmem [resolvable:$true] %s183
      %189 = dma.hbm_to_vmem [thread:$0]  %s182, 256, %s184, [#allocation22], 128, 128, 8
    $region69: #{ts_encoder_forward.1} parent=1 // pred_fallthru
      _
    // Predicated region
    $region70: #{ts_encoder_forward.1} parent=1 // pred_check
      _
    $region71: #{ts_encoder_forward.1} parent=1 // pred_check_branch
      %191 = sbr.rel (0) target = $region73
    $region72: #{ts_encoder_forward.1} parent=1 // pred_region
      %193 = vsyncadd [#allocation22], 0
      %s194 = sshll.u32 %s17, 4
      %s195 = int_to_ptr.hbm [resolvable:$true] %s194
      %s196 = sshll.u32 [#allocation23], 4
      %s197 = int_to_ptr.vmem [resolvable:$true] %s196
      %202 = dma.hbm_to_vmem [thread:$0]  %s195, 256, %s197, [#allocation22], 128, 128, 8
    $region73: #{ts_encoder_forward.1} parent=1 // pred_fallthru
      _
    // Predicated region
    $region74: #{ts_encoder_forward.1} parent=1 // pred_check
      _
    $region75: #{ts_encoder_forward.1} parent=1 // pred_check_branch
      %204 = sbr.rel (0) target = $region77
    $region76: #{ts_encoder_forward.1} parent=1 // pred_region
      %206 = vsyncadd [#allocation25], 0
      %s208 = sshll.u32 %s18, 4
      %s209 = int_to_ptr.hbm [resolvable:$true] %s208
      %s210 = sshll.u32 [#allocation24], 4
      %s211 = int_to_ptr.vmem [resolvable:$true] %s210
      %213 = dma.hbm_to_vmem [thread:$0]  %s209, 16, %s211, [#allocation25]
    $region77: #{ts_encoder_forward.1} parent=1 // pred_fallthru
      _
    // Predicated region
    $region78: #{ts_encoder_forward.1} parent=1 // pred_check
      _
    $region79: #{ts_encoder_forward.1} parent=1 // pred_check_branch
      %215 = sbr.rel (0) target = $region81
    $region80: #{ts_encoder_forward.1} parent=1 // pred_region
      %217 = dma.done [#allocation4], 128
    $region81: #{ts_encoder_forward.1} parent=1 // pred_fallthru
      _
    // Predicated region
    $region82: #{ts_encoder_forward.1} parent=1 // pred_check
      _
    $region83: #{ts_encoder_forward.1} parent=1 // pred_check_branch
      %219 = sbr.rel (0) target = $region85
    $region84: #{ts_encoder_forward.1} parent=1 // pred_region
      %221 = dma.done [#allocation7], 16
    $region85: #{ts_encoder_forward.1} parent=1 // pred_fallthru
      _
    // Predicated region
    $region86: #{ts_encoder_forward.1} parent=1 // pred_check
      _
    $region87: #{ts_encoder_forward.1} parent=1 // pred_check_branch
      %223 = sbr.rel (0) target = $region89
    $region88: #{ts_encoder_forward.1} parent=1 // pred_region
      %225 = dma.done [#allocation7], 16
    $region89: #{ts_encoder_forward.1} parent=1 // pred_fallthru
      _
    // Predicated region
    $region90: #{ts_encoder_forward.1} parent=1 // pred_check
      _
    $region91: #{ts_encoder_forward.1} parent=1 // pred_check_branch
      %227 = sbr.rel (0) target = $region93
    $region92: #{ts_encoder_forward.1} parent=1 // pred_region
      %229 = dma.done [#allocation10], 16
    $region93: #{ts_encoder_forward.1} parent=1 // pred_fallthru
      _
    // Predicated region
    $region94: #{ts_encoder_forward.1} parent=1 // pred_check
      _
    $region95: #{ts_encoder_forward.1} parent=1 // pred_check_branch
      %231 = sbr.rel (0) target = $region97
    $region96: #{ts_encoder_forward.1} parent=1 // pred_region
      %233 = dma.done [#allocation10], 512
    $region97: #{ts_encoder_forward.1} parent=1 // pred_fallthru
      _
    // Predicated region
    $region98: #{ts_encoder_forward.1} parent=1 // pred_check
      _
    $region99: #{ts_encoder_forward.1} parent=1 // pred_check_branch
      %235 = sbr.rel (0) target = $region101
    $region100: #{ts_encoder_forward.1} parent=1 // pred_region
      %237 = dma.done [#allocation13], 256
    $region101: #{ts_encoder_forward.1} parent=1 // pred_fallthru
      _
    // Predicated region
    $region102: #{ts_encoder_forward.1} parent=1 // pred_check
      _
    $region103: #{ts_encoder_forward.1} parent=1 // pred_check_branch
      %239 = sbr.rel (0) target = $region105
    $region104: #{ts_encoder_forward.1} parent=1 // pred_region
      %241 = dma.done [#allocation13], 256
    $region105: #{ts_encoder_forward.1} parent=1 // pred_fallthru
      _
    // Predicated region
    $region106: #{ts_encoder_forward.1} parent=1 // pred_check
      _
    $region107: #{ts_encoder_forward.1} parent=1 // pred_check_branch
      %243 = sbr.rel (0) target = $region109
    $region108: #{ts_encoder_forward.1} parent=1 // pred_region
      %245 = dma.done [#allocation16], 16
    $region109: #{ts_encoder_forward.1} parent=1 // pred_fallthru
      _
    // Predicated region
    $region110: #{ts_encoder_forward.1} parent=1 // pred_check
      _
    $region111: #{ts_encoder_forward.1} parent=1 // pred_check_branch
      %247 = sbr.rel (0) target = $region113
    $region112: #{ts_encoder_forward.1} parent=1 // pred_region
      %249 = dma.done [#allocation16], 512
    $region113: #{ts_encoder_forward.1} parent=1 // pred_fallthru
      _
    // Predicated region
    $region114: #{ts_encoder_forward.1} parent=1 // pred_check
      _
    $region115: #{ts_encoder_forward.1} parent=1 // pred_check_branch
      %251 = sbr.rel (0) target = $region117
    $region116: #{ts_encoder_forward.1} parent=1 // pred_region
      %253 = dma.done [#allocation19], 256
    $region117: #{ts_encoder_forward.1} parent=1 // pred_fallthru
      _
    // Predicated region
    $region118: #{ts_encoder_forward.1} parent=1 // pred_check
      _
    $region119: #{ts_encoder_forward.1} parent=1 // pred_check_branch
      %255 = sbr.rel (0) target = $region121
    $region120: #{ts_encoder_forward.1} parent=1 // pred_region
      %257 = dma.done [#allocation19], 16
    $region121: #{ts_encoder_forward.1} parent=1 // pred_fallthru
      _
    // Predicated region
    $region122: #{ts_encoder_forward.1} parent=1 // pred_check
      _
    $region123: #{ts_encoder_forward.1} parent=1 // pred_check_branch
      %259 = sbr.rel (0) target = $region125
    $region124: #{ts_encoder_forward.1} parent=1 // pred_region
      %261 = dma.done [#allocation22], 256
    $region125: #{ts_encoder_forward.1} parent=1 // pred_fallthru
      _
    // Predicated region
    $region126: #{ts_encoder_forward.1} parent=1 // pred_check
      _
    $region127: #{ts_encoder_forward.1} parent=1 // pred_check_branch
      %263 = sbr.rel (0) target = $region129
    $region128: #{ts_encoder_forward.1} parent=1 // pred_region
      %265 = dma.done [#allocation22], 256
    $region129: #{ts_encoder_forward.1} parent=1 // pred_fallthru
      _
    // Predicated region
    $region130: #{ts_encoder_forward.1} parent=1 // pred_check
      _
    $region131: #{ts_encoder_forward.1} parent=1 // pred_check_branch
      %267 = sbr.rel (0) target = $region133
    $region132: #{ts_encoder_forward.1} parent=1 // pred_region
      %269 = dma.done [#allocation25], 16
    $region133: #{ts_encoder_forward.1} parent=1 // pred_fallthru
      _
    %v270 = vld [vmem:[%s0] sm:$0xff]
    %v271 = vld [vmem:[%s0 + $0x8] sm:$0xff]
    %v272 = vld [vmem:[#allocation3] sm:$0xff]
    %v273 = vld [vmem:[%s2] sm:$0x1]
    %v275 = vperm.slane %v273, 0
    %vm277 = vcmask 64512
    %v279 = vsel %vm277, %v270, 0
    %v282 = vsel %vm277, %v271, 0
    %284 = vmatpush.msra.mxu0 0.0
    %285 = vmatpush.msra.mxu0 0.0
    %286 = vmatpush.msra.mxu0 0.0
    %287 = vmatpush.msra.mxu0 0.0
    %288 = vmatpush.msra.mxu0 0.0
    %289 = vmatpush.msra.mxu0 0.0
    %290 = vmatpush.msra.mxu0 0.0
    %291 = vmatpush.msra.mxu0 0.0
    %292 = vmatpush.msra.mxu0 0.0
    %293 = vmatpush.msra.mxu0 0.0
    %294 = vmatpush.msra.mxu0 0.0
    %295 = vmatpush.msra.mxu0 0.0
    %296 = vmatpush.msra.mxu0 0.0
    %297 = vmatpush.msra.mxu0 0.0
    %298 = vmatpush.msra.mxu0 0.0
    %299 = vmatpush.msra.mxu0 %v272
    %300 = vmatmul.f32.gmra.mxu0 %v279
    %v301 = vpop.f32.mrf.mxu0
    %v302 = vadd.f32 %v275, %v301
    %303 = vmatmul.f32.gmra.mxu0 %v282
    %v304 = vpop.f32.mrf.mxu0
    %v305 = vadd.f32 %v275, %v304
    %306 = vdwg.mxu0
    %vm307 = vcmask 261120
    %v308 = vsel %vm307, %v302, 0.0
    %v309 = vsel %vm307, %v305, 0.0
    %v310 = vadd.f32 %v308, %v309
    %v311 = vrot.slane %v310, 4
    %v312 = vadd.f32 %v310, %v311
    %v313 = vrot.slane %v312, 2
    %v314 = vadd.f32 %v312, %v313
    %v315 = vrot.slane %v314, 1
    %v316 = vadd.f32 %v314, %v315
    %v317 = vrcp.pop 16.0
    %v318 = vmul.f32 16.0, %v317
    %v319 = vsub.f32 1.0, %v318
    %v320 = vmul.f32 %v317, %v319
    %v321 = vadd.f32 %v317, %v320
    %vm322 = vweird.f32 %v317
    %v323 = vsel %vm322, %v317, %v321
    %v324 = vmul.f32 %v316, %v323
    %v325 = vsub.f32 %v302, %v324
    %v326 = vsub.f32 %v305, %v324
    %v327 = vmul.f32 %v325, %v325
    %v328 = vmul.f32 %v326, %v326
    %v329 = vsel %vm307, %v327, 0.0
    %v330 = vsel %vm307, %v328, 0.0
    %v331 = vadd.f32 %v329, %v330
    %v332 = vrot.slane %v331, 4
    %v333 = vadd.f32 %v331, %v332
    %v334 = vrot.slane %v333, 2
    %v335 = vadd.f32 %v333, %v334
    %v336 = vrot.slane %v335, 1
    %v337 = vadd.f32 %v335, %v336
    %v338 = vmul.f32 %v337, %v323
    %v339 = vld [vmem:[%s3] sm:$0x1]
    %v341 = vperm.slane %v339, 0
    %v343 = vmul.f32 %v341, %v325
    %v344 = vmul.f32 %v341, %v326
    %v345 = vadd.f32 %v338, 1e-05
    %v346 = vrsqrt.pop %v345
    %v347 = vmul.f32 %v346, %v345
    %v348 = vmul.f32 %v347, %v346
    %v349 = vmul.f32 0.5, %v348
    %v350 = vsub.f32 1.5, %v349
    %v351 = vmul.f32 %v346, %v350
    %vm352 = vweird.f32 %v345
    %vm353 = vweird.f32 %v346
    %vm354 = vmor %vm352, %vm353
    %v355 = vsel %vm354, %v346, %v351
    %v356 = vmul.f32 %v343, %v355
    %v357 = vmul.f32 %v344, %v355
    %v358 = vld [vmem:[%s4] sm:$0x1]
    %v360 = vperm.slane %v358, 0
    %v362 = vadd.f32 %v356, %v360
    %v363 = vadd.f32 %v357, %v360
    %v364 = vmax.f32 %v362, 0.0
    %v365 = vmax.f32 %v363, 0.0
    %v366 = vld [vmem:[%s5] sm:$0xff]
    %v367 = vld [vmem:[%s5 + $0x8] sm:$0xff]
    %v368 = vld [vmem:[%s5 + $0x10] sm:$0xff]
    %v369 = vld [vmem:[%s5 + $0x18] sm:$0xff]
    %v370 = vld [vmem:[#allocation6] sm:$0x1]
    %v372 = vperm.slane %v370, 0
    %v375 = vsel %vm307, %v364, 0
    %v378 = vsel %vm307, %v365, 0
    %380 = vmatpush.msra.mxu0 0.0
    %381 = vmatpush.msra.mxu0 0.0
    %382 = vmatpush.msra.mxu0 0.0
    %383 = vmatpush.msra.mxu0 0.0
    %384 = vmatpush.msra.mxu0 0.0
    %385 = vmatpush.msra.mxu0 0.0
    %386 = vmatpush.msra.mxu0 0.0
    %387 = vmatpush.msra.mxu0 0.0
    %388 = vmatpush.msra.mxu0 0.0
    %389 = vmatpush.msra.mxu0 0.0
    %390 = vmatpush.msra.mxu0 0.0
    %391 = vmatpush.msra.mxu0 0.0
    %392 = vmatpush.msra.mxu0 %v369
    %393 = vmatpush.msra.mxu0 %v368
    %394 = vmatpush.msra.mxu0 %v367
    %395 = vmatpush.msra.mxu0 %v366
    %396 = vmatmul.f32.gmra.mxu0 %v375
    %v397 = vpop.f32.mrf.mxu0
    %v398 = vadd.f32 %v372, %v397
    %399 = vmatmul.f32.gmra.mxu0 %v378
    %v400 = vpop.f32.mrf.mxu0
    %v401 = vadd.f32 %v372, %v400
    %402 = vdwg.mxu0
    %v403 = vsel %vm307, %v398, 0.0
    %v404 = vsel %vm307, %v401, 0.0
    %v405 = vadd.f32 %v403, %v404
    %v406 = vrot.slane %v405, 4
    %v407 = vadd.f32 %v405, %v406
    %v408 = vrot.slane %v407, 2
    %v409 = vadd.f32 %v407, %v408
    %v410 = vrot.slane %v409, 1
    %v411 = vadd.f32 %v409, %v410
    %v412 = vmul.f32 %v411, %v323
    %v413 = vsub.f32 %v398, %v412
    %v414 = vsub.f32 %v401, %v412
    %v415 = vmul.f32 %v413, %v413
    %v416 = vmul.f32 %v414, %v414
    %v417 = vsel %vm307, %v415, 0.0
    %v418 = vsel %vm307, %v416, 0.0
    %v419 = vadd.f32 %v417, %v418
    %v420 = vrot.slane %v419, 4
    %v421 = vadd.f32 %v419, %v420
    %v422 = vrot.slane %v421, 2
    %v423 = vadd.f32 %v421, %v422
    %v424 = vrot.slane %v423, 1
    %v425 = vadd.f32 %v423, %v424
    %v426 = vmul.f32 %v425, %v323
    %v427 = vld [vmem:[#allocation8] sm:$0x1]
    %v429 = vperm.slane %v427, 0
    %v431 = vmul.f32 %v429, %v413
    %v432 = vmul.f32 %v429, %v414
    %v433 = vadd.f32 %v426, 1e-05
    %v434 = vrsqrt.pop %v433
    %v435 = vmul.f32 %v434, %v433
    %v436 = vmul.f32 %v435, %v434
    %v437 = vmul.f32 0.5, %v436
    %v438 = vsub.f32 1.5, %v437
    %v439 = vmul.f32 %v434, %v438
    %vm440 = vweird.f32 %v433
    %vm441 = vweird.f32 %v434
    %vm442 = vmor %vm440, %vm441
    %v443 = vsel %vm442, %v434, %v439
    %v444 = vmul.f32 %v431, %v443
    %v445 = vmul.f32 %v432, %v443
    %v446 = vld [vmem:[#allocation9] sm:$0x1]
    %v448 = vperm.slane %v446, 0
    %v450 = vadd.f32 %v444, %v448
    %v451 = vadd.f32 %v445, %v448
    %v452 = vmax.f32 %v450, 0.0
    %v453 = vmax.f32 %v451, 0.0
    %v454 = vld [vmem:[#allocation11] sm:$0xff]
    %v455 = vld [vmem:[#allocation11 + $0x8] sm:$0xff]
    %v456 = vld [vmem:[#allocation11 + $0x10] sm:$0xff]
    %v457 = vld [vmem:[#allocation11 + $0x18] sm:$0xff]
    %v458 = vld [vmem:[#allocation15] sm:$0x1]
    %v460 = vperm.slane %v458, 0
    %v463 = vsel %vm307, %v452, 0
    %v466 = vsel %vm307, %v453, 0
    %468 = vmatpush.msra.mxu0 0.0
    %469 = vmatpush.msra.mxu0 0.0
    %470 = vmatpush.msra.mxu0 0.0
    %471 = vmatpush.msra.mxu0 0.0
    %472 = vmatpush.msra.mxu0 0.0
    %473 = vmatpush.msra.mxu0 0.0
    %474 = vmatpush.msra.mxu0 0.0
    %475 = vmatpush.msra.mxu0 0.0
    %476 = vmatpush.msra.mxu0 0.0
    %477 = vmatpush.msra.mxu0 0.0
    %478 = vmatpush.msra.mxu0 0.0
    %479 = vmatpush.msra.mxu0 0.0
    %480 = vmatpush.msra.mxu0 %v457
    %481 = vmatpush.msra.mxu0 %v456
    %482 = vmatpush.msra.mxu0 %v455
    %483 = vmatpush.msra.mxu0 %v454
    %484 = vmatmul.f32.gmra.mxu0 %v463
    %v485 = vpop.f32.mrf.mxu0
    %v486 = vadd.f32 %v460, %v485
    %487 = vmatmul.f32.gmra.mxu0 %v466
    %v488 = vpop.f32.mrf.mxu0
    %v489 = vadd.f32 %v460, %v488
    %490 = vdwg.mxu0
    %v491 = vld [vmem:[#allocation12] sm:$0xff]
    %v492 = vld [vmem:[#allocation12 + $0x8] sm:$0xff]
    %v493 = vld [vmem:[#allocation14] sm:$0xff]
    %v494 = vld [vmem:[#allocation14 + $0x8] sm:$0xff]
    %vm495 = vcmask 130048
    %v497 = vsel %vm495, 0.0, 0
    %499 = vmatpush.msra.mxu0 0.0
    %500 = vmatpush.msra.mxu0 0.0
    %501 = vmatpush.msra.mxu0 0.0
    %502 = vmatpush.msra.mxu0 0.0
    %503 = vmatpush.msra.mxu0 0.0
    %504 = vmatpush.msra.mxu0 0.0
    %505 = vmatpush.msra.mxu0 0.0
    %506 = vmatpush.msra.mxu0 0.0
    %507 = vmatpush.msra.mxu0 0.0
    %508 = vmatpush.msra.mxu0 0.0
    %509 = vmatpush.msra.mxu0 0.0
    %510 = vmatpush.msra.mxu0 0.0
    %511 = vmatpush.msra.mxu0 0.0
    %512 = vmatpush.msra.mxu0 0.0
    %513 = vmatpush.msra.mxu0 %v492
    %514 = vmatpush.msra.mxu0 %v491
    %515 = vmatmul.f32.gmra.mxu0 %v497
    %v516 = vpop.f32.mrf.mxu0
    %v517 = vadd.f32 0.0, %v516
    %518 = vdwg.mxu0
    %v519 = vadd.f32 %v486, %v517
    %520 = vmatpush.msra.mxu0 0.0
    %521 = vmatpush.msra.mxu0 0.0
    %522 = vmatpush.msra.mxu0 0.0
    %523 = vmatpush.msra.mxu0 0.0
    %524 = vmatpush.msra.mxu0 0.0
    %525 = vmatpush.msra.mxu0 0.0
    %526 = vmatpush.msra.mxu0 0.0
    %527 = vmatpush.msra.mxu0 0.0
    %528 = vmatpush.msra.mxu0 0.0
    %529 = vmatpush.msra.mxu0 0.0
    %530 = vmatpush.msra.mxu0 0.0
    %531 = vmatpush.msra.mxu0 0.0
    %532 = vmatpush.msra.mxu0 0.0
    %533 = vmatpush.msra.mxu0 0.0
    %534 = vmatpush.msra.mxu0 %v494
    %535 = vmatpush.msra.mxu0 %v493
    %536 = vmatmul.f32.gmra.mxu0 %v497
    %v537 = vpop.f32.mrf.mxu0
    %v538 = vadd.f32 0.0, %v537
    %539 = vdwg.mxu0
    %v541 = vrot.slane %v538, 2
    %542 = vrot.lane.b32.xlu0 %v541, 64
    %v543 = vpop.permute.xlu0 %542
    %v545 = vadd.f32 %v489, %v543
    %v546 = vxor.u32 %v519, 2147483648
    %v547 = vmul.f32 %v546, 1.442695
    %v548 = vpow.pop %v547
    %v549 = vadd.f32 %v548, 1.0
    %v550 = vrcp.pop %v549
    %v551 = vmul.f32 %v549, %v550
    %v552 = vsub.f32 1.0, %v551
    %v553 = vmul.f32 %v550, %v552
    %v554 = vadd.f32 %v550, %v553
    %vm555 = vweird.f32 %v549
    %vm556 = vweird.f32 %v550
    %vm557 = vmor %vm555, %vm556
    %v558 = vsel %vm557, %v550, %v554
    %v559 = vand.u32 2147483647, %v549
    %vm560 = vcmp.eq.f32.partialorder %v559, 8.507059e+37
    %v561 = vand.u32 %v549, 2147483648
    %v562 = vor.u32 1.1754944e-38, %v561
    %v563 = vsel %vm560, %v562, %v558
    %v564 = vmul.f32 1.0, %v563
    %v565 = vtanh.pop %v519
    %v566 = vmul.f32 %v564, 0.0
    %568 = vrot.lane.b32.xlu0 %v565, 96
    %v569 = vpop.permute.xlu0 %568
    %v571 = vmul.f32 %v564, %v569
    %573 = vrot.lane.b32.xlu0 %v571, 16
    %v574 = vpop.permute.xlu0 %573
    %v576 = vadd.f32 %v566, %v574
    %v577 = vtanh.pop %v576
    %579 = vrot.lane.b32.xlu0 %v577, 32
    %v580 = vpop.permute.xlu0 %579
    %v582 = vmul.f32 %v564, %v580
    %v583 = vxor.u32 %v545, 2147483648
    %v584 = vmul.f32 %v583, 1.442695
    %v585 = vpow.pop %v584
    %v586 = vadd.f32 %v585, 1.0
    %v587 = vrcp.pop %v586
    %v588 = vmul.f32 %v586, %v587
    %v589 = vsub.f32 1.0, %v588
    %v590 = vmul.f32 %v587, %v589
    %v591 = vadd.f32 %v587, %v590
    %vm592 = vweird.f32 %v586
    %vm593 = vweird.f32 %v587
    %vm594 = vmor %vm592, %vm593
    %v595 = vsel %vm594, %v587, %v591
    %v596 = vand.u32 2147483647, %v586
    %vm597 = vcmp.eq.f32.partialorder %v596, 8.507059e+37
    %v598 = vand.u32 %v586, 2147483648
    %v599 = vor.u32 1.1754944e-38, %v598
    %v600 = vsel %vm597, %v599, %v595
    %v601 = vmul.f32 1.0, %v600
    %v602 = vtanh.pop %v545
    %v603 = vmul.f32 %v601, 0.0
    %605 = vrot.lane.b32.xlu0 %v602, 96
    %v606 = vpop.permute.xlu0 %605
    %v608 = vmul.f32 %v601, %v606
    %610 = vrot.lane.b32.xlu0 %v608, 16
    %v611 = vpop.permute.xlu0 %610
    %v613 = vadd.f32 %v603, %v611
    %v614 = vtanh.pop %v613
    %616 = vrot.lane.b32.xlu0 %v614, 32
    %v617 = vpop.permute.xlu0 %616
    %v619 = vmul.f32 %v601, %v617
    %621 = vrot.lane.b32.xlu0 %v582, 80
    %v622 = vpop.permute.xlu0 %621
    %vm624 = vcmask 123904
    %625 = vst.msk [vmem:[#allocation2] sm:$0x3] %vm624, %v622
    %627 = vrot.lane.b32.xlu0 %v619, 32
    %v628 = vpop.permute.xlu0 %627
    %vm630 = vcmask 261254
    %631 = vst.msk [vmem:[#allocation2 + $0x8] sm:$0xc0] %vm630, %v628
    %v632 = vsel %vm495, %v622, 0
    %634 = vmatpush.msra.mxu0 0.0
    %635 = vmatpush.msra.mxu0 0.0
    %636 = vmatpush.msra.mxu0 0.0
    %637 = vmatpush.msra.mxu0 0.0
    %638 = vmatpush.msra.mxu0 0.0
    %639 = vmatpush.msra.mxu0 0.0
    %640 = vmatpush.msra.mxu0 0.0
    %641 = vmatpush.msra.mxu0 0.0
    %642 = vmatpush.msra.mxu0 0.0
    %643 = vmatpush.msra.mxu0 0.0
    %644 = vmatpush.msra.mxu0 0.0
    %645 = vmatpush.msra.mxu0 0.0
    %646 = vmatpush.msra.mxu0 0.0
    %647 = vmatpush.msra.mxu0 0.0
    %648 = vmatpush.msra.mxu0 %v492
    %649 = vmatpush.msra.mxu0 %v491
    %650 = vmatmul.f32.gmra.mxu0 %v632
    %v651 = vpop.f32.mrf.mxu0
    %v652 = vadd.f32 0.0, %v651
    %653 = vdwg.mxu0
    %v655 = vrot.slane %v652, 6
    %v657 = vadd.f32 %v486, %v655
    %v658 = vrot.slane %v619, 6
    %659 = vrot.lane.b32.xlu0 %v658, 16
    %v660 = vpop.permute.xlu0 %659
    %v661 = vsel %vm495, %v660, 0
    %663 = vmatpush.msra.mxu0 0.0
    %664 = vmatpush.msra.mxu0 0.0
    %665 = vmatpush.msra.mxu0 0.0
    %666 = vmatpush.msra.mxu0 0.0
    %667 = vmatpush.msra.mxu0 0.0
    %668 = vmatpush.msra.mxu0 0.0
    %669 = vmatpush.msra.mxu0 0.0
    %670 = vmatpush.msra.mxu0 0.0
    %671 = vmatpush.msra.mxu0 0.0
    %672 = vmatpush.msra.mxu0 0.0
    %673 = vmatpush.msra.mxu0 0.0
    %674 = vmatpush.msra.mxu0 0.0
    %675 = vmatpush.msra.mxu0 0.0
    %676 = vmatpush.msra.mxu0 0.0
    %677 = vmatpush.msra.mxu0 %v494
    %678 = vmatpush.msra.mxu0 %v493
    %679 = vmatmul.f32.gmra.mxu0 %v661
    %v680 = vpop.f32.mrf.mxu0
    %v681 = vadd.f32 0.0, %v680
    %682 = vdwg.mxu0
    %v684 = vrot.slane %v681, 4
    %685 = vrot.lane.b32.xlu0 %v684, 64
    %v686 = vpop.permute.xlu0 %685
    %v688 = vadd.f32 %v489, %v686
    %v689 = vxor.u32 %v657, 2147483648
    %v690 = vmul.f32 %v689, 1.442695
    %v691 = vpow.pop %v690
    %v692 = vadd.f32 %v691, 1.0
    %v693 = vrcp.pop %v692
    %v694 = vmul.f32 %v692, %v693
    %v695 = vsub.f32 1.0, %v694
    %v696 = vmul.f32 %v693, %v695
    %v697 = vadd.f32 %v693, %v696
    %vm698 = vweird.f32 %v692
    %vm699 = vweird.f32 %v693
    %vm700 = vmor %vm698, %vm699
    %v701 = vsel %vm700, %v693, %v697
    %v702 = vand.u32 2147483647, %v692
    %vm703 = vcmp.eq.f32.partialorder %v702, 8.507059e+37
    %v704 = vand.u32 %v692, 2147483648
    %v705 = vor.u32 1.1754944e-38, %v704
    %v706 = vsel %vm703, %v705, %v701
    %v707 = vmul.f32 1.0, %v706
    %v708 = vtanh.pop %v657
    %v710 = vrot.slane %v576, 6
    %v712 = vmul.f32 %v707, %v710
    %714 = vrot.lane.b32.xlu0 %v708, 96
    %v715 = vpop.permute.xlu0 %714
    %v717 = vmul.f32 %v707, %v715
    %719 = vrot.lane.b32.xlu0 %v717, 16
    %v720 = vpop.permute.xlu0 %719
    %v722 = vadd.f32 %v712, %v720
    %v723 = vtanh.pop %v722
    %725 = vrot.lane.b32.xlu0 %v723, 32
    %v726 = vpop.permute.xlu0 %725
    %v728 = vmul.f32 %v707, %v726
    %v729 = vxor.u32 %v688, 2147483648
    %v730 = vmul.f32 %v729, 1.442695
    %v731 = vpow.pop %v730
    %v732 = vadd.f32 %v731, 1.0
    %v733 = vrcp.pop %v732
    %v734 = vmul.f32 %v732, %v733
    %v735 = vsub.f32 1.0, %v734
    %v736 = vmul.f32 %v733, %v735
    %v737 = vadd.f32 %v733, %v736
    %vm738 = vweird.f32 %v732
    %vm739 = vweird.f32 %v733
    %vm740 = vmor %vm738, %vm739
    %v741 = vsel %vm740, %v733, %v737
    %v742 = vand.u32 2147483647, %v732
    %vm743 = vcmp.eq.f32.partialorder %v742, 8.507059e+37
    %v744 = vand.u32 %v732, 2147483648
    %v745 = vor.u32 1.1754944e-38, %v744
    %v746 = vsel %vm743, %v745, %v741
    %v747 = vmul.f32 1.0, %v746
    %v748 = vtanh.pop %v688
    %v750 = vrot.slane %v613, 2
    %v752 = vmul.f32 %v747, %v750
    %754 = vrot.lane.b32.xlu0 %v748, 96
    %v755 = vpop.permute.xlu0 %754
    %v757 = vmul.f32 %v747, %v755
    %759 = vrot.lane.b32.xlu0 %v757, 16
    %v760 = vpop.permute.xlu0 %759
    %v762 = vadd.f32 %v752, %v760
    %v763 = vtanh.pop %v762
    %765 = vrot.lane.b32.xlu0 %v763, 32
    %v766 = vpop.permute.xlu0 %765
    %v768 = vmul.f32 %v747, %v766
    %770 = vrot.lane.b32.xlu0 %v728, 80
    %v771 = vpop.permute.xlu0 %770
    %vm773 = vcmask 125954
    %774 = vst.msk [vmem:[#allocation2] sm:$0xc] %vm773, %v771
    %776 = vrot.lane.b32.xlu0 %v768, 32
    %v777 = vpop.permute.xlu0 %776
    %vm779 = vcmask 259204
    %780 = vst.msk [vmem:[#allocation2 + $0x8] sm:$0x30] %vm779, %v777
    %v781 = vrot.slane %v728, 2
    %782 = vrot.lane.b32.xlu0 %v781, 80
    %v783 = vpop.permute.xlu0 %782
    %v784 = vsel %vm495, %v783, 0
    %786 = vmatpush.msra.mxu0 0.0
    %787 = vmatpush.msra.mxu0 0.0
    %788 = vmatpush.msra.mxu0 0.0
    %789 = vmatpush.msra.mxu0 0.0
    %790 = vmatpush.msra.mxu0 0.0
    %791 = vmatpush.msra.mxu0 0.0
    %792 = vmatpush.msra.mxu0 0.0
    %793 = vmatpush.msra.mxu0 0.0
    %794 = vmatpush.msra.mxu0 0.0
    %795 = vmatpush.msra.mxu0 0.0
    %796 = vmatpush.msra.mxu0 0.0
    %797 = vmatpush.msra.mxu0 0.0
    %798 = vmatpush.msra.mxu0 0.0
    %799 = vmatpush.msra.mxu0 0.0
    %800 = vmatpush.msra.mxu0 %v492
    %801 = vmatpush.msra.mxu0 %v491
    %802 = vmatmul.f32.gmra.mxu0 %v784
    %v803 = vpop.f32.mrf.mxu0
    %v804 = vadd.f32 0.0, %v803
    %805 = vdwg.mxu0
    %v807 = vrot.slane %v804, 4
    %v809 = vadd.f32 %v486, %v807
    %v810 = vrot.slane %v768, 4
    %811 = vrot.lane.b32.xlu0 %v810, 16
    %v812 = vpop.permute.xlu0 %811
    %v813 = vsel %vm495, %v812, 0
    %815 = vmatpush.msra.mxu0 0.0
    %816 = vmatpush.msra.mxu0 0.0
    %817 = vmatpush.msra.mxu0 0.0
    %818 = vmatpush.msra.mxu0 0.0
    %819 = vmatpush.msra.mxu0 0.0
    %820 = vmatpush.msra.mxu0 0.0
    %821 = vmatpush.msra.mxu0 0.0
    %822 = vmatpush.msra.mxu0 0.0
    %823 = vmatpush.msra.mxu0 0.0
    %824 = vmatpush.msra.mxu0 0.0
    %825 = vmatpush.msra.mxu0 0.0
    %826 = vmatpush.msra.mxu0 0.0
    %827 = vmatpush.msra.mxu0 0.0
    %828 = vmatpush.msra.mxu0 0.0
    %829 = vmatpush.msra.mxu0 %v494
    %830 = vmatpush.msra.mxu0 %v493
    %831 = vmatmul.f32.gmra.mxu0 %v813
    %v832 = vpop.f32.mrf.mxu0
    %v833 = vadd.f32 0.0, %v832
    %834 = vdwg.mxu0
    %v836 = vrot.slane %v833, 6
    %837 = vrot.lane.b32.xlu0 %v836, 64
    %v838 = vpop.permute.xlu0 %837
    %v840 = vadd.f32 %v489, %v838
    %v841 = vxor.u32 %v809, 2147483648
    %v842 = vmul.f32 %v841, 1.442695
    %v843 = vpow.pop %v842
    %v844 = vadd.f32 %v843, 1.0
    %v845 = vrcp.pop %v844
    %v846 = vmul.f32 %v844, %v845
    %v847 = vsub.f32 1.0, %v846
    %v848 = vmul.f32 %v845, %v847
    %v849 = vadd.f32 %v845, %v848
    %vm850 = vweird.f32 %v844
    %vm851 = vweird.f32 %v845
    %vm852 = vmor %vm850, %vm851
    %v853 = vsel %vm852, %v845, %v849
    %v854 = vand.u32 2147483647, %v844
    %vm855 = vcmp.eq.f32.partialorder %v854, 8.507059e+37
    %v856 = vand.u32 %v844, 2147483648
    %v857 = vor.u32 1.1754944e-38, %v856
    %v858 = vsel %vm855, %v857, %v853
    %v859 = vmul.f32 1.0, %v858
    %v860 = vtanh.pop %v809
    %v862 = vrot.slane %v722, 6
    %v864 = vmul.f32 %v859, %v862
    %866 = vrot.lane.b32.xlu0 %v860, 96
    %v867 = vpop.permute.xlu0 %866
    %v869 = vmul.f32 %v859, %v867
    %871 = vrot.lane.b32.xlu0 %v869, 16
    %v872 = vpop.permute.xlu0 %871
    %v874 = vadd.f32 %v864, %v872
    %v875 = vtanh.pop %v874
    %877 = vrot.lane.b32.xlu0 %v875, 32
    %v878 = vpop.permute.xlu0 %877
    %v880 = vmul.f32 %v859, %v878
    %v881 = vxor.u32 %v840, 2147483648
    %v882 = vmul.f32 %v881, 1.442695
    %v883 = vpow.pop %v882
    %v884 = vadd.f32 %v883, 1.0
    %v885 = vrcp.pop %v884
    %v886 = vmul.f32 %v884, %v885
    %v887 = vsub.f32 1.0, %v886
    %v888 = vmul.f32 %v885, %v887
    %v889 = vadd.f32 %v885, %v888
    %vm890 = vweird.f32 %v884
    %vm891 = vweird.f32 %v885
    %vm892 = vmor %vm890, %vm891
    %v893 = vsel %vm892, %v885, %v889
    %v894 = vand.u32 2147483647, %v884
    %vm895 = vcmp.eq.f32.partialorder %v894, 8.507059e+37
    %v896 = vand.u32 %v884, 2147483648
    %v897 = vor.u32 1.1754944e-38, %v896
    %v898 = vsel %vm895, %v897, %v893
    %v899 = vmul.f32 1.0, %v898
    %v900 = vtanh.pop %v840
    %v902 = vrot.slane %v762, 2
    %v904 = vmul.f32 %v899, %v902
    %906 = vrot.lane.b32.xlu0 %v900, 96
    %v907 = vpop.permute.xlu0 %906
    %v909 = vmul.f32 %v899, %v907
    %911 = vrot.lane.b32.xlu0 %v909, 16
    %v912 = vpop.permute.xlu0 %911
    %v914 = vadd.f32 %v904, %v912
    %v915 = vtanh.pop %v914
    %917 = vrot.lane.b32.xlu0 %v915, 32
    %v918 = vpop.permute.xlu0 %917
    %v920 = vmul.f32 %v899, %v918
    %922 = vrot.lane.b32.xlu0 %v880, 80
    %v923 = vpop.permute.xlu0 %922
    %vm925 = vcmask 128004
    %926 = vst.msk [vmem:[#allocation2] sm:$0x30] %vm925, %v923
    %928 = vrot.lane.b32.xlu0 %v920, 32
    %v929 = vpop.permute.xlu0 %928
    %vm931 = vcmask 257154
    %932 = vst.msk [vmem:[#allocation2 + $0x8] sm:$0xc] %vm931, %v929
    %v933 = vrot.slane %v880, 4
    %934 = vrot.lane.b32.xlu0 %v933, 80
    %v935 = vpop.permute.xlu0 %934
    %v936 = vsel %vm495, %v935, 0
    %938 = vmatpush.msra.mxu0 0.0
    %939 = vmatpush.msra.mxu0 0.0
    %940 = vmatpush.msra.mxu0 0.0
    %941 = vmatpush.msra.mxu0 0.0
    %942 = vmatpush.msra.mxu0 0.0
    %943 = vmatpush.msra.mxu0 0.0
    %944 = vmatpush.msra.mxu0 0.0
    %945 = vmatpush.msra.mxu0 0.0
    %946 = vmatpush.msra.mxu0 0.0
    %947 = vmatpush.msra.mxu0 0.0
    %948 = vmatpush.msra.mxu0 0.0
    %949 = vmatpush.msra.mxu0 0.0
    %950 = vmatpush.msra.mxu0 0.0
    %951 = vmatpush.msra.mxu0 0.0
    %952 = vmatpush.msra.mxu0 %v492
    %953 = vmatpush.msra.mxu0 %v491
    %954 = vmatmul.f32.gmra.mxu0 %v936
    %v955 = vpop.f32.mrf.mxu0
    %v956 = vadd.f32 0.0, %v955
    %957 = vdwg.mxu0
    %v959 = vrot.slane %v956, 2
    %v961 = vadd.f32 %v486, %v959
    %v962 = vrot.slane %v920, 2
    %963 = vrot.lane.b32.xlu0 %v962, 16
    %v964 = vpop.permute.xlu0 %963
    %v965 = vsel %vm495, %v964, 0
    %967 = vmatpush.msra.mxu0 0.0
    %968 = vmatpush.msra.mxu0 0.0
    %969 = vmatpush.msra.mxu0 0.0
    %970 = vmatpush.msra.mxu0 0.0
    %971 = vmatpush.msra.mxu0 0.0
    %972 = vmatpush.msra.mxu0 0.0
    %973 = vmatpush.msra.mxu0 0.0
    %974 = vmatpush.msra.mxu0 0.0
    %975 = vmatpush.msra.mxu0 0.0
    %976 = vmatpush.msra.mxu0 0.0
    %977 = vmatpush.msra.mxu0 0.0
    %978 = vmatpush.msra.mxu0 0.0
    %979 = vmatpush.msra.mxu0 0.0
    %980 = vmatpush.msra.mxu0 0.0
    %981 = vmatpush.msra.mxu0 %v494
    %982 = vmatpush.msra.mxu0 %v493
    %983 = vmatmul.f32.gmra.mxu0 %v965
    %v984 = vpop.f32.mrf.mxu0
    %v985 = vadd.f32 0.0, %v984
    %986 = vdwg.mxu0
    %988 = vrot.lane.b32.xlu0 %v985, 64
    %v989 = vpop.permute.xlu0 %988
    %v991 = vadd.f32 %v489, %v989
    %v992 = vxor.u32 %v961, 2147483648
    %v993 = vmul.f32 %v992, 1.442695
    %v994 = vpow.pop %v993
    %v995 = vadd.f32 %v994, 1.0
    %v996 = vrcp.pop %v995
    %v997 = vmul.f32 %v995, %v996
    %v998 = vsub.f32 1.0, %v997
    %v999 = vmul.f32 %v996, %v998
    %v1000 = vadd.f32 %v996, %v999
    %vm1001 = vweird.f32 %v995
    %vm1002 = vweird.f32 %v996
    %vm1003 = vmor %vm1001, %vm1002
    %v1004 = vsel %vm1003, %v996, %v1000
    %v1005 = vand.u32 2147483647, %v995
    %vm1006 = vcmp.eq.f32.partialorder %v1005, 8.507059e+37
    %v1007 = vand.u32 %v995, 2147483648
    %v1008 = vor.u32 1.1754944e-38, %v1007
    %v1009 = vsel %vm1006, %v1008, %v1004
    %v1010 = vmul.f32 1.0, %v1009
    %v1011 = vtanh.pop %v961
    %v1013 = vrot.slane %v874, 6
    %v1015 = vmul.f32 %v1010, %v1013
    %1017 = vrot.lane.b32.xlu0 %v1011, 96
    %v1018 = vpop.permute.xlu0 %1017
    %v1020 = vmul.f32 %v1010, %v1018
    %1022 = vrot.lane.b32.xlu0 %v1020, 16
    %v1023 = vpop.permute.xlu0 %1022
    %v1025 = vadd.f32 %v1015, %v1023
    %v1026 = vtanh.pop %v1025
    %1028 = vrot.lane.b32.xlu0 %v1026, 32
    %v1029 = vpop.permute.xlu0 %1028
    %v1031 = vmul.f32 %v1010, %v1029
    %v1032 = vxor.u32 %v991, 2147483648
    %v1033 = vmul.f32 %v1032, 1.442695
    %v1034 = vpow.pop %v1033
    %v1035 = vadd.f32 %v1034, 1.0
    %v1036 = vrcp.pop %v1035
    %v1037 = vmul.f32 %v1035, %v1036
    %v1038 = vsub.f32 1.0, %v1037
    %v1039 = vmul.f32 %v1036, %v1038
    %v1040 = vadd.f32 %v1036, %v1039
    %vm1041 = vweird.f32 %v1035
    %vm1042 = vweird.f32 %v1036
    %vm1043 = vmor %vm1041, %vm1042
    %v1044 = vsel %vm1043, %v1036, %v1040
    %v1045 = vand.u32 2147483647, %v1035
    %vm1046 = vcmp.eq.f32.partialorder %v1045, 8.507059e+37
    %v1047 = vand.u32 %v1035, 2147483648
    %v1048 = vor.u32 1.1754944e-38, %v1047
    %v1049 = vsel %vm1046, %v1048, %v1044
    %v1050 = vmul.f32 1.0, %v1049
    %v1051 = vtanh.pop %v991
    %v1053 = vrot.slane %v914, 2
    %v1055 = vmul.f32 %v1050, %v1053
    %1057 = vrot.lane.b32.xlu0 %v1051, 96
    %v1058 = vpop.permute.xlu0 %1057
    %v1060 = vmul.f32 %v1050, %v1058
    %1062 = vrot.lane.b32.xlu0 %v1060, 16
    %v1063 = vpop.permute.xlu0 %1062
    %v1065 = vadd.f32 %v1055, %v1063
    %v1066 = vtanh.pop %v1065
    %1068 = vrot.lane.b32.xlu0 %v1066, 32
    %v1069 = vpop.permute.xlu0 %1068
    %v1071 = vmul.f32 %v1050, %v1069
    %1073 = vrot.lane.b32.xlu0 %v1031, 80
    %v1074 = vpop.permute.xlu0 %1073
    %vm1076 = vcmask 130054
    %1077 = vst.msk [vmem:[#allocation2] sm:$0xc0] %vm1076, %v1074
    %1079 = vrot.lane.b32.xlu0 %v1071, 32
    %v1080 = vpop.permute.xlu0 %1079
    %vm1082 = vcmask 255104
    %1083 = vst.msk [vmem:[#allocation2 + $0x8] sm:$0x3] %vm1082, %v1080
    %v1084 = vrot.slane %v1031, 6
    %1085 = vrot.lane.b32.xlu0 %v1084, 80
    %v1086 = vpop.permute.xlu0 %1085
    %v1087 = vsel %vm495, %v1086, 0
    %1089 = vmatpush.msra.mxu0 0.0
    %1090 = vmatpush.msra.mxu0 0.0
    %1091 = vmatpush.msra.mxu0 0.0
    %1092 = vmatpush.msra.mxu0 0.0
    %1093 = vmatpush.msra.mxu0 0.0
    %1094 = vmatpush.msra.mxu0 0.0
    %1095 = vmatpush.msra.mxu0 0.0
    %1096 = vmatpush.msra.mxu0 0.0
    %1097 = vmatpush.msra.mxu0 0.0
    %1098 = vmatpush.msra.mxu0 0.0
    %1099 = vmatpush.msra.mxu0 0.0
    %1100 = vmatpush.msra.mxu0 0.0
    %1101 = vmatpush.msra.mxu0 0.0
    %1102 = vmatpush.msra.mxu0 0.0
    %1103 = vmatpush.msra.mxu0 %v492
    %1104 = vmatpush.msra.mxu0 %v491
    %1105 = vmatmul.f32.gmra.mxu0 %v1087
    %v1106 = vpop.f32.mrf.mxu0
    %v1107 = vadd.f32 0.0, %v1106
    %1108 = vdwg.mxu0
    %v1109 = vadd.f32 %v489, %v1107
    %1110 = vrot.lane.b32.xlu0 %v1071, 16
    %v1111 = vpop.permute.xlu0 %1110
    %v1112 = vsel %vm495, %v1111, 0
    %1114 = vmatpush.msra.mxu0 0.0
    %1115 = vmatpush.msra.mxu0 0.0
    %1116 = vmatpush.msra.mxu0 0.0
    %1117 = vmatpush.msra.mxu0 0.0
    %1118 = vmatpush.msra.mxu0 0.0
    %1119 = vmatpush.msra.mxu0 0.0
    %1120 = vmatpush.msra.mxu0 0.0
    %1121 = vmatpush.msra.mxu0 0.0
    %1122 = vmatpush.msra.mxu0 0.0
    %1123 = vmatpush.msra.mxu0 0.0
    %1124 = vmatpush.msra.mxu0 0.0
    %1125 = vmatpush.msra.mxu0 0.0
    %1126 = vmatpush.msra.mxu0 0.0
    %1127 = vmatpush.msra.mxu0 0.0
    %1128 = vmatpush.msra.mxu0 %v494
    %1129 = vmatpush.msra.mxu0 %v493
    %1130 = vmatmul.f32.gmra.mxu0 %v1112
    %v1131 = vpop.f32.mrf.mxu0
    %v1132 = vadd.f32 0.0, %v1131
    %1133 = vdwg.mxu0
    %v1135 = vrot.slane %v1132, 2
    %1136 = vrot.lane.b32.xlu0 %v1135, 64
    %v1137 = vpop.permute.xlu0 %1136
    %v1139 = vadd.f32 %v486, %v1137
    %v1140 = vxor.u32 %v1109, 2147483648
    %v1141 = vmul.f32 %v1140, 1.442695
    %v1142 = vpow.pop %v1141
    %v1143 = vadd.f32 %v1142, 1.0
    %v1144 = vrcp.pop %v1143
    %v1145 = vmul.f32 %v1143, %v1144
    %v1146 = vsub.f32 1.0, %v1145
    %v1147 = vmul.f32 %v1144, %v1146
    %v1148 = vadd.f32 %v1144, %v1147
    %vm1149 = vweird.f32 %v1143
    %vm1150 = vweird.f32 %v1144
    %vm1151 = vmor %vm1149, %vm1150
    %v1152 = vsel %vm1151, %v1144, %v1148
    %v1153 = vand.u32 2147483647, %v1143
    %vm1154 = vcmp.eq.f32.partialorder %v1153, 8.507059e+37
    %v1155 = vand.u32 %v1143, 2147483648
    %v1156 = vor.u32 1.1754944e-38, %v1155
    %v1157 = vsel %vm1154, %v1156, %v1152
    %v1158 = vmul.f32 1.0, %v1157
    %v1159 = vtanh.pop %v1109
    %v1161 = vrot.slane %v1025, 6
    %v1163 = vmul.f32 %v1158, %v1161
    %1165 = vrot.lane.b32.xlu0 %v1159, 96
    %v1166 = vpop.permute.xlu0 %1165
    %v1168 = vmul.f32 %v1158, %v1166
    %1170 = vrot.lane.b32.xlu0 %v1168, 16
    %v1171 = vpop.permute.xlu0 %1170
    %v1173 = vadd.f32 %v1163, %v1171
    %v1174 = vtanh.pop %v1173
    %1176 = vrot.lane.b32.xlu0 %v1174, 32
    %v1177 = vpop.permute.xlu0 %1176
    %v1179 = vmul.f32 %v1158, %v1177
    %v1180 = vxor.u32 %v1139, 2147483648
    %v1181 = vmul.f32 %v1180, 1.442695
    %v1182 = vpow.pop %v1181
    %v1183 = vadd.f32 %v1182, 1.0
    %v1184 = vrcp.pop %v1183
    %v1185 = vmul.f32 %v1183, %v1184
    %v1186 = vsub.f32 1.0, %v1185
    %v1187 = vmul.f32 %v1184, %v1186
    %v1188 = vadd.f32 %v1184, %v1187
    %vm1189 = vweird.f32 %v1183
    %vm1190 = vweird.f32 %v1184
    %vm1191 = vmor %vm1189, %vm1190
    %v1192 = vsel %vm1191, %v1184, %v1188
    %v1193 = vand.u32 2147483647, %v1183
    %vm1194 = vcmp.eq.f32.partialorder %v1193, 8.507059e+37
    %v1195 = vand.u32 %v1183, 2147483648
    %v1196 = vor.u32 1.1754944e-38, %v1195
    %v1197 = vsel %vm1194, %v1196, %v1192
    %v1198 = vmul.f32 1.0, %v1197
    %v1199 = vtanh.pop %v1139
    %v1201 = vrot.slane %v1065, 2
    %v1203 = vmul.f32 %v1198, %v1201
    %1205 = vrot.lane.b32.xlu0 %v1199, 96
    %v1206 = vpop.permute.xlu0 %1205
    %v1208 = vmul.f32 %v1198, %v1206
    %1210 = vrot.lane.b32.xlu0 %v1208, 16
    %v1211 = vpop.permute.xlu0 %1210
    %v1213 = vadd.f32 %v1203, %v1211
    %v1214 = vtanh.pop %v1213
    %1216 = vrot.lane.b32.xlu0 %v1214, 32
    %v1217 = vpop.permute.xlu0 %1216
    %v1219 = vmul.f32 %v1198, %v1217
    %1221 = vrot.lane.b32.xlu0 %v1179, 80
    %v1222 = vpop.permute.xlu0 %1221
    %1224 = vst.msk [vmem:[#allocation2 + $0x8] sm:$0x3] %vm624, %v1222
    %1226 = vrot.lane.b32.xlu0 %v1219, 32
    %v1227 = vpop.permute.xlu0 %1226
    %1229 = vst.msk [vmem:[#allocation2] sm:$0xc0] %vm630, %v1227
    %v1230 = vsel %vm495, %v1222, 0
    %1232 = vmatpush.msra.mxu0 0.0
    %1233 = vmatpush.msra.mxu0 0.0
    %1234 = vmatpush.msra.mxu0 0.0
    %1235 = vmatpush.msra.mxu0 0.0
    %1236 = vmatpush.msra.mxu0 0.0
    %1237 = vmatpush.msra.mxu0 0.0
    %1238 = vmatpush.msra.mxu0 0.0
    %1239 = vmatpush.msra.mxu0 0.0
    %1240 = vmatpush.msra.mxu0 0.0
    %1241 = vmatpush.msra.mxu0 0.0
    %1242 = vmatpush.msra.mxu0 0.0
    %1243 = vmatpush.msra.mxu0 0.0
    %1244 = vmatpush.msra.mxu0 0.0
    %1245 = vmatpush.msra.mxu0 0.0
    %1246 = vmatpush.msra.mxu0 %v492
    %1247 = vmatpush.msra.mxu0 %v491
    %1248 = vmatmul.f32.gmra.mxu0 %v1230
    %v1249 = vpop.f32.mrf.mxu0
    %v1250 = vadd.f32 0.0, %v1249
    %1251 = vdwg.mxu0
    %v1253 = vrot.slane %v1250, 6
    %v1255 = vadd.f32 %v489, %v1253
    %v1256 = vrot.slane %v1219, 6
    %1257 = vrot.lane.b32.xlu0 %v1256, 16
    %v1258 = vpop.permute.xlu0 %1257
    %v1259 = vsel %vm495, %v1258, 0
    %1261 = vmatpush.msra.mxu0 0.0
    %1262 = vmatpush.msra.mxu0 0.0
    %1263 = vmatpush.msra.mxu0 0.0
    %1264 = vmatpush.msra.mxu0 0.0
    %1265 = vmatpush.msra.mxu0 0.0
    %1266 = vmatpush.msra.mxu0 0.0
    %1267 = vmatpush.msra.mxu0 0.0
    %1268 = vmatpush.msra.mxu0 0.0
    %1269 = vmatpush.msra.mxu0 0.0
    %1270 = vmatpush.msra.mxu0 0.0
    %1271 = vmatpush.msra.mxu0 0.0
    %1272 = vmatpush.msra.mxu0 0.0
    %1273 = vmatpush.msra.mxu0 0.0
    %1274 = vmatpush.msra.mxu0 0.0
    %1275 = vmatpush.msra.mxu0 %v494
    %1276 = vmatpush.msra.mxu0 %v493
    %1277 = vmatmul.f32.gmra.mxu0 %v1259
    %v1278 = vpop.f32.mrf.mxu0
    %v1279 = vadd.f32 0.0, %v1278
    %1280 = vdwg.mxu0
    %v1282 = vrot.slane %v1279, 4
    %1283 = vrot.lane.b32.xlu0 %v1282, 64
    %v1284 = vpop.permute.xlu0 %1283
    %v1286 = vadd.f32 %v486, %v1284
    %v1287 = vxor.u32 %v1255, 2147483648
    %v1288 = vmul.f32 %v1287, 1.442695
    %v1289 = vpow.pop %v1288
    %v1290 = vadd.f32 %v1289, 1.0
    %v1291 = vrcp.pop %v1290
    %v1292 = vmul.f32 %v1290, %v1291
    %v1293 = vsub.f32 1.0, %v1292
    %v1294 = vmul.f32 %v1291, %v1293
    %v1295 = vadd.f32 %v1291, %v1294
    %vm1296 = vweird.f32 %v1290
    %vm1297 = vweird.f32 %v1291
    %vm1298 = vmor %vm1296, %vm1297
    %v1299 = vsel %vm1298, %v1291, %v1295
    %v1300 = vand.u32 2147483647, %v1290
    %vm1301 = vcmp.eq.f32.partialorder %v1300, 8.507059e+37
    %v1302 = vand.u32 %v1290, 2147483648
    %v1303 = vor.u32 1.1754944e-38, %v1302
    %v1304 = vsel %vm1301, %v1303, %v1299
    %v1305 = vmul.f32 1.0, %v1304
    %v1306 = vtanh.pop %v1255
    %v1308 = vrot.slane %v1173, 6
    %v1310 = vmul.f32 %v1305, %v1308
    %1312 = vrot.lane.b32.xlu0 %v1306, 96
    %v1313 = vpop.permute.xlu0 %1312
    %v1315 = vmul.f32 %v1305, %v1313
    %1317 = vrot.lane.b32.xlu0 %v1315, 16
    %v1318 = vpop.permute.xlu0 %1317
    %v1320 = vadd.f32 %v1310, %v1318
    %v1321 = vtanh.pop %v1320
    %1323 = vrot.lane.b32.xlu0 %v1321, 32
    %v1324 = vpop.permute.xlu0 %1323
    %v1326 = vmul.f32 %v1305, %v1324
    %v1327 = vxor.u32 %v1286, 2147483648
    %v1328 = vmul.f32 %v1327, 1.442695
    %v1329 = vpow.pop %v1328
    %v1330 = vadd.f32 %v1329, 1.0
    %v1331 = vrcp.pop %v1330
    %v1332 = vmul.f32 %v1330, %v1331
    %v1333 = vsub.f32 1.0, %v1332
    %v1334 = vmul.f32 %v1331, %v1333
    %v1335 = vadd.f32 %v1331, %v1334
    %vm1336 = vweird.f32 %v1330
    %vm1337 = vweird.f32 %v1331
    %vm1338 = vmor %vm1336, %vm1337
    %v1339 = vsel %vm1338, %v1331, %v1335
    %v1340 = vand.u32 2147483647, %v1330
    %vm1341 = vcmp.eq.f32.partialorder %v1340, 8.507059e+37
    %v1342 = vand.u32 %v1330, 2147483648
    %v1343 = vor.u32 1.1754944e-38, %v1342
    %v1344 = vsel %vm1341, %v1343, %v1339
    %v1345 = vmul.f32 1.0, %v1344
    %v1346 = vtanh.pop %v1286
    %v1348 = vrot.slane %v1213, 2
    %v1350 = vmul.f32 %v1345, %v1348
    %1352 = vrot.lane.b32.xlu0 %v1346, 96
    %v1353 = vpop.permute.xlu0 %1352
    %v1355 = vmul.f32 %v1345, %v1353
    %1357 = vrot.lane.b32.xlu0 %v1355, 16
    %v1358 = vpop.permute.xlu0 %1357
    %v1360 = vadd.f32 %v1350, %v1358
    %v1361 = vtanh.pop %v1360
    %1363 = vrot.lane.b32.xlu0 %v1361, 32
    %v1364 = vpop.permute.xlu0 %1363
    %v1366 = vmul.f32 %v1345, %v1364
    %1368 = vrot.lane.b32.xlu0 %v1326, 80
    %v1369 = vpop.permute.xlu0 %1368
    %1371 = vst.msk [vmem:[#allocation2 + $0x8] sm:$0xc] %vm773, %v1369
    %1373 = vrot.lane.b32.xlu0 %v1366, 32
    %v1374 = vpop.permute.xlu0 %1373
    %1376 = vst.msk [vmem:[#allocation2] sm:$0x30] %vm779, %v1374
    %v1377 = vrot.slane %v1326, 2
    %1378 = vrot.lane.b32.xlu0 %v1377, 80
    %v1379 = vpop.permute.xlu0 %1378
    %v1380 = vsel %vm495, %v1379, 0
    %1382 = vmatpush.msra.mxu0 0.0
    %1383 = vmatpush.msra.mxu0 0.0
    %1384 = vmatpush.msra.mxu0 0.0
    %1385 = vmatpush.msra.mxu0 0.0
    %1386 = vmatpush.msra.mxu0 0.0
    %1387 = vmatpush.msra.mxu0 0.0
    %1388 = vmatpush.msra.mxu0 0.0
    %1389 = vmatpush.msra.mxu0 0.0
    %1390 = vmatpush.msra.mxu0 0.0
    %1391 = vmatpush.msra.mxu0 0.0
    %1392 = vmatpush.msra.mxu0 0.0
    %1393 = vmatpush.msra.mxu0 0.0
    %1394 = vmatpush.msra.mxu0 0.0
    %1395 = vmatpush.msra.mxu0 0.0
    %1396 = vmatpush.msra.mxu0 %v492
    %1397 = vmatpush.msra.mxu0 %v491
    %1398 = vmatmul.f32.gmra.mxu0 %v1380
    %v1399 = vpop.f32.mrf.mxu0
    %v1400 = vadd.f32 0.0, %v1399
    %1401 = vdwg.mxu0
    %v1403 = vrot.slane %v1400, 4
    %v1405 = vadd.f32 %v489, %v1403
    %v1406 = vrot.slane %v1366, 4
    %1407 = vrot.lane.b32.xlu0 %v1406, 16
    %v1408 = vpop.permute.xlu0 %1407
    %v1409 = vsel %vm495, %v1408, 0
    %1411 = vmatpush.msra.mxu0 0.0
    %1412 = vmatpush.msra.mxu0 0.0
    %1413 = vmatpush.msra.mxu0 0.0
    %1414 = vmatpush.msra.mxu0 0.0
    %1415 = vmatpush.msra.mxu0 0.0
    %1416 = vmatpush.msra.mxu0 0.0
    %1417 = vmatpush.msra.mxu0 0.0
    %1418 = vmatpush.msra.mxu0 0.0
    %1419 = vmatpush.msra.mxu0 0.0
    %1420 = vmatpush.msra.mxu0 0.0
    %1421 = vmatpush.msra.mxu0 0.0
    %1422 = vmatpush.msra.mxu0 0.0
    %1423 = vmatpush.msra.mxu0 0.0
    %1424 = vmatpush.msra.mxu0 0.0
    %1425 = vmatpush.msra.mxu0 %v494
    %1426 = vmatpush.msra.mxu0 %v493
    %1427 = vmatmul.f32.gmra.mxu0 %v1409
    %v1428 = vpop.f32.mrf.mxu0
    %v1429 = vadd.f32 0.0, %v1428
    %1430 = vdwg.mxu0
    %v1432 = vrot.slane %v1429, 6
    %1433 = vrot.lane.b32.xlu0 %v1432, 64
    %v1434 = vpop.permute.xlu0 %1433
    %v1436 = vadd.f32 %v486, %v1434
    %v1437 = vxor.u32 %v1405, 2147483648
    %v1438 = vmul.f32 %v1437, 1.442695
    %v1439 = vpow.pop %v1438
    %v1440 = vadd.f32 %v1439, 1.0
    %v1441 = vrcp.pop %v1440
    %v1442 = vmul.f32 %v1440, %v1441
    %v1443 = vsub.f32 1.0, %v1442
    %v1444 = vmul.f32 %v1441, %v1443
    %v1445 = vadd.f32 %v1441, %v1444
    %vm1446 = vweird.f32 %v1440
    %vm1447 = vweird.f32 %v1441
    %vm1448 = vmor %vm1446, %vm1447
    %v1449 = vsel %vm1448, %v1441, %v1445
    %v1450 = vand.u32 2147483647, %v1440
    %vm1451 = vcmp.eq.f32.partialorder %v1450, 8.507059e+37
    %v1452 = vand.u32 %v1440, 2147483648
    %v1453 = vor.u32 1.1754944e-38, %v1452
    %v1454 = vsel %vm1451, %v1453, %v1449
    %v1455 = vmul.f32 1.0, %v1454
    %v1456 = vtanh.pop %v1405
    %v1458 = vrot.slane %v1320, 6
    %v1460 = vmul.f32 %v1455, %v1458
    %1462 = vrot.lane.b32.xlu0 %v1456, 96
    %v1463 = vpop.permute.xlu0 %1462
    %v1465 = vmul.f32 %v1455, %v1463
    %1467 = vrot.lane.b32.xlu0 %v1465, 16
    %v1468 = vpop.permute.xlu0 %1467
    %v1470 = vadd.f32 %v1460, %v1468
    %v1471 = vtanh.pop %v1470
    %1473 = vrot.lane.b32.xlu0 %v1471, 32
    %v1474 = vpop.permute.xlu0 %1473
    %v1476 = vmul.f32 %v1455, %v1474
    %v1477 = vxor.u32 %v1436, 2147483648
    %v1478 = vmul.f32 %v1477, 1.442695
    %v1479 = vpow.pop %v1478
    %v1480 = vadd.f32 %v1479, 1.0
    %v1481 = vrcp.pop %v1480
    %v1482 = vmul.f32 %v1480, %v1481
    %v1483 = vsub.f32 1.0, %v1482
    %v1484 = vmul.f32 %v1481, %v1483
    %v1485 = vadd.f32 %v1481, %v1484
    %vm1486 = vweird.f32 %v1480
    %vm1487 = vweird.f32 %v1481
    %vm1488 = vmor %vm1486, %vm1487
    %v1489 = vsel %vm1488, %v1481, %v1485
    %v1490 = vand.u32 2147483647, %v1480
    %vm1491 = vcmp.eq.f32.partialorder %v1490, 8.507059e+37
    %v1492 = vand.u32 %v1480, 2147483648
    %v1493 = vor.u32 1.1754944e-38, %v1492
    %v1494 = vsel %vm1491, %v1493, %v1489
    %v1495 = vmul.f32 1.0, %v1494
    %v1496 = vtanh.pop %v1436
    %v1498 = vrot.slane %v1360, 2
    %v1500 = vmul.f32 %v1495, %v1498
    %1502 = vrot.lane.b32.xlu0 %v1496, 96
    %v1503 = vpop.permute.xlu0 %1502
    %v1505 = vmul.f32 %v1495, %v1503
    %1507 = vrot.lane.b32.xlu0 %v1505, 16
    %v1508 = vpop.permute.xlu0 %1507
    %v1510 = vadd.f32 %v1500, %v1508
    %v1511 = vtanh.pop %v1510
    %1513 = vrot.lane.b32.xlu0 %v1511, 32
    %v1514 = vpop.permute.xlu0 %1513
    %v1516 = vmul.f32 %v1495, %v1514
    %1518 = vrot.lane.b32.xlu0 %v1476, 80
    %v1519 = vpop.permute.xlu0 %1518
    %1521 = vst.msk [vmem:[#allocation2 + $0x8] sm:$0x30] %vm925, %v1519
    %1523 = vrot.lane.b32.xlu0 %v1516, 32
    %v1524 = vpop.permute.xlu0 %1523
    %1526 = vst.msk [vmem:[#allocation2] sm:$0xc] %vm931, %v1524
    %v1527 = vrot.slane %v1476, 4
    %1528 = vrot.lane.b32.xlu0 %v1527, 80
    %v1529 = vpop.permute.xlu0 %1528
    %v1530 = vsel %vm495, %v1529, 0
    %1532 = vmatpush.msra.mxu0 0.0
    %1533 = vmatpush.msra.mxu0 0.0
    %1534 = vmatpush.msra.mxu0 0.0
    %1535 = vmatpush.msra.mxu0 0.0
    %1536 = vmatpush.msra.mxu0 0.0
    %1537 = vmatpush.msra.mxu0 0.0
    %1538 = vmatpush.msra.mxu0 0.0
    %1539 = vmatpush.msra.mxu0 0.0
    %1540 = vmatpush.msra.mxu0 0.0
    %1541 = vmatpush.msra.mxu0 0.0
    %1542 = vmatpush.msra.mxu0 0.0
    %1543 = vmatpush.msra.mxu0 0.0
    %1544 = vmatpush.msra.mxu0 0.0
    %1545 = vmatpush.msra.mxu0 0.0
    %1546 = vmatpush.msra.mxu0 %v492
    %1547 = vmatpush.msra.mxu0 %v491
    %1548 = vmatmul.f32.gmra.mxu0 %v1530
    %v1549 = vpop.f32.mrf.mxu0
    %v1550 = vadd.f32 0.0, %v1549
    %1551 = vdwg.mxu0
    %v1553 = vrot.slane %v1550, 2
    %v1555 = vadd.f32 %v489, %v1553
    %v1556 = vrot.slane %v1516, 2
    %1557 = vrot.lane.b32.xlu0 %v1556, 16
    %v1558 = vpop.permute.xlu0 %1557
    %v1559 = vsel %vm495, %v1558, 0
    %1561 = vmatpush.msra.mxu0 0.0
    %1562 = vmatpush.msra.mxu0 0.0
    %1563 = vmatpush.msra.mxu0 0.0
    %1564 = vmatpush.msra.mxu0 0.0
    %1565 = vmatpush.msra.mxu0 0.0
    %1566 = vmatpush.msra.mxu0 0.0
    %1567 = vmatpush.msra.mxu0 0.0
    %1568 = vmatpush.msra.mxu0 0.0
    %1569 = vmatpush.msra.mxu0 0.0
    %1570 = vmatpush.msra.mxu0 0.0
    %1571 = vmatpush.msra.mxu0 0.0
    %1572 = vmatpush.msra.mxu0 0.0
    %1573 = vmatpush.msra.mxu0 0.0
    %1574 = vmatpush.msra.mxu0 0.0
    %1575 = vmatpush.msra.mxu0 %v494
    %1576 = vmatpush.msra.mxu0 %v493
    %1577 = vmatmul.f32.gmra.mxu0 %v1559
    %v1578 = vpop.f32.mrf.mxu0
    %v1579 = vadd.f32 0.0, %v1578
    %1580 = vdwg.mxu0
    %1582 = vrot.lane.b32.xlu0 %v1579, 64
    %v1583 = vpop.permute.xlu0 %1582
    %v1585 = vadd.f32 %v486, %v1583
    %v1586 = vxor.u32 %v1555, 2147483648
    %v1587 = vmul.f32 %v1586, 1.442695
    %v1588 = vpow.pop %v1587
    %v1589 = vadd.f32 %v1588, 1.0
    %v1590 = vrcp.pop %v1589
    %v1591 = vmul.f32 %v1589, %v1590
    %v1592 = vsub.f32 1.0, %v1591
    %v1593 = vmul.f32 %v1590, %v1592
    %v1594 = vadd.f32 %v1590, %v1593
    %vm1595 = vweird.f32 %v1589
    %vm1596 = vweird.f32 %v1590
    %vm1597 = vmor %vm1595, %vm1596
    %v1598 = vsel %vm1597, %v1590, %v1594
    %v1599 = vand.u32 2147483647, %v1589
    %vm1600 = vcmp.eq.f32.partialorder %v1599, 8.507059e+37
    %v1601 = vand.u32 %v1589, 2147483648
    %v1602 = vor.u32 1.1754944e-38, %v1601
    %v1603 = vsel %vm1600, %v1602, %v1598
    %v1604 = vmul.f32 1.0, %v1603
    %v1605 = vtanh.pop %v1555
    %v1607 = vrot.slane %v1470, 6
    %v1609 = vmul.f32 %v1604, %v1607
    %1611 = vrot.lane.b32.xlu0 %v1605, 96
    %v1612 = vpop.permute.xlu0 %1611
    %v1614 = vmul.f32 %v1604, %v1612
    %1616 = vrot.lane.b32.xlu0 %v1614, 16
    %v1617 = vpop.permute.xlu0 %1616
    %v1619 = vadd.f32 %v1609, %v1617
    %v1620 = vtanh.pop %v1619
    %1622 = vrot.lane.b32.xlu0 %v1620, 32
    %v1623 = vpop.permute.xlu0 %1622
    %v1625 = vmul.f32 %v1604, %v1623
    %v1626 = vxor.u32 %v1585, 2147483648
    %v1627 = vmul.f32 %v1626, 1.442695
    %v1628 = vpow.pop %v1627
    %v1629 = vadd.f32 %v1628, 1.0
    %v1630 = vrcp.pop %v1629
    %v1631 = vmul.f32 %v1629, %v1630
    %v1632 = vsub.f32 1.0, %v1631
    %v1633 = vmul.f32 %v1630, %v1632
    %v1634 = vadd.f32 %v1630, %v1633
    %vm1635 = vweird.f32 %v1629
    %vm1636 = vweird.f32 %v1630
    %vm1637 = vmor %vm1635, %vm1636
    %v1638 = vsel %vm1637, %v1630, %v1634
    %v1639 = vand.u32 2147483647, %v1629
    %vm1640 = vcmp.eq.f32.partialorder %v1639, 8.507059e+37
    %v1641 = vand.u32 %v1629, 2147483648
    %v1642 = vor.u32 1.1754944e-38, %v1641
    %v1643 = vsel %vm1640, %v1642, %v1638
    %v1644 = vmul.f32 1.0, %v1643
    %v1645 = vtanh.pop %v1585
    %v1647 = vrot.slane %v1510, 2
    %v1649 = vmul.f32 %v1644, %v1647
    %1651 = vrot.lane.b32.xlu0 %v1645, 96
    %v1652 = vpop.permute.xlu0 %1651
    %v1654 = vmul.f32 %v1644, %v1652
    %1656 = vrot.lane.b32.xlu0 %v1654, 16
    %v1657 = vpop.permute.xlu0 %1656
    %v1659 = vadd.f32 %v1649, %v1657
    %v1660 = vtanh.pop %v1659
    %1662 = vrot.lane.b32.xlu0 %v1660, 32
    %v1663 = vpop.permute.xlu0 %1662
    %v1665 = vmul.f32 %v1644, %v1663
    %1667 = vrot.lane.b32.xlu0 %v1625, 80
    %v1668 = vpop.permute.xlu0 %1667
    %1670 = vst.msk [vmem:[#allocation2 + $0x8] sm:$0xc0] %vm1076, %v1668
    %1672 = vrot.lane.b32.xlu0 %v1665, 32
    %v1673 = vpop.permute.xlu0 %1672
    %1675 = vst.msk [vmem:[#allocation2] sm:$0x3] %vm1082, %v1673
    %v1676 = vld [vmem:[#allocation2] sm:$0xff]
    %v1677 = vld [vmem:[#allocation2 + $0x8] sm:$0xff]
    %v1678 = vld [vmem:[#allocation17] sm:$0xff]
    %v1679 = vld [vmem:[#allocation17 + $0x8] sm:$0xff]
    %v1680 = vld [vmem:[#allocation17 + $0x10] sm:$0xff]
    %v1681 = vld [vmem:[#allocation17 + $0x18] sm:$0xff]
    %v1682 = vld [vmem:[#allocation20] sm:$0x1]
    %v1684 = vperm.slane %v1682, 0
    %v1687 = vsel %vm307, %v1676, 0
    %v1690 = vsel %vm307, %v1677, 0
    %1692 = vmatpush.msra.mxu0 0.0
    %1693 = vmatpush.msra.mxu0 0.0
    %1694 = vmatpush.msra.mxu0 0.0
    %1695 = vmatpush.msra.mxu0 0.0
    %1696 = vmatpush.msra.mxu0 0.0
    %1697 = vmatpush.msra.mxu0 0.0
    %1698 = vmatpush.msra.mxu0 0.0
    %1699 = vmatpush.msra.mxu0 0.0
    %1700 = vmatpush.msra.mxu0 0.0
    %1701 = vmatpush.msra.mxu0 0.0
    %1702 = vmatpush.msra.mxu0 0.0
    %1703 = vmatpush.msra.mxu0 0.0
    %1704 = vmatpush.msra.mxu0 %v1681
    %1705 = vmatpush.msra.mxu0 %v1680
    %1706 = vmatpush.msra.mxu0 %v1679
    %1707 = vmatpush.msra.mxu0 %v1678
    %1708 = vmatmul.f32.gmra.mxu0 %v1687
    %v1709 = vpop.f32.mrf.mxu0
    %v1710 = vadd.f32 %v1684, %v1709
    %1711 = vmatmul.f32.gmra.mxu0 %v1690
    %v1712 = vpop.f32.mrf.mxu0
    %v1713 = vadd.f32 %v1684, %v1712
    %1714 = vdwg.mxu0
    %v1715 = vld [vmem:[#allocation18] sm:$0xff]
    %v1716 = vld [vmem:[#allocation18 + $0x8] sm:$0xff]
    %1717 = vmatpush.msra.mxu0 0.0
    %1718 = vmatpush.msra.mxu0 0.0
    %1719 = vmatpush.msra.mxu0 0.0
    %1720 = vmatpush.msra.mxu0 0.0
    %1721 = vmatpush.msra.mxu0 0.0
    %1722 = vmatpush.msra.mxu0 0.0
    %1723 = vmatpush.msra.mxu0 0.0
    %1724 = vmatpush.msra.mxu0 0.0
    %1725 = vmatpush.msra.mxu0 0.0
    %1726 = vmatpush.msra.mxu0 0.0
    %1727 = vmatpush.msra.mxu0 0.0
    %1728 = vmatpush.msra.mxu0 0.0
    %1729 = vmatpush.msra.mxu0 0.0
    %1730 = vmatpush.msra.mxu0 0.0
    %1731 = vmatpush.msra.mxu0 %v1716
    %1732 = vmatpush.msra.mxu0 %v1715
    %1733 = vmatmul.f32.gmra.mxu0 %v497
    %v1734 = vpop.f32.mrf.mxu0
    %v1735 = vadd.f32 0.0, %v1734
    %1736 = vdwg.mxu0
    %v1737 = vadd.f32 %v1710, %v1735
    %v1738 = vxor.u32 %v1737, 2147483648
    %v1739 = vmul.f32 %v1738, 1.442695
    %v1740 = vpow.pop %v1739
    %v1741 = vadd.f32 %v1740, 1.0
    %v1742 = vrcp.pop %v1741
    %v1743 = vmul.f32 %v1741, %v1742
    %v1744 = vsub.f32 1.0, %v1743
    %v1745 = vmul.f32 %v1742, %v1744
    %v1746 = vadd.f32 %v1742, %v1745
    %vm1747 = vweird.f32 %v1741
    %vm1748 = vweird.f32 %v1742
    %vm1749 = vmor %vm1747, %vm1748
    %v1750 = vsel %vm1749, %v1742, %v1746
    %v1751 = vand.u32 2147483647, %v1741
    %vm1752 = vcmp.eq.f32.partialorder %v1751, 8.507059e+37
    %v1753 = vand.u32 %v1741, 2147483648
    %v1754 = vor.u32 1.1754944e-38, %v1753
    %v1755 = vsel %vm1752, %v1754, %v1750
    %v1756 = vmul.f32 1.0, %v1755
    %v1757 = vtanh.pop %v1737
    %v1758 = vmul.f32 %v1756, 0.0
    %1760 = vrot.lane.b32.xlu0 %v1757, 96
    %v1761 = vpop.permute.xlu0 %1760
    %v1763 = vmul.f32 %v1756, %v1761
    %1765 = vrot.lane.b32.xlu0 %v1763, 16
    %v1766 = vpop.permute.xlu0 %1765
    %v1768 = vadd.f32 %v1758, %v1766
    %v1769 = vtanh.pop %v1768
    %1771 = vrot.lane.b32.xlu0 %v1769, 32
    %v1772 = vpop.permute.xlu0 %1771
    %v1774 = vmul.f32 %v1756, %v1772
    %1776 = vrot.lane.b32.xlu0 %v1774, 80
    %v1777 = vpop.permute.xlu0 %1776
    %v1778 = vsel %vm495, %v1777, 0
    %1780 = vmatpush.msra.mxu0 0.0
    %1781 = vmatpush.msra.mxu0 0.0
    %1782 = vmatpush.msra.mxu0 0.0
    %1783 = vmatpush.msra.mxu0 0.0
    %1784 = vmatpush.msra.mxu0 0.0
    %1785 = vmatpush.msra.mxu0 0.0
    %1786 = vmatpush.msra.mxu0 0.0
    %1787 = vmatpush.msra.mxu0 0.0
    %1788 = vmatpush.msra.mxu0 0.0
    %1789 = vmatpush.msra.mxu0 0.0
    %1790 = vmatpush.msra.mxu0 0.0
    %1791 = vmatpush.msra.mxu0 0.0
    %1792 = vmatpush.msra.mxu0 0.0
    %1793 = vmatpush.msra.mxu0 0.0
    %1794 = vmatpush.msra.mxu0 %v1716
    %1795 = vmatpush.msra.mxu0 %v1715
    %1796 = vmatmul.f32.gmra.mxu0 %v1778
    %v1797 = vpop.f32.mrf.mxu0
    %v1798 = vadd.f32 0.0, %v1797
    %1799 = vdwg.mxu0
    %v1801 = vrot.slane %v1798, 6
    %v1803 = vadd.f32 %v1710, %v1801
    %v1804 = vxor.u32 %v1803, 2147483648
    %v1805 = vmul.f32 %v1804, 1.442695
    %v1806 = vpow.pop %v1805
    %v1807 = vadd.f32 %v1806, 1.0
    %v1808 = vrcp.pop %v1807
    %v1809 = vmul.f32 %v1807, %v1808
    %v1810 = vsub.f32 1.0, %v1809
    %v1811 = vmul.f32 %v1808, %v1810
    %v1812 = vadd.f32 %v1808, %v1811
    %vm1813 = vweird.f32 %v1807
    %vm1814 = vweird.f32 %v1808
    %vm1815 = vmor %vm1813, %vm1814
    %v1816 = vsel %vm1815, %v1808, %v1812
    %v1817 = vand.u32 2147483647, %v1807
    %vm1818 = vcmp.eq.f32.partialorder %v1817, 8.507059e+37
    %v1819 = vand.u32 %v1807, 2147483648
    %v1820 = vor.u32 1.1754944e-38, %v1819
    %v1821 = vsel %vm1818, %v1820, %v1816
    %v1822 = vmul.f32 1.0, %v1821
    %v1823 = vtanh.pop %v1803
    %v1825 = vrot.slane %v1768, 6
    %v1827 = vmul.f32 %v1822, %v1825
    %1829 = vrot.lane.b32.xlu0 %v1823, 96
    %v1830 = vpop.permute.xlu0 %1829
    %v1832 = vmul.f32 %v1822, %v1830
    %1834 = vrot.lane.b32.xlu0 %v1832, 16
    %v1835 = vpop.permute.xlu0 %1834
    %v1837 = vadd.f32 %v1827, %v1835
    %v1838 = vtanh.pop %v1837
    %1840 = vrot.lane.b32.xlu0 %v1838, 32
    %v1841 = vpop.permute.xlu0 %1840
    %v1843 = vmul.f32 %v1822, %v1841
    %v1845 = vrot.slane %v1843, 2
    %1846 = vrot.lane.b32.xlu0 %v1845, 80
    %v1847 = vpop.permute.xlu0 %1846
    %v1848 = vsel %vm495, %v1847, 0
    %1850 = vmatpush.msra.mxu0 0.0
    %1851 = vmatpush.msra.mxu0 0.0
    %1852 = vmatpush.msra.mxu0 0.0
    %1853 = vmatpush.msra.mxu0 0.0
    %1854 = vmatpush.msra.mxu0 0.0
    %1855 = vmatpush.msra.mxu0 0.0
    %1856 = vmatpush.msra.mxu0 0.0
    %1857 = vmatpush.msra.mxu0 0.0
    %1858 = vmatpush.msra.mxu0 0.0
    %1859 = vmatpush.msra.mxu0 0.0
    %1860 = vmatpush.msra.mxu0 0.0
    %1861 = vmatpush.msra.mxu0 0.0
    %1862 = vmatpush.msra.mxu0 0.0
    %1863 = vmatpush.msra.mxu0 0.0
    %1864 = vmatpush.msra.mxu0 %v1716
    %1865 = vmatpush.msra.mxu0 %v1715
    %1866 = vmatmul.f32.gmra.mxu0 %v1848
    %v1867 = vpop.f32.mrf.mxu0
    %v1868 = vadd.f32 0.0, %v1867
    %1869 = vdwg.mxu0
    %v1871 = vrot.slane %v1868, 4
    %v1873 = vadd.f32 %v1710, %v1871
    %v1874 = vxor.u32 %v1873, 2147483648
    %v1875 = vmul.f32 %v1874, 1.442695
    %v1876 = vpow.pop %v1875
    %v1877 = vadd.f32 %v1876, 1.0
    %v1878 = vrcp.pop %v1877
    %v1879 = vmul.f32 %v1877, %v1878
    %v1880 = vsub.f32 1.0, %v1879
    %v1881 = vmul.f32 %v1878, %v1880
    %v1882 = vadd.f32 %v1878, %v1881
    %vm1883 = vweird.f32 %v1877
    %vm1884 = vweird.f32 %v1878
    %vm1885 = vmor %vm1883, %vm1884
    %v1886 = vsel %vm1885, %v1878, %v1882
    %v1887 = vand.u32 2147483647, %v1877
    %vm1888 = vcmp.eq.f32.partialorder %v1887, 8.507059e+37
    %v1889 = vand.u32 %v1877, 2147483648
    %v1890 = vor.u32 1.1754944e-38, %v1889
    %v1891 = vsel %vm1888, %v1890, %v1886
    %v1892 = vmul.f32 1.0, %v1891
    %v1893 = vtanh.pop %v1873
    %v1895 = vrot.slane %v1837, 6
    %v1897 = vmul.f32 %v1892, %v1895
    %1899 = vrot.lane.b32.xlu0 %v1893, 96
    %v1900 = vpop.permute.xlu0 %1899
    %v1902 = vmul.f32 %v1892, %v1900
    %1904 = vrot.lane.b32.xlu0 %v1902, 16
    %v1905 = vpop.permute.xlu0 %1904
    %v1907 = vadd.f32 %v1897, %v1905
    %v1908 = vtanh.pop %v1907
    %1910 = vrot.lane.b32.xlu0 %v1908, 32
    %v1911 = vpop.permute.xlu0 %1910
    %v1913 = vmul.f32 %v1892, %v1911
    %v1915 = vrot.slane %v1913, 4
    %1916 = vrot.lane.b32.xlu0 %v1915, 80
    %v1917 = vpop.permute.xlu0 %1916
    %v1918 = vsel %vm495, %v1917, 0
    %1920 = vmatpush.msra.mxu0 0.0
    %1921 = vmatpush.msra.mxu0 0.0
    %1922 = vmatpush.msra.mxu0 0.0
    %1923 = vmatpush.msra.mxu0 0.0
    %1924 = vmatpush.msra.mxu0 0.0
    %1925 = vmatpush.msra.mxu0 0.0
    %1926 = vmatpush.msra.mxu0 0.0
    %1927 = vmatpush.msra.mxu0 0.0
    %1928 = vmatpush.msra.mxu0 0.0
    %1929 = vmatpush.msra.mxu0 0.0
    %1930 = vmatpush.msra.mxu0 0.0
    %1931 = vmatpush.msra.mxu0 0.0
    %1932 = vmatpush.msra.mxu0 0.0
    %1933 = vmatpush.msra.mxu0 0.0
    %1934 = vmatpush.msra.mxu0 %v1716
    %1935 = vmatpush.msra.mxu0 %v1715
    %1936 = vmatmul.f32.gmra.mxu0 %v1918
    %v1937 = vpop.f32.mrf.mxu0
    %v1938 = vadd.f32 0.0, %v1937
    %1939 = vdwg.mxu0
    %v1941 = vrot.slane %v1938, 2
    %v1943 = vadd.f32 %v1710, %v1941
    %v1944 = vxor.u32 %v1943, 2147483648
    %v1945 = vmul.f32 %v1944, 1.442695
    %v1946 = vpow.pop %v1945
    %v1947 = vadd.f32 %v1946, 1.0
    %v1948 = vrcp.pop %v1947
    %v1949 = vmul.f32 %v1947, %v1948
    %v1950 = vsub.f32 1.0, %v1949
    %v1951 = vmul.f32 %v1948, %v1950
    %v1952 = vadd.f32 %v1948, %v1951
    %vm1953 = vweird.f32 %v1947
    %vm1954 = vweird.f32 %v1948
    %vm1955 = vmor %vm1953, %vm1954
    %v1956 = vsel %vm1955, %v1948, %v1952
    %v1957 = vand.u32 2147483647, %v1947
    %vm1958 = vcmp.eq.f32.partialorder %v1957, 8.507059e+37
    %v1959 = vand.u32 %v1947, 2147483648
    %v1960 = vor.u32 1.1754944e-38, %v1959
    %v1961 = vsel %vm1958, %v1960, %v1956
    %v1962 = vmul.f32 1.0, %v1961
    %v1963 = vtanh.pop %v1943
    %v1965 = vrot.slane %v1907, 6
    %v1967 = vmul.f32 %v1962, %v1965
    %1969 = vrot.lane.b32.xlu0 %v1963, 96
    %v1970 = vpop.permute.xlu0 %1969
    %v1972 = vmul.f32 %v1962, %v1970
    %1974 = vrot.lane.b32.xlu0 %v1972, 16
    %v1975 = vpop.permute.xlu0 %1974
    %v1977 = vadd.f32 %v1967, %v1975
    %v1978 = vtanh.pop %v1977
    %1980 = vrot.lane.b32.xlu0 %v1978, 32
    %v1981 = vpop.permute.xlu0 %1980
    %v1983 = vmul.f32 %v1962, %v1981
    %v1985 = vrot.slane %v1983, 6
    %1986 = vrot.lane.b32.xlu0 %v1985, 80
    %v1987 = vpop.permute.xlu0 %1986
    %v1988 = vsel %vm495, %v1987, 0
    %1990 = vmatpush.msra.mxu0 0.0
    %1991 = vmatpush.msra.mxu0 0.0
    %1992 = vmatpush.msra.mxu0 0.0
    %1993 = vmatpush.msra.mxu0 0.0
    %1994 = vmatpush.msra.mxu0 0.0
    %1995 = vmatpush.msra.mxu0 0.0
    %1996 = vmatpush.msra.mxu0 0.0
    %1997 = vmatpush.msra.mxu0 0.0
    %1998 = vmatpush.msra.mxu0 0.0
    %1999 = vmatpush.msra.mxu0 0.0
    %2000 = vmatpush.msra.mxu0 0.0
    %2001 = vmatpush.msra.mxu0 0.0
    %2002 = vmatpush.msra.mxu0 0.0
    %2003 = vmatpush.msra.mxu0 0.0
    %2004 = vmatpush.msra.mxu0 %v1716
    %2005 = vmatpush.msra.mxu0 %v1715
    %2006 = vmatmul.f32.gmra.mxu0 %v1988
    %v2007 = vpop.f32.mrf.mxu0
    %v2008 = vadd.f32 0.0, %v2007
    %2009 = vdwg.mxu0
    %v2010 = vadd.f32 %v1713, %v2008
    %v2011 = vxor.u32 %v2010, 2147483648
    %v2012 = vmul.f32 %v2011, 1.442695
    %v2013 = vpow.pop %v2012
    %v2014 = vadd.f32 %v2013, 1.0
    %v2015 = vrcp.pop %v2014
    %v2016 = vmul.f32 %v2014, %v2015
    %v2017 = vsub.f32 1.0, %v2016
    %v2018 = vmul.f32 %v2015, %v2017
    %v2019 = vadd.f32 %v2015, %v2018
    %vm2020 = vweird.f32 %v2014
    %vm2021 = vweird.f32 %v2015
    %vm2022 = vmor %vm2020, %vm2021
    %v2023 = vsel %vm2022, %v2015, %v2019
    %v2024 = vand.u32 2147483647, %v2014
    %vm2025 = vcmp.eq.f32.partialorder %v2024, 8.507059e+37
    %v2026 = vand.u32 %v2014, 2147483648
    %v2027 = vor.u32 1.1754944e-38, %v2026
    %v2028 = vsel %vm2025, %v2027, %v2023
    %v2029 = vmul.f32 1.0, %v2028
    %v2030 = vtanh.pop %v2010
    %v2032 = vrot.slane %v1977, 6
    %v2034 = vmul.f32 %v2029, %v2032
    %2036 = vrot.lane.b32.xlu0 %v2030, 96
    %v2037 = vpop.permute.xlu0 %2036
    %v2039 = vmul.f32 %v2029, %v2037
    %2041 = vrot.lane.b32.xlu0 %v2039, 16
    %v2042 = vpop.permute.xlu0 %2041
    %v2044 = vadd.f32 %v2034, %v2042
    %v2045 = vtanh.pop %v2044
    %2047 = vrot.lane.b32.xlu0 %v2045, 32
    %v2048 = vpop.permute.xlu0 %2047
    %v2050 = vmul.f32 %v2029, %v2048
    %2052 = vrot.lane.b32.xlu0 %v2050, 80
    %v2053 = vpop.permute.xlu0 %2052
    %v2054 = vsel %vm495, %v2053, 0
    %2056 = vmatpush.msra.mxu0 0.0
    %2057 = vmatpush.msra.mxu0 0.0
    %2058 = vmatpush.msra.mxu0 0.0
    %2059 = vmatpush.msra.mxu0 0.0
    %2060 = vmatpush.msra.mxu0 0.0
    %2061 = vmatpush.msra.mxu0 0.0
    %2062 = vmatpush.msra.mxu0 0.0
    %2063 = vmatpush.msra.mxu0 0.0
    %2064 = vmatpush.msra.mxu0 0.0
    %2065 = vmatpush.msra.mxu0 0.0
    %2066 = vmatpush.msra.mxu0 0.0
    %2067 = vmatpush.msra.mxu0 0.0
    %2068 = vmatpush.msra.mxu0 0.0
    %2069 = vmatpush.msra.mxu0 0.0
    %2070 = vmatpush.msra.mxu0 %v1716
    %2071 = vmatpush.msra.mxu0 %v1715
    %2072 = vmatmul.f32.gmra.mxu0 %v2054
    %v2073 = vpop.f32.mrf.mxu0
    %v2074 = vadd.f32 0.0, %v2073
    %2075 = vdwg.mxu0
    %v2077 = vrot.slane %v2074, 6
    %v2079 = vadd.f32 %v1713, %v2077
    %v2080 = vxor.u32 %v2079, 2147483648
    %v2081 = vmul.f32 %v2080, 1.442695
    %v2082 = vpow.pop %v2081
    %v2083 = vadd.f32 %v2082, 1.0
    %v2084 = vrcp.pop %v2083
    %v2085 = vmul.f32 %v2083, %v2084
    %v2086 = vsub.f32 1.0, %v2085
    %v2087 = vmul.f32 %v2084, %v2086
    %v2088 = vadd.f32 %v2084, %v2087
    %vm2089 = vweird.f32 %v2083
    %vm2090 = vweird.f32 %v2084
    %vm2091 = vmor %vm2089, %vm2090
    %v2092 = vsel %vm2091, %v2084, %v2088
    %v2093 = vand.u32 2147483647, %v2083
    %vm2094 = vcmp.eq.f32.partialorder %v2093, 8.507059e+37
    %v2095 = vand.u32 %v2083, 2147483648
    %v2096 = vor.u32 1.1754944e-38, %v2095
    %v2097 = vsel %vm2094, %v2096, %v2092
    %v2098 = vmul.f32 1.0, %v2097
    %v2099 = vtanh.pop %v2079
    %v2101 = vrot.slane %v2044, 6
    %v2103 = vmul.f32 %v2098, %v2101
    %2105 = vrot.lane.b32.xlu0 %v2099, 96
    %v2106 = vpop.permute.xlu0 %2105
    %v2108 = vmul.f32 %v2098, %v2106
    %2110 = vrot.lane.b32.xlu0 %v2108, 16
    %v2111 = vpop.permute.xlu0 %2110
    %v2113 = vadd.f32 %v2103, %v2111
    %v2114 = vtanh.pop %v2113
    %2116 = vrot.lane.b32.xlu0 %v2114, 32
    %v2117 = vpop.permute.xlu0 %2116
    %v2119 = vmul.f32 %v2098, %v2117
    %v2121 = vrot.slane %v2119, 2
    %2122 = vrot.lane.b32.xlu0 %v2121, 80
    %v2123 = vpop.permute.xlu0 %2122
    %v2124 = vsel %vm495, %v2123, 0
    %2126 = vmatpush.msra.mxu0 0.0
    %2127 = vmatpush.msra.mxu0 0.0
    %2128 = vmatpush.msra.mxu0 0.0
    %2129 = vmatpush.msra.mxu0 0.0
    %2130 = vmatpush.msra.mxu0 0.0
    %2131 = vmatpush.msra.mxu0 0.0
    %2132 = vmatpush.msra.mxu0 0.0
    %2133 = vmatpush.msra.mxu0 0.0
    %2134 = vmatpush.msra.mxu0 0.0
    %2135 = vmatpush.msra.mxu0 0.0
    %2136 = vmatpush.msra.mxu0 0.0
    %2137 = vmatpush.msra.mxu0 0.0
    %2138 = vmatpush.msra.mxu0 0.0
    %2139 = vmatpush.msra.mxu0 0.0
    %2140 = vmatpush.msra.mxu0 %v1716
    %2141 = vmatpush.msra.mxu0 %v1715
    %2142 = vmatmul.f32.gmra.mxu0 %v2124
    %v2143 = vpop.f32.mrf.mxu0
    %v2144 = vadd.f32 0.0, %v2143
    %2145 = vdwg.mxu0
    %v2147 = vrot.slane %v2144, 4
    %v2149 = vadd.f32 %v1713, %v2147
    %v2150 = vxor.u32 %v2149, 2147483648
    %v2151 = vmul.f32 %v2150, 1.442695
    %v2152 = vpow.pop %v2151
    %v2153 = vadd.f32 %v2152, 1.0
    %v2154 = vrcp.pop %v2153
    %v2155 = vmul.f32 %v2153, %v2154
    %v2156 = vsub.f32 1.0, %v2155
    %v2157 = vmul.f32 %v2154, %v2156
    %v2158 = vadd.f32 %v2154, %v2157
    %vm2159 = vweird.f32 %v2153
    %vm2160 = vweird.f32 %v2154
    %vm2161 = vmor %vm2159, %vm2160
    %v2162 = vsel %vm2161, %v2154, %v2158
    %v2163 = vand.u32 2147483647, %v2153
    %vm2164 = vcmp.eq.f32.partialorder %v2163, 8.507059e+37
    %v2165 = vand.u32 %v2153, 2147483648
    %v2166 = vor.u32 1.1754944e-38, %v2165
    %v2167 = vsel %vm2164, %v2166, %v2162
    %v2168 = vmul.f32 1.0, %v2167
    %v2169 = vtanh.pop %v2149
    %v2171 = vrot.slane %v2113, 6
    %v2173 = vmul.f32 %v2168, %v2171
    %2175 = vrot.lane.b32.xlu0 %v2169, 96
    %v2176 = vpop.permute.xlu0 %2175
    %v2178 = vmul.f32 %v2168, %v2176
    %2180 = vrot.lane.b32.xlu0 %v2178, 16
    %v2181 = vpop.permute.xlu0 %2180
    %v2183 = vadd.f32 %v2173, %v2181
    %v2184 = vtanh.pop %v2183
    %2186 = vrot.lane.b32.xlu0 %v2184, 32
    %v2187 = vpop.permute.xlu0 %2186
    %v2189 = vmul.f32 %v2168, %v2187
    %v2191 = vrot.slane %v2189, 4
    %2192 = vrot.lane.b32.xlu0 %v2191, 80
    %v2193 = vpop.permute.xlu0 %2192
    %v2194 = vsel %vm495, %v2193, 0
    %2196 = vmatpush.msra.mxu0 0.0
    %2197 = vmatpush.msra.mxu0 0.0
    %2198 = vmatpush.msra.mxu0 0.0
    %2199 = vmatpush.msra.mxu0 0.0
    %2200 = vmatpush.msra.mxu0 0.0
    %2201 = vmatpush.msra.mxu0 0.0
    %2202 = vmatpush.msra.mxu0 0.0
    %2203 = vmatpush.msra.mxu0 0.0
    %2204 = vmatpush.msra.mxu0 0.0
    %2205 = vmatpush.msra.mxu0 0.0
    %2206 = vmatpush.msra.mxu0 0.0
    %2207 = vmatpush.msra.mxu0 0.0
    %2208 = vmatpush.msra.mxu0 0.0
    %2209 = vmatpush.msra.mxu0 0.0
    %2210 = vmatpush.msra.mxu0 %v1716
    %2211 = vmatpush.msra.mxu0 %v1715
    %2212 = vmatmul.f32.gmra.mxu0 %v2194
    %v2213 = vpop.f32.mrf.mxu0
    %v2214 = vadd.f32 0.0, %v2213
    %2215 = vdwg.mxu0
    %v2217 = vrot.slane %v2214, 2
    %v2219 = vadd.f32 %v1713, %v2217
    %v2220 = vxor.u32 %v2219, 2147483648
    %v2221 = vmul.f32 %v2220, 1.442695
    %v2222 = vpow.pop %v2221
    %v2223 = vadd.f32 %v2222, 1.0
    %v2224 = vrcp.pop %v2223
    %v2225 = vmul.f32 %v2223, %v2224
    %v2226 = vsub.f32 1.0, %v2225
    %v2227 = vmul.f32 %v2224, %v2226
    %v2228 = vadd.f32 %v2224, %v2227
    %vm2229 = vweird.f32 %v2223
    %vm2230 = vweird.f32 %v2224
    %vm2231 = vmor %vm2229, %vm2230
    %v2232 = vsel %vm2231, %v2224, %v2228
    %v2233 = vand.u32 2147483647, %v2223
    %vm2234 = vcmp.eq.f32.partialorder %v2233, 8.507059e+37
    %v2235 = vand.u32 %v2223, 2147483648
    %v2236 = vor.u32 1.1754944e-38, %v2235
    %v2237 = vsel %vm2234, %v2236, %v2232
    %v2238 = vmul.f32 1.0, %v2237
    %v2239 = vtanh.pop %v2219
    %v2241 = vrot.slane %v2183, 6
    %v2243 = vmul.f32 %v2238, %v2241
    %2245 = vrot.lane.b32.xlu0 %v2239, 96
    %v2246 = vpop.permute.xlu0 %2245
    %v2248 = vmul.f32 %v2238, %v2246
    %2250 = vrot.lane.b32.xlu0 %v2248, 16
    %v2251 = vpop.permute.xlu0 %2250
    %v2253 = vadd.f32 %v2243, %v2251
    %v2254 = vtanh.pop %v2253
    %2256 = vrot.lane.b32.xlu0 %v2254, 32
    %v2257 = vpop.permute.xlu0 %2256
    %v2259 = vmul.f32 %v2238, %v2257
    %v2260 = vxor.u32 %v1713, 2147483648
    %v2261 = vmul.f32 %v2260, 1.442695
    %v2262 = vpow.pop %v2261
    %v2263 = vadd.f32 %v2262, 1.0
    %v2264 = vrcp.pop %v2263
    %v2265 = vmul.f32 %v2263, %v2264
    %v2266 = vsub.f32 1.0, %v2265
    %v2267 = vmul.f32 %v2264, %v2266
    %v2268 = vadd.f32 %v2264, %v2267
    %vm2269 = vweird.f32 %v2263
    %vm2270 = vweird.f32 %v2264
    %vm2271 = vmor %vm2269, %vm2270
    %v2272 = vsel %vm2271, %v2264, %v2268
    %v2273 = vand.u32 2147483647, %v2263
    %vm2274 = vcmp.eq.f32.partialorder %v2273, 8.507059e+37
    %v2275 = vand.u32 %v2263, 2147483648
    %v2276 = vor.u32 1.1754944e-38, %v2275
    %v2277 = vsel %vm2274, %v2276, %v2272
    %v2278 = vmul.f32 1.0, %v2277
    %v2279 = vtanh.pop %v1713
    %v2280 = vmul.f32 %v2278, 0.0
    %2282 = vrot.lane.b32.xlu0 %v2279, 96
    %v2283 = vpop.permute.xlu0 %2282
    %v2285 = vmul.f32 %v2278, %v2283
    %2287 = vrot.lane.b32.xlu0 %v2285, 16
    %v2288 = vpop.permute.xlu0 %2287
    %v2290 = vadd.f32 %v2280, %v2288
    %v2291 = vtanh.pop %v2290
    %2293 = vrot.lane.b32.xlu0 %v2291, 32
    %v2294 = vpop.permute.xlu0 %2293
    %v2296 = vmul.f32 %v2278, %v2294
    %v2297 = vld [vmem:[#allocation21] sm:$0xff]
    %v2298 = vld [vmem:[#allocation21 + $0x8] sm:$0xff]
    %v2299 = vld [vmem:[#allocation23] sm:$0xff]
    %v2300 = vld [vmem:[#allocation23 + $0x8] sm:$0xff]
    %v2302 = vrot.slane %v2296, 6
    %2303 = vrot.lane.b32.xlu0 %v2302, 16
    %v2304 = vpop.permute.xlu0 %2303
    %v2305 = vsel %vm495, %v2304, 0
    %2307 = vmatpush.msra.mxu0 0.0
    %2308 = vmatpush.msra.mxu0 0.0
    %2309 = vmatpush.msra.mxu0 0.0
    %2310 = vmatpush.msra.mxu0 0.0
    %2311 = vmatpush.msra.mxu0 0.0
    %2312 = vmatpush.msra.mxu0 0.0
    %2313 = vmatpush.msra.mxu0 0.0
    %2314 = vmatpush.msra.mxu0 0.0
    %2315 = vmatpush.msra.mxu0 0.0
    %2316 = vmatpush.msra.mxu0 0.0
    %2317 = vmatpush.msra.mxu0 0.0
    %2318 = vmatpush.msra.mxu0 0.0
    %2319 = vmatpush.msra.mxu0 0.0
    %2320 = vmatpush.msra.mxu0 0.0
    %2321 = vmatpush.msra.mxu0 %v2300
    %2322 = vmatpush.msra.mxu0 %v2299
    %2323 = vmatmul.f32.gmra.mxu0 %v2305
    %v2324 = vpop.f32.mrf.mxu0
    %v2325 = vadd.f32 0.0, %v2324
    %2326 = vdwg.mxu0
    %v2328 = vrot.slane %v2259, 6
    %2329 = vrot.lane.b32.xlu0 %v2328, 80
    %v2330 = vpop.permute.xlu0 %2329
    %v2331 = vsel %vm495, %v2330, 0
    %2333 = vmatpush.msra.mxu0 0.0
    %2334 = vmatpush.msra.mxu0 0.0
    %2335 = vmatpush.msra.mxu0 0.0
    %2336 = vmatpush.msra.mxu0 0.0
    %2337 = vmatpush.msra.mxu0 0.0
    %2338 = vmatpush.msra.mxu0 0.0
    %2339 = vmatpush.msra.mxu0 0.0
    %2340 = vmatpush.msra.mxu0 0.0
    %2341 = vmatpush.msra.mxu0 0.0
    %2342 = vmatpush.msra.mxu0 0.0
    %2343 = vmatpush.msra.mxu0 0.0
    %2344 = vmatpush.msra.mxu0 0.0
    %2345 = vmatpush.msra.mxu0 0.0
    %2346 = vmatpush.msra.mxu0 0.0
    %2347 = vmatpush.msra.mxu0 %v2298
    %2348 = vmatpush.msra.mxu0 %v2297
    %2349 = vmatmul.f32.gmra.mxu0 %v2331
    %v2350 = vpop.f32.mrf.mxu0
    %v2351 = vadd.f32 %v2325, %v2350
    %2352 = vdwg.mxu0
    %v2353 = vld [vmem:[#allocation24] sm:$0x1]
    %v2355 = vperm.slane %v2353, 0
    %v2357 = vadd.f32 %v2351, %v2355
    %vm2358 = vcmask 58368
    %2359 = vst.msk [vmem:[#allocation26] sm:$0x3] %vm2358, %v2357
    %2361 = vrot.lane.b32.xlu0 %v2357, 120
    %v2362 = vpop.permute.xlu0 %2361
    %2364 = vst.msk [vmem:[#allocation27] sm:$0x3] %vm2358, %v2362
    // Predicated region
    $region134: #{ts_encoder_forward.1} parent=1 // pred_check
      _
    $region135: #{ts_encoder_forward.1} parent=1 // pred_check_branch
      %2366 = sbr.rel (0) target = $region137
    $region136: #{ts_encoder_forward.1} parent=1 // pred_region
      %2368 = vsyncadd [#allocation5], 0
      %s2370 = sshll.u32 [#allocation26], 4
      %s2371 = int_to_ptr.vmem [resolvable:$true] %s2370
      %s2372 = sshll.u32 %s19, 4
      %s2373 = int_to_ptr.hbm [resolvable:$true] %s2372
      %2375 = dma.vmem_to_hbm [thread:$0]  %s2371, 32, %s2373, [#allocation5]
    $region137: #{ts_encoder_forward.1} parent=1 // pred_fallthru
      _
    // Predicated region
    $region138: #{ts_encoder_forward.1} parent=1 // pred_check
      _
    $region139: #{ts_encoder_forward.1} parent=1 // pred_check_branch
      %2377 = sbr.rel (0) target = $region141
    $region140: #{ts_encoder_forward.1} parent=1 // pred_region
      %2379 = vsyncadd [#allocation28], 0
      %s2381 = sshll.u32 [#allocation27], 4
      %s2382 = int_to_ptr.vmem [resolvable:$true] %s2381
      %s2383 = sshll.u32 %s20, 4
      %s2384 = int_to_ptr.hbm [resolvable:$true] %s2383
      %2386 = dma.vmem_to_hbm [thread:$0]  %s2382, 32, %s2384, [#allocation28]
    $region141: #{ts_encoder_forward.1} parent=1 // pred_fallthru
      _
    // Predicated region
    $region142: #{ts_encoder_forward.1} parent=1 // pred_check
      _
    $region143: #{ts_encoder_forward.1} parent=1 // pred_check_branch
      %2388 = sbr.rel (0) target = $region145
    $region144: #{ts_encoder_forward.1} parent=1 // pred_region
      %2390 = dma.done [#allocation5], 32
    $region145: #{ts_encoder_forward.1} parent=1 // pred_fallthru
      _
    // Predicated region
    $region146: #{ts_encoder_forward.1} parent=1 // pred_check
      _
    $region147: #{ts_encoder_forward.1} parent=1 // pred_check_branch
      %2392 = sbr.rel (0) target = $region149
    $region148: #{ts_encoder_forward.1} parent=1 // pred_region
      %2394 = dma.done [#allocation28], 32
    $region149: #{ts_encoder_forward.1} parent=1 // pred_fallthru
      _
    %2395 = vsyncpa [#allocation4], 1
    %2396 = vsyncpa [#allocation7], 1
    %2397 = vsyncpa [#allocation10], 1
    %2398 = vsyncpa [#allocation13], 1
    %2399 = vsyncpa [#allocation16], 1
    %2400 = vsyncpa [#allocation19], 1
    %2401 = vsyncpa [#allocation22], 1
    %2402 = vsyncpa [#allocation25], 1
    %2403 = vsyncpa [#allocation5], 1
    %2404 = vsyncpa [#allocation28], 1

</llo_original>
